<compile_context>
chip_gen: v6e
topology: v6e:2x2x1
jax: 0.10.0
libtpu: 0.0.40
codegen_flags: <defaults>
</compile_context>

<pallas_src>
import jax
import jax.numpy as jnp
from jax.experimental import pallas as pl
from jax.experimental.pallas import tpu as pltpu

GATE_PAD = 128  # per-gate lane padding (one full lane group)


def lstm_wtt_kernel(x_ref, wih_ref, whh_ref, b_ref, wout_ref, bout_ref, out_ref):
    """Single invocation: full LSTM recurrence + linear head + activate.

    x_ref    : (B, T, D_in)      batch-first input, resident in VMEM
    wih_ref  : (D_in, 4*GP)      W_ih^T, each gate zero-padded to GP lanes
    whh_ref  : (GP,   4*GP)      W_hh^T, rows padded to GP, gates padded to GP lanes
    b_ref    : (1,    4*GP)      b_ih + b_hh, per-gate padded
    wout_ref : (GP,   GP)        W_out^T zero-padded (only [:H, :2] nonzero)
    bout_ref : (1,    GP)        b_out zero-padded
    out_ref  : (B,    GP)        activated output; real data in columns 0..1
    """
    B, T, _ = x_ref.shape
    GP = whh_ref.shape[0]

    wih = wih_ref[...]
    whh = whh_ref[...]
    bias = b_ref[...]

    h = jnp.zeros((B, GP), jnp.float32)
    c = jnp.zeros((B, GP), jnp.float32)

    # Static Python loop == fully unrolled time recurrence (T is static & small);
    # all x slices use static indices, h/c stay in vregs across iterations.
    for t in range(T):
        x_t = x_ref[:, t, :]                                   # (B, D_in)
        gates = (jnp.dot(x_t, wih, preferred_element_type=jnp.float32)
                 + jnp.dot(h, whh, preferred_element_type=jnp.float32)
                 + bias)                                       # (B, 4*GP)
        # Lane-aligned gate slices (offsets are multiples of 128).
        i = jax.nn.sigmoid(gates[:, 0 * GP:1 * GP])
        f = jax.nn.sigmoid(gates[:, 1 * GP:2 * GP])
        g = jnp.tanh(gates[:, 2 * GP:3 * GP])
        o = jax.nn.sigmoid(gates[:, 3 * GP:4 * GP])
        c = f * c + i * g
        h = o * jnp.tanh(c)

    # Linear head + activate: column 0 -> exp, column 1 -> sigmoid.
    y = jnp.dot(h, wout_ref[...], preferred_element_type=jnp.float32) + bout_ref[...]
    lane = jax.lax.broadcasted_iota(jnp.int32, y.shape, 1)
    out_ref[...] = jnp.where(lane == 0, jnp.exp(y), jax.nn.sigmoid(y))


@jax.jit
def lstm_wtt_forward(x, w_ih, w_hh, b_ih, b_hh, w_out, b_out):
    """x: (B, T, D_in) batch-first, like the PyTorch module. Returns (B, 2)."""
    B, T, Din = x.shape
    H = w_hh.shape[1]
    GP = GATE_PAD
    n_out = w_out.shape[0]

    def pad_gate_cols(w):
        # (rows, 4H) -> (rows, 4*GP): each gate's H columns zero-padded to GP lanes.
        parts = [jnp.pad(w[:, k * H:(k + 1) * H], ((0, 0), (0, GP - H)))
                 for k in range(4)]
        return jnp.concatenate(parts, axis=1)

    wih_p = pad_gate_cols(jnp.transpose(w_ih).astype(jnp.float32))          # (Din, 4GP)
    whh_p = jnp.pad(pad_gate_cols(jnp.transpose(w_hh).astype(jnp.float32)),
                    ((0, GP - H), (0, 0)))                                   # (GP, 4GP)
    bias_p = pad_gate_cols((b_ih + b_hh).astype(jnp.float32).reshape(1, 4 * H))  # (1, 4GP)
    wout_p = jnp.pad(jnp.transpose(w_out).astype(jnp.float32),
                     ((0, GP - H), (0, GP - n_out)))                         # (GP, GP)
    bout_p = jnp.pad(b_out.astype(jnp.float32).reshape(1, n_out),
                     ((0, 0), (0, GP - n_out)))                              # (1, GP)

    out_pad = pl.pallas_call(
        lstm_wtt_kernel,
        out_shape=jax.ShapeDtypeStruct((B, GP), jnp.float32),
        in_specs=[pl.BlockSpec(memory_space=pltpu.MemorySpace.VMEM)] * 6,
        out_specs=pl.BlockSpec(memory_space=pltpu.MemorySpace.VMEM),
    )(x.astype(jnp.float32), wih_p, whh_p, bias_p, wout_p, bout_p)

    return out_pad[:, :n_out]


def _reference_forward(x, w_ih, w_hh, b_ih, b_hh, w_out, b_out):
    """Pure-JAX reference implementing the PyTorch forward for verification."""
    B, T, Din = x.shape
    H = w_hh.shape[1]
    h = jnp.zeros((B, H), jnp.float32)
    c = jnp.zeros((B, H), jnp.float32)

    def step(carry, x_t):
        h, c = carry
        gates = x_t @ w_ih.T + h @ w_hh.T + b_ih + b_hh
        i = jax.nn.sigmoid(gates[:, 0 * H:1 * H])
        f = jax.nn.sigmoid(gates[:, 1 * H:2 * H])
        g = jnp.tanh(gates[:, 2 * H:3 * H])
        o = jax.nn.sigmoid(gates[:, 3 * H:4 * H])
        c = f * c + i * g
        h = o * jnp.tanh(c)
        return (h, c), None

    (h, c), _ = jax.lax.scan(step, (h, c), jnp.transpose(x, (1, 0, 2)))
    y = h @ w_out.T + b_out
    return jnp.concatenate([jnp.exp(y[:, 0:1]), jax.nn.sigmoid(y[:, 1:2])], axis=1)


if __name__ == "__main__":
    INPUT_SIZE = 24
    HIDDEN = 10
    OUTPUT = 2
    B, T = 2, 8

    key = jax.random.PRNGKey(0)
    k = jax.random.split(key, 8)
    bound = 1.0 / jnp.sqrt(HIDDEN)  # PyTorch default LSTM/Linear init scale

    w_ih = jax.random.uniform(k[0], (4 * HIDDEN, INPUT_SIZE), jnp.float32, -bound, bound)
    w_hh = jax.random.uniform(k[1], (4 * HIDDEN, HIDDEN), jnp.float32, -bound, bound)
    b_ih = jax.random.uniform(k[2], (4 * HIDDEN,), jnp.float32, -bound, bound)
    b_hh = jax.random.uniform(k[3], (4 * HIDDEN,), jnp.float32, -bound, bound)
    w_out = jax.random.uniform(k[4], (OUTPUT, HIDDEN), jnp.float32, -bound, bound)
    b_out = jax.random.uniform(k[5], (OUTPUT,), jnp.float32, -bound, bound)

    x = jax.random.normal(k[6], (B, T, INPUT_SIZE), jnp.float32)

    out = lstm_wtt_forward(x, w_ih, w_hh, b_ih, b_hh, w_out, b_out)
    out = jax.block_until_ready(out)

    ref = _reference_forward(x, w_ih, w_hh, b_ih, b_hh, w_out, b_out)
    assert out.shape == (B, OUTPUT)
    assert jnp.allclose(out, ref, atol=1e-5, rtol=1e-5), (out, ref)

    print("KERNEL_OK")
</pallas_src>

<mosaic_0001>
module attributes {stable_mosaic.version = 11 : i64} {
  func.func @lstm_wtt_kernel(%arg0: memref<2x8x24xf32, #tpu.memory_space<vmem>>, %arg1: memref<24x512xf32, #tpu.memory_space<vmem>>, %arg2: memref<128x512xf32, #tpu.memory_space<vmem>>, %arg3: memref<1x512xf32, #tpu.memory_space<vmem>>, %arg4: memref<128x128xf32, #tpu.memory_space<vmem>>, %arg5: memref<1x128xf32, #tpu.memory_space<vmem>>, %arg6: memref<2x128xf32, #tpu.memory_space<vmem>>) attributes {dimension_semantics = [], scalar_prefetch = 0 : i64, scratch_operands = 0 : i64, tpu.core_type = #tpu.core_type<tc>} {
    %c0 = arith.constant 0 : index
    %c0_0 = arith.constant 0 : index
    %0 = vector.load %arg1[%c0, %c0_0] : memref<24x512xf32, #tpu.memory_space<vmem>>, vector<24x512xf32>
    %c0_1 = arith.constant 0 : index
    %c0_2 = arith.constant 0 : index
    %1 = vector.load %arg2[%c0_1, %c0_2] : memref<128x512xf32, #tpu.memory_space<vmem>>, vector<128x512xf32>
    %c0_3 = arith.constant 0 : index
    %c0_4 = arith.constant 0 : index
    %2 = vector.load %arg3[%c0_3, %c0_4] : memref<1x512xf32, #tpu.memory_space<vmem>>, vector<1x512xf32>
    %cst = arith.constant 0.000000e+00 : f32
    %3 = vector.broadcast %cst : f32 to vector<2x128xf32>
    %cst_5 = arith.constant 0.000000e+00 : f32
    %4 = vector.broadcast %cst_5 : f32 to vector<2x128xf32>
    %c0_6 = arith.constant 0 : index
    %c0_7 = arith.constant 0 : index
    %c0_8 = arith.constant 0 : index
    %5 = vector.load %arg0[%c0_6, %c0_7, %c0_8] : memref<2x8x24xf32, #tpu.memory_space<vmem>>, vector<2x1x24xf32>
    %6 = vector.shape_cast %5 : vector<2x1x24xf32> to vector<2x24xf32>
    %cst_9 = arith.constant dense<0.000000e+00> : vector<2x512xf32>
    %7 = tpu.matmul %6, %0, %cst_9 {dimension_numbers = #tpu.dot_dimension_numbers<[1], [0], [0], [1], [0, 0, 1, 1], [], []>} : vector<2x24xf32>, vector<24x512xf32>, vector<2x512xf32> -> vector<2x512xf32>
    %cst_10 = arith.constant dense<0.000000e+00> : vector<2x512xf32>
    %8 = tpu.matmul %3, %1, %cst_10 {dimension_numbers = #tpu.dot_dimension_numbers<[1], [0], [0], [1], [0, 0, 1, 1], [], []>} : vector<2x128xf32>, vector<128x512xf32>, vector<2x512xf32> -> vector<2x512xf32>
    %9 = arith.addf %7, %8 : vector<2x512xf32>
    %10 = vector.broadcast %2 : vector<1x512xf32> to vector<2x512xf32>
    %11 = arith.addf %9, %10 : vector<2x512xf32>
    %12 = vector.extract_strided_slice %11 {offsets = [0, 0], sizes = [2, 128], strides = [1, 1]} : vector<2x512xf32> to vector<2x128xf32>
    %13 = arith.negf %12 : vector<2x128xf32>
    %14 = math.exp %13 : vector<2x128xf32>
    %cst_11 = arith.constant 1.000000e+00 : f32
    %15 = vector.broadcast %cst_11 : f32 to vector<2x128xf32>
    %16 = arith.addf %15, %14 : vector<2x128xf32>
    %17 = arith.divf %15, %16 : vector<2x128xf32>
    %18 = vector.extract_strided_slice %11 {offsets = [0, 128], sizes = [2, 128], strides = [1, 1]} : vector<2x512xf32> to vector<2x128xf32>
    %19 = arith.negf %18 : vector<2x128xf32>
    %20 = math.exp %19 : vector<2x128xf32>
    %cst_12 = arith.constant 1.000000e+00 : f32
    %21 = vector.broadcast %cst_12 : f32 to vector<2x128xf32>
    %22 = arith.addf %21, %20 : vector<2x128xf32>
    %23 = arith.divf %21, %22 : vector<2x128xf32>
    %24 = vector.extract_strided_slice %11 {offsets = [0, 256], sizes = [2, 128], strides = [1, 1]} : vector<2x512xf32> to vector<2x128xf32>
    %25 = math.tanh %24 : vector<2x128xf32>
    %26 = vector.extract_strided_slice %11 {offsets = [0, 384], sizes = [2, 128], strides = [1, 1]} : vector<2x512xf32> to vector<2x128xf32>
    %27 = arith.negf %26 : vector<2x128xf32>
    %28 = math.exp %27 : vector<2x128xf32>
    %cst_13 = arith.constant 1.000000e+00 : f32
    %29 = vector.broadcast %cst_13 : f32 to vector<2x128xf32>
    %30 = arith.addf %29, %28 : vector<2x128xf32>
    %31 = arith.divf %29, %30 : vector<2x128xf32>
    %32 = arith.mulf %23, %4 : vector<2x128xf32>
    %33 = arith.mulf %17, %25 : vector<2x128xf32>
    %34 = arith.addf %32, %33 : vector<2x128xf32>
    %35 = math.tanh %34 : vector<2x128xf32>
    %36 = arith.mulf %31, %35 : vector<2x128xf32>
    %c0_14 = arith.constant 0 : index
    %c1 = arith.constant 1 : index
    %c0_15 = arith.constant 0 : index
    %37 = vector.load %arg0[%c0_14, %c1, %c0_15] : memref<2x8x24xf32, #tpu.memory_space<vmem>>, vector<2x1x24xf32>
    %38 = vector.shape_cast %37 : vector<2x1x24xf32> to vector<2x24xf32>
    %cst_16 = arith.constant dense<0.000000e+00> : vector<2x512xf32>
    %39 = tpu.matmul %38, %0, %cst_16 {dimension_numbers = #tpu.dot_dimension_numbers<[1], [0], [0], [1], [0, 0, 1, 1], [], []>} : vector<2x24xf32>, vector<24x512xf32>, vector<2x512xf32> -> vector<2x512xf32>
    %cst_17 = arith.constant dense<0.000000e+00> : vector<2x512xf32>
    %40 = tpu.matmul %36, %1, %cst_17 {dimension_numbers = #tpu.dot_dimension_numbers<[1], [0], [0], [1], [0, 0, 1, 1], [], []>} : vector<2x128xf32>, vector<128x512xf32>, vector<2x512xf32> -> vector<2x512xf32>
    %41 = arith.addf %39, %40 : vector<2x512xf32>
    %42 = vector.broadcast %2 : vector<1x512xf32> to vector<2x512xf32>
    %43 = arith.addf %41, %42 : vector<2x512xf32>
    %44 = vector.extract_strided_slice %43 {offsets = [0, 0], sizes = [2, 128], strides = [1, 1]} : vector<2x512xf32> to vector<2x128xf32>
    %45 = arith.negf %44 : vector<2x128xf32>
    %46 = math.exp %45 : vector<2x128xf32>
    %cst_18 = arith.constant 1.000000e+00 : f32
    %47 = vector.broadcast %cst_18 : f32 to vector<2x128xf32>
    %48 = arith.addf %47, %46 : vector<2x128xf32>
    %49 = arith.divf %47, %48 : vector<2x128xf32>
    %50 = vector.extract_strided_slice %43 {offsets = [0, 128], sizes = [2, 128], strides = [1, 1]} : vector<2x512xf32> to vector<2x128xf32>
    %51 = arith.negf %50 : vector<2x128xf32>
    %52 = math.exp %51 : vector<2x128xf32>
    %cst_19 = arith.constant 1.000000e+00 : f32
    %53 = vector.broadcast %cst_19 : f32 to vector<2x128xf32>
    %54 = arith.addf %53, %52 : vector<2x128xf32>
    %55 = arith.divf %53, %54 : vector<2x128xf32>
    %56 = vector.extract_strided_slice %43 {offsets = [0, 256], sizes = [2, 128], strides = [1, 1]} : vector<2x512xf32> to vector<2x128xf32>
    %57 = math.tanh %56 : vector<2x128xf32>
    %58 = vector.extract_strided_slice %43 {offsets = [0, 384], sizes = [2, 128], strides = [1, 1]} : vector<2x512xf32> to vector<2x128xf32>
    %59 = arith.negf %58 : vector<2x128xf32>
    %60 = math.exp %59 : vector<2x128xf32>
    %cst_20 = arith.constant 1.000000e+00 : f32
    %61 = vector.broadcast %cst_20 : f32 to vector<2x128xf32>
    %62 = arith.addf %61, %60 : vector<2x128xf32>
    %63 = arith.divf %61, %62 : vector<2x128xf32>
    %64 = arith.mulf %55, %34 : vector<2x128xf32>
    %65 = arith.mulf %49, %57 : vector<2x128xf32>
    %66 = arith.addf %64, %65 : vector<2x128xf32>
    %67 = math.tanh %66 : vector<2x128xf32>
    %68 = arith.mulf %63, %67 : vector<2x128xf32>
    %c0_21 = arith.constant 0 : index
    %c2 = arith.constant 2 : index
    %c0_22 = arith.constant 0 : index
    %69 = vector.load %arg0[%c0_21, %c2, %c0_22] : memref<2x8x24xf32, #tpu.memory_space<vmem>>, vector<2x1x24xf32>
    %70 = vector.shape_cast %69 : vector<2x1x24xf32> to vector<2x24xf32>
    %cst_23 = arith.constant dense<0.000000e+00> : vector<2x512xf32>
    %71 = tpu.matmul %70, %0, %cst_23 {dimension_numbers = #tpu.dot_dimension_numbers<[1], [0], [0], [1], [0, 0, 1, 1], [], []>} : vector<2x24xf32>, vector<24x512xf32>, vector<2x512xf32> -> vector<2x512xf32>
    %cst_24 = arith.constant dense<0.000000e+00> : vector<2x512xf32>
    %72 = tpu.matmul %68, %1, %cst_24 {dimension_numbers = #tpu.dot_dimension_numbers<[1], [0], [0], [1], [0, 0, 1, 1], [], []>} : vector<2x128xf32>, vector<128x512xf32>, vector<2x512xf32> -> vector<2x512xf32>
    %73 = arith.addf %71, %72 : vector<2x512xf32>
    %74 = vector.broadcast %2 : vector<1x512xf32> to vector<2x512xf32>
    %75 = arith.addf %73, %74 : vector<2x512xf32>
    %76 = vector.extract_strided_slice %75 {offsets = [0, 0], sizes = [2, 128], strides = [1, 1]} : vector<2x512xf32> to vector<2x128xf32>
    %77 = arith.negf %76 : vector<2x128xf32>
    %78 = math.exp %77 : vector<2x128xf32>
    %cst_25 = arith.constant 1.000000e+00 : f32
    %79 = vector.broadcast %cst_25 : f32 to vector<2x128xf32>
    %80 = arith.addf %79, %78 : vector<2x128xf32>
    %81 = arith.divf %79, %80 : vector<2x128xf32>
    %82 = vector.extract_strided_slice %75 {offsets = [0, 128], sizes = [2, 128], strides = [1, 1]} : vector<2x512xf32> to vector<2x128xf32>
    %83 = arith.negf %82 : vector<2x128xf32>
    %84 = math.exp %83 : vector<2x128xf32>
    %cst_26 = arith.constant 1.000000e+00 : f32
    %85 = vector.broadcast %cst_26 : f32 to vector<2x128xf32>
    %86 = arith.addf %85, %84 : vector<2x128xf32>
    %87 = arith.divf %85, %86 : vector<2x128xf32>
    %88 = vector.extract_strided_slice %75 {offsets = [0, 256], sizes = [2, 128], strides = [1, 1]} : vector<2x512xf32> to vector<2x128xf32>
    %89 = math.tanh %88 : vector<2x128xf32>
    %90 = vector.extract_strided_slice %75 {offsets = [0, 384], sizes = [2, 128], strides = [1, 1]} : vector<2x512xf32> to vector<2x128xf32>
    %91 = arith.negf %90 : vector<2x128xf32>
    %92 = math.exp %91 : vector<2x128xf32>
    %cst_27 = arith.constant 1.000000e+00 : f32
    %93 = vector.broadcast %cst_27 : f32 to vector<2x128xf32>
    %94 = arith.addf %93, %92 : vector<2x128xf32>
    %95 = arith.divf %93, %94 : vector<2x128xf32>
    %96 = arith.mulf %87, %66 : vector<2x128xf32>
    %97 = arith.mulf %81, %89 : vector<2x128xf32>
    %98 = arith.addf %96, %97 : vector<2x128xf32>
    %99 = math.tanh %98 : vector<2x128xf32>
    %100 = arith.mulf %95, %99 : vector<2x128xf32>
    %c0_28 = arith.constant 0 : index
    %c3 = arith.constant 3 : index
    %c0_29 = arith.constant 0 : index
    %101 = vector.load %arg0[%c0_28, %c3, %c0_29] : memref<2x8x24xf32, #tpu.memory_space<vmem>>, vector<2x1x24xf32>
    %102 = vector.shape_cast %101 : vector<2x1x24xf32> to vector<2x24xf32>
    %cst_30 = arith.constant dense<0.000000e+00> : vector<2x512xf32>
    %103 = tpu.matmul %102, %0, %cst_30 {dimension_numbers = #tpu.dot_dimension_numbers<[1], [0], [0], [1], [0, 0, 1, 1], [], []>} : vector<2x24xf32>, vector<24x512xf32>, vector<2x512xf32> -> vector<2x512xf32>
    %cst_31 = arith.constant dense<0.000000e+00> : vector<2x512xf32>
    %104 = tpu.matmul %100, %1, %cst_31 {dimension_numbers = #tpu.dot_dimension_numbers<[1], [0], [0], [1], [0, 0, 1, 1], [], []>} : vector<2x128xf32>, vector<128x512xf32>, vector<2x512xf32> -> vector<2x512xf32>
    %105 = arith.addf %103, %104 : vector<2x512xf32>
    %106 = vector.broadcast %2 : vector<1x512xf32> to vector<2x512xf32>
    %107 = arith.addf %105, %106 : vector<2x512xf32>
    %108 = vector.extract_strided_slice %107 {offsets = [0, 0], sizes = [2, 128], strides = [1, 1]} : vector<2x512xf32> to vector<2x128xf32>
    %109 = arith.negf %108 : vector<2x128xf32>
    %110 = math.exp %109 : vector<2x128xf32>
    %cst_32 = arith.constant 1.000000e+00 : f32
    %111 = vector.broadcast %cst_32 : f32 to vector<2x128xf32>
    %112 = arith.addf %111, %110 : vector<2x128xf32>
    %113 = arith.divf %111, %112 : vector<2x128xf32>
    %114 = vector.extract_strided_slice %107 {offsets = [0, 128], sizes = [2, 128], strides = [1, 1]} : vector<2x512xf32> to vector<2x128xf32>
    %115 = arith.negf %114 : vector<2x128xf32>
    %116 = math.exp %115 : vector<2x128xf32>
    %cst_33 = arith.constant 1.000000e+00 : f32
    %117 = vector.broadcast %cst_33 : f32 to vector<2x128xf32>
    %118 = arith.addf %117, %116 : vector<2x128xf32>
    %119 = arith.divf %117, %118 : vector<2x128xf32>
    %120 = vector.extract_strided_slice %107 {offsets = [0, 256], sizes = [2, 128], strides = [1, 1]} : vector<2x512xf32> to vector<2x128xf32>
    %121 = math.tanh %120 : vector<2x128xf32>
    %122 = vector.extract_strided_slice %107 {offsets = [0, 384], sizes = [2, 128], strides = [1, 1]} : vector<2x512xf32> to vector<2x128xf32>
    %123 = arith.negf %122 : vector<2x128xf32>
    %124 = math.exp %123 : vector<2x128xf32>
    %cst_34 = arith.constant 1.000000e+00 : f32
    %125 = vector.broadcast %cst_34 : f32 to vector<2x128xf32>
    %126 = arith.addf %125, %124 : vector<2x128xf32>
    %127 = arith.divf %125, %126 : vector<2x128xf32>
    %128 = arith.mulf %119, %98 : vector<2x128xf32>
    %129 = arith.mulf %113, %121 : vector<2x128xf32>
    %130 = arith.addf %128, %129 : vector<2x128xf32>
    %131 = math.tanh %130 : vector<2x128xf32>
    %132 = arith.mulf %127, %131 : vector<2x128xf32>
    %c0_35 = arith.constant 0 : index
    %c4 = arith.constant 4 : index
    %c0_36 = arith.constant 0 : index
    %133 = vector.load %arg0[%c0_35, %c4, %c0_36] : memref<2x8x24xf32, #tpu.memory_space<vmem>>, vector<2x1x24xf32>
    %134 = vector.shape_cast %133 : vector<2x1x24xf32> to vector<2x24xf32>
    %cst_37 = arith.constant dense<0.000000e+00> : vector<2x512xf32>
    %135 = tpu.matmul %134, %0, %cst_37 {dimension_numbers = #tpu.dot_dimension_numbers<[1], [0], [0], [1], [0, 0, 1, 1], [], []>} : vector<2x24xf32>, vector<24x512xf32>, vector<2x512xf32> -> vector<2x512xf32>
    %cst_38 = arith.constant dense<0.000000e+00> : vector<2x512xf32>
    %136 = tpu.matmul %132, %1, %cst_38 {dimension_numbers = #tpu.dot_dimension_numbers<[1], [0], [0], [1], [0, 0, 1, 1], [], []>} : vector<2x128xf32>, vector<128x512xf32>, vector<2x512xf32> -> vector<2x512xf32>
    %137 = arith.addf %135, %136 : vector<2x512xf32>
    %138 = vector.broadcast %2 : vector<1x512xf32> to vector<2x512xf32>
    %139 = arith.addf %137, %138 : vector<2x512xf32>
    %140 = vector.extract_strided_slice %139 {offsets = [0, 0], sizes = [2, 128], strides = [1, 1]} : vector<2x512xf32> to vector<2x128xf32>
    %141 = arith.negf %140 : vector<2x128xf32>
    %142 = math.exp %141 : vector<2x128xf32>
    %cst_39 = arith.constant 1.000000e+00 : f32
    %143 = vector.broadcast %cst_39 : f32 to vector<2x128xf32>
    %144 = arith.addf %143, %142 : vector<2x128xf32>
    %145 = arith.divf %143, %144 : vector<2x128xf32>
    %146 = vector.extract_strided_slice %139 {offsets = [0, 128], sizes = [2, 128], strides = [1, 1]} : vector<2x512xf32> to vector<2x128xf32>
    %147 = arith.negf %146 : vector<2x128xf32>
    %148 = math.exp %147 : vector<2x128xf32>
    %cst_40 = arith.constant 1.000000e+00 : f32
    %149 = vector.broadcast %cst_40 : f32 to vector<2x128xf32>
    %150 = arith.addf %149, %148 : vector<2x128xf32>
    %151 = arith.divf %149, %150 : vector<2x128xf32>
    %152 = vector.extract_strided_slice %139 {offsets = [0, 256], sizes = [2, 128], strides = [1, 1]} : vector<2x512xf32> to vector<2x128xf32>
    %153 = math.tanh %152 : vector<2x128xf32>
    %154 = vector.extract_strided_slice %139 {offsets = [0, 384], sizes = [2, 128], strides = [1, 1]} : vector<2x512xf32> to vector<2x128xf32>
    %155 = arith.negf %154 : vector<2x128xf32>
    %156 = math.exp %155 : vector<2x128xf32>
    %cst_41 = arith.constant 1.000000e+00 : f32
    %157 = vector.broadcast %cst_41 : f32 to vector<2x128xf32>
    %158 = arith.addf %157, %156 : vector<2x128xf32>
    %159 = arith.divf %157, %158 : vector<2x128xf32>
    %160 = arith.mulf %151, %130 : vector<2x128xf32>
    %161 = arith.mulf %145, %153 : vector<2x128xf32>
    %162 = arith.addf %160, %161 : vector<2x128xf32>
    %163 = math.tanh %162 : vector<2x128xf32>
    %164 = arith.mulf %159, %163 : vector<2x128xf32>
    %c0_42 = arith.constant 0 : index
    %c5 = arith.constant 5 : index
    %c0_43 = arith.constant 0 : index
    %165 = vector.load %arg0[%c0_42, %c5, %c0_43] : memref<2x8x24xf32, #tpu.memory_space<vmem>>, vector<2x1x24xf32>
    %166 = vector.shape_cast %165 : vector<2x1x24xf32> to vector<2x24xf32>
    %cst_44 = arith.constant dense<0.000000e+00> : vector<2x512xf32>
    %167 = tpu.matmul %166, %0, %cst_44 {dimension_numbers = #tpu.dot_dimension_numbers<[1], [0], [0], [1], [0, 0, 1, 1], [], []>} : vector<2x24xf32>, vector<24x512xf32>, vector<2x512xf32> -> vector<2x512xf32>
    %cst_45 = arith.constant dense<0.000000e+00> : vector<2x512xf32>
    %168 = tpu.matmul %164, %1, %cst_45 {dimension_numbers = #tpu.dot_dimension_numbers<[1], [0], [0], [1], [0, 0, 1, 1], [], []>} : vector<2x128xf32>, vector<128x512xf32>, vector<2x512xf32> -> vector<2x512xf32>
    %169 = arith.addf %167, %168 : vector<2x512xf32>
    %170 = vector.broadcast %2 : vector<1x512xf32> to vector<2x512xf32>
    %171 = arith.addf %169, %170 : vector<2x512xf32>
    %172 = vector.extract_strided_slice %171 {offsets = [0, 0], sizes = [2, 128], strides = [1, 1]} : vector<2x512xf32> to vector<2x128xf32>
    %173 = arith.negf %172 : vector<2x128xf32>
    %174 = math.exp %173 : vector<2x128xf32>
    %cst_46 = arith.constant 1.000000e+00 : f32
    %175 = vector.broadcast %cst_46 : f32 to vector<2x128xf32>
    %176 = arith.addf %175, %174 : vector<2x128xf32>
    %177 = arith.divf %175, %176 : vector<2x128xf32>
    %178 = vector.extract_strided_slice %171 {offsets = [0, 128], sizes = [2, 128], strides = [1, 1]} : vector<2x512xf32> to vector<2x128xf32>
    %179 = arith.negf %178 : vector<2x128xf32>
    %180 = math.exp %179 : vector<2x128xf32>
    %cst_47 = arith.constant 1.000000e+00 : f32
    %181 = vector.broadcast %cst_47 : f32 to vector<2x128xf32>
    %182 = arith.addf %181, %180 : vector<2x128xf32>
    %183 = arith.divf %181, %182 : vector<2x128xf32>
    %184 = vector.extract_strided_slice %171 {offsets = [0, 256], sizes = [2, 128], strides = [1, 1]} : vector<2x512xf32> to vector<2x128xf32>
    %185 = math.tanh %184 : vector<2x128xf32>
    %186 = vector.extract_strided_slice %171 {offsets = [0, 384], sizes = [2, 128], strides = [1, 1]} : vector<2x512xf32> to vector<2x128xf32>
    %187 = arith.negf %186 : vector<2x128xf32>
    %188 = math.exp %187 : vector<2x128xf32>
    %cst_48 = arith.constant 1.000000e+00 : f32
    %189 = vector.broadcast %cst_48 : f32 to vector<2x128xf32>
    %190 = arith.addf %189, %188 : vector<2x128xf32>
    %191 = arith.divf %189, %190 : vector<2x128xf32>
    %192 = arith.mulf %183, %162 : vector<2x128xf32>
    %193 = arith.mulf %177, %185 : vector<2x128xf32>
    %194 = arith.addf %192, %193 : vector<2x128xf32>
    %195 = math.tanh %194 : vector<2x128xf32>
    %196 = arith.mulf %191, %195 : vector<2x128xf32>
    %c0_49 = arith.constant 0 : index
    %c6 = arith.constant 6 : index
    %c0_50 = arith.constant 0 : index
    %197 = vector.load %arg0[%c0_49, %c6, %c0_50] : memref<2x8x24xf32, #tpu.memory_space<vmem>>, vector<2x1x24xf32>
    %198 = vector.shape_cast %197 : vector<2x1x24xf32> to vector<2x24xf32>
    %cst_51 = arith.constant dense<0.000000e+00> : vector<2x512xf32>
    %199 = tpu.matmul %198, %0, %cst_51 {dimension_numbers = #tpu.dot_dimension_numbers<[1], [0], [0], [1], [0, 0, 1, 1], [], []>} : vector<2x24xf32>, vector<24x512xf32>, vector<2x512xf32> -> vector<2x512xf32>
    %cst_52 = arith.constant dense<0.000000e+00> : vector<2x512xf32>
    %200 = tpu.matmul %196, %1, %cst_52 {dimension_numbers = #tpu.dot_dimension_numbers<[1], [0], [0], [1], [0, 0, 1, 1], [], []>} : vector<2x128xf32>, vector<128x512xf32>, vector<2x512xf32> -> vector<2x512xf32>
    %201 = arith.addf %199, %200 : vector<2x512xf32>
    %202 = vector.broadcast %2 : vector<1x512xf32> to vector<2x512xf32>
    %203 = arith.addf %201, %202 : vector<2x512xf32>
    %204 = vector.extract_strided_slice %203 {offsets = [0, 0], sizes = [2, 128], strides = [1, 1]} : vector<2x512xf32> to vector<2x128xf32>
    %205 = arith.negf %204 : vector<2x128xf32>
    %206 = math.exp %205 : vector<2x128xf32>
    %cst_53 = arith.constant 1.000000e+00 : f32
    %207 = vector.broadcast %cst_53 : f32 to vector<2x128xf32>
    %208 = arith.addf %207, %206 : vector<2x128xf32>
    %209 = arith.divf %207, %208 : vector<2x128xf32>
    %210 = vector.extract_strided_slice %203 {offsets = [0, 128], sizes = [2, 128], strides = [1, 1]} : vector<2x512xf32> to vector<2x128xf32>
    %211 = arith.negf %210 : vector<2x128xf32>
    %212 = math.exp %211 : vector<2x128xf32>
    %cst_54 = arith.constant 1.000000e+00 : f32
    %213 = vector.broadcast %cst_54 : f32 to vector<2x128xf32>
    %214 = arith.addf %213, %212 : vector<2x128xf32>
    %215 = arith.divf %213, %214 : vector<2x128xf32>
    %216 = vector.extract_strided_slice %203 {offsets = [0, 256], sizes = [2, 128], strides = [1, 1]} : vector<2x512xf32> to vector<2x128xf32>
    %217 = math.tanh %216 : vector<2x128xf32>
    %218 = vector.extract_strided_slice %203 {offsets = [0, 384], sizes = [2, 128], strides = [1, 1]} : vector<2x512xf32> to vector<2x128xf32>
    %219 = arith.negf %218 : vector<2x128xf32>
    %220 = math.exp %219 : vector<2x128xf32>
    %cst_55 = arith.constant 1.000000e+00 : f32
    %221 = vector.broadcast %cst_55 : f32 to vector<2x128xf32>
    %222 = arith.addf %221, %220 : vector<2x128xf32>
    %223 = arith.divf %221, %222 : vector<2x128xf32>
    %224 = arith.mulf %215, %194 : vector<2x128xf32>
    %225 = arith.mulf %209, %217 : vector<2x128xf32>
    %226 = arith.addf %224, %225 : vector<2x128xf32>
    %227 = math.tanh %226 : vector<2x128xf32>
    %228 = arith.mulf %223, %227 : vector<2x128xf32>
    %c0_56 = arith.constant 0 : index
    %c7 = arith.constant 7 : index
    %c0_57 = arith.constant 0 : index
    %229 = vector.load %arg0[%c0_56, %c7, %c0_57] : memref<2x8x24xf32, #tpu.memory_space<vmem>>, vector<2x1x24xf32>
    %230 = vector.shape_cast %229 : vector<2x1x24xf32> to vector<2x24xf32>
    %cst_58 = arith.constant dense<0.000000e+00> : vector<2x512xf32>
    %231 = tpu.matmul %230, %0, %cst_58 {dimension_numbers = #tpu.dot_dimension_numbers<[1], [0], [0], [1], [0, 0, 1, 1], [], []>} : vector<2x24xf32>, vector<24x512xf32>, vector<2x512xf32> -> vector<2x512xf32>
    %cst_59 = arith.constant dense<0.000000e+00> : vector<2x512xf32>
    %232 = tpu.matmul %228, %1, %cst_59 {dimension_numbers = #tpu.dot_dimension_numbers<[1], [0], [0], [1], [0, 0, 1, 1], [], []>} : vector<2x128xf32>, vector<128x512xf32>, vector<2x512xf32> -> vector<2x512xf32>
    %233 = arith.addf %231, %232 : vector<2x512xf32>
    %234 = vector.broadcast %2 : vector<1x512xf32> to vector<2x512xf32>
    %235 = arith.addf %233, %234 : vector<2x512xf32>
    %236 = vector.extract_strided_slice %235 {offsets = [0, 0], sizes = [2, 128], strides = [1, 1]} : vector<2x512xf32> to vector<2x128xf32>
    %237 = arith.negf %236 : vector<2x128xf32>
    %238 = math.exp %237 : vector<2x128xf32>
    %cst_60 = arith.constant 1.000000e+00 : f32
    %239 = vector.broadcast %cst_60 : f32 to vector<2x128xf32>
    %240 = arith.addf %239, %238 : vector<2x128xf32>
    %241 = arith.divf %239, %240 : vector<2x128xf32>
    %242 = vector.extract_strided_slice %235 {offsets = [0, 128], sizes = [2, 128], strides = [1, 1]} : vector<2x512xf32> to vector<2x128xf32>
    %243 = arith.negf %242 : vector<2x128xf32>
    %244 = math.exp %243 : vector<2x128xf32>
    %cst_61 = arith.constant 1.000000e+00 : f32
    %245 = vector.broadcast %cst_61 : f32 to vector<2x128xf32>
    %246 = arith.addf %245, %244 : vector<2x128xf32>
    %247 = arith.divf %245, %246 : vector<2x128xf32>
    %248 = vector.extract_strided_slice %235 {offsets = [0, 256], sizes = [2, 128], strides = [1, 1]} : vector<2x512xf32> to vector<2x128xf32>
    %249 = math.tanh %248 : vector<2x128xf32>
    %250 = vector.extract_strided_slice %235 {offsets = [0, 384], sizes = [2, 128], strides = [1, 1]} : vector<2x512xf32> to vector<2x128xf32>
    %251 = arith.negf %250 : vector<2x128xf32>
    %252 = math.exp %251 : vector<2x128xf32>
    %cst_62 = arith.constant 1.000000e+00 : f32
    %253 = vector.broadcast %cst_62 : f32 to vector<2x128xf32>
    %254 = arith.addf %253, %252 : vector<2x128xf32>
    %255 = arith.divf %253, %254 : vector<2x128xf32>
    %256 = arith.mulf %247, %226 : vector<2x128xf32>
    %257 = arith.mulf %241, %249 : vector<2x128xf32>
    %258 = arith.addf %256, %257 : vector<2x128xf32>
    %259 = math.tanh %258 : vector<2x128xf32>
    %260 = arith.mulf %255, %259 : vector<2x128xf32>
    %c0_63 = arith.constant 0 : index
    %c0_64 = arith.constant 0 : index
    %261 = vector.load %arg4[%c0_63, %c0_64] : memref<128x128xf32, #tpu.memory_space<vmem>>, vector<128x128xf32>
    %cst_65 = arith.constant dense<0.000000e+00> : vector<2x128xf32>
    %262 = tpu.matmul %260, %261, %cst_65 {dimension_numbers = #tpu.dot_dimension_numbers<[1], [0], [0], [1], [0, 0, 1, 1], [], []>} : vector<2x128xf32>, vector<128x128xf32>, vector<2x128xf32> -> vector<2x128xf32>
    %c0_66 = arith.constant 0 : index
    %c0_67 = arith.constant 0 : index
    %263 = vector.load %arg5[%c0_66, %c0_67] : memref<1x128xf32, #tpu.memory_space<vmem>>, vector<1x128xf32>
    %264 = vector.broadcast %263 : vector<1x128xf32> to vector<2x128xf32>
    %265 = arith.addf %262, %264 : vector<2x128xf32>
    %266 = tpu.iota {dimensions = array<i32: 1>} : vector<2x128xi32>
    %c0_i32 = arith.constant 0 : i32
    %267 = vector.broadcast %c0_i32 : i32 to vector<2x128xi32>
    %268 = arith.cmpi eq, %266, %267 : vector<2x128xi32>
    %269 = math.exp %265 : vector<2x128xf32>
    %270 = arith.negf %265 : vector<2x128xf32>
    %271 = math.exp %270 : vector<2x128xf32>
    %cst_68 = arith.constant 1.000000e+00 : f32
    %272 = vector.broadcast %cst_68 : f32 to vector<2x128xf32>
    %273 = arith.addf %272, %271 : vector<2x128xf32>
    %274 = arith.divf %272, %273 : vector<2x128xf32>
    %275 = arith.select %268, %269, %274 : vector<2x128xi1>, vector<2x128xf32>
    %c0_69 = arith.constant 0 : index
    %c0_70 = arith.constant 0 : index
    %276 = vector.load %arg6[%c0_69, %c0_70] : memref<2x128xf32, #tpu.memory_space<vmem>>, vector<2x128xf32>
    tpu.vector_store %arg6[%c0_69, %c0_70], %275 {strides = array<i32>} : memref<2x128xf32, #tpu.memory_space<vmem>>, vector<2x128xf32>,
    return
  }
}

</mosaic_0001>

<llo_original>
// kernel: lstm_wtt_forward.1
$region0: #{lstm_wtt_forward.1}
  #allocation0 [shape = 'u32[]', space=smem, size = 0x4, offset = 0x4, fixed_abs, tag = 'smem constant byte address 0x4 - core index']
  #allocation1 [shape = 'u32[144,128]{1,0:T(1,128)}', space=vmem, size = 0x12000, scoped, tag = 'internal scratch']
  %s0 = inlined_call_operand.vmem [shape: f32[2,8,24], index: 0, kind: input, shape index: {}]
  %s1 = inlined_call_operand.vmem [shape: f32[24,512], index: 1, kind: input, shape index: {}]
  %s2 = inlined_call_operand.vmem [shape: f32[128,512], index: 2, kind: input, shape index: {}]
  %s3 = inlined_call_operand.vmem [shape: f32[1,512], index: 3, kind: input, shape index: {}]
  %s4 = inlined_call_operand.vmem [shape: f32[128,128], index: 4, kind: input, shape index: {}]
  %s5 = inlined_call_operand.vmem [shape: f32[1,128], index: 5, kind: input, shape index: {}]
  %s6 = inlined_call_operand.hbm [shape: f32[2,128], index: 6, kind: output, shape index: {}]
  %s7 = sld [smem:[#allocation0]]
  $region34: #{lstm_wtt_forward.1} parent=0
    _
  %s9 = ssub.s32 1, %s7
  %s10 = scalar_select 0, %s9, %s7
  $region1: #{lstm_wtt_forward.1} parent=0
    #allocation2 [shape = 'u8[1024]{0}', space=vmem, size = 0x400, scoped, tag = 'output window, operand 0, single buffered']
    #allocation3 [shape = 's32[1]{0}', space=sflag, size = 0x4, scoped, tag = 'scoped memory for lstm_wtt_forward.1']
    %11 = vsyncpa [#allocation3], 0
    // Predicated region
    $region2: #{lstm_wtt_forward.1} parent=1 // pred_check
      _
    $region3: #{lstm_wtt_forward.1} parent=1 // pred_check_branch
      %13 = sbr.rel (0) target = $region5
    $region4: #{lstm_wtt_forward.1} parent=1 // pred_region
      _
    $region5: #{lstm_wtt_forward.1} parent=1 // pred_fallthru
      _
    // Predicated region
    $region6: #{lstm_wtt_forward.1} parent=1 // pred_check
      _
    $region7: #{lstm_wtt_forward.1} parent=1 // pred_check_branch
      %15 = sbr.rel (0) target = $region9
    $region8: #{lstm_wtt_forward.1} parent=1 // pred_region
      _
    $region9: #{lstm_wtt_forward.1} parent=1 // pred_fallthru
      _
    // Predicated region
    $region10: #{lstm_wtt_forward.1} parent=1 // pred_check
      _
    $region11: #{lstm_wtt_forward.1} parent=1 // pred_check_branch
      %17 = sbr.rel (0) target = $region13
    $region12: #{lstm_wtt_forward.1} parent=1 // pred_region
      _
    $region13: #{lstm_wtt_forward.1} parent=1 // pred_fallthru
      _
    // Predicated region
    $region14: #{lstm_wtt_forward.1} parent=1 // pred_check
      _
    $region15: #{lstm_wtt_forward.1} parent=1 // pred_check_branch
      %19 = sbr.rel (0) target = $region17
    $region16: #{lstm_wtt_forward.1} parent=1 // pred_region
      _
    $region17: #{lstm_wtt_forward.1} parent=1 // pred_fallthru
      _
    // Predicated region
    $region18: #{lstm_wtt_forward.1} parent=1 // pred_check
      _
    $region19: #{lstm_wtt_forward.1} parent=1 // pred_check_branch
      %21 = sbr.rel (0) target = $region21
    $region20: #{lstm_wtt_forward.1} parent=1 // pred_region
      _
    $region21: #{lstm_wtt_forward.1} parent=1 // pred_fallthru
      _
    // Predicated region
    $region22: #{lstm_wtt_forward.1} parent=1 // pred_check
      _
    $region23: #{lstm_wtt_forward.1} parent=1 // pred_check_branch
      %23 = sbr.rel (0) target = $region25
    $region24: #{lstm_wtt_forward.1} parent=1 // pred_region
      _
    $region25: #{lstm_wtt_forward.1} parent=1 // pred_fallthru
      _
    %v24 = vld [vmem:[%s1] sm:$0xff]
    %v25 = vld [vmem:[%s1 + $0x8] sm:$0xff]
    %v26 = vld [vmem:[%s1 + $0x10] sm:$0xff]
    %v27 = vld [vmem:[%s1 + $0x18] sm:$0xff]
    %v28 = vld [vmem:[%s1 + $0x20] sm:$0xff]
    %v29 = vld [vmem:[%s1 + $0x28] sm:$0xff]
    %v30 = vld [vmem:[%s1 + $0x30] sm:$0xff]
    %v31 = vld [vmem:[%s1 + $0x38] sm:$0xff]
    %v32 = vld [vmem:[%s1 + $0x40] sm:$0xff]
    %v33 = vld [vmem:[%s1 + $0x48] sm:$0xff]
    %v34 = vld [vmem:[%s1 + $0x50] sm:$0xff]
    %v35 = vld [vmem:[%s1 + $0x58] sm:$0xff]
    %v36 = vld [vmem:[%s2] sm:$0xff]
    %v37 = vld [vmem:[%s2 + $0x8] sm:$0xff]
    %v38 = vld [vmem:[%s2 + $0x10] sm:$0xff]
    %v39 = vld [vmem:[%s2 + $0x18] sm:$0xff]
    %v40 = vld [vmem:[%s2 + $0x20] sm:$0xff]
    %v41 = vld [vmem:[%s2 + $0x28] sm:$0xff]
    %v42 = vld [vmem:[%s2 + $0x30] sm:$0xff]
    %v43 = vld [vmem:[%s2 + $0x38] sm:$0xff]
    %v44 = vld [vmem:[%s2 + $0x40] sm:$0xff]
    %v45 = vld [vmem:[%s2 + $0x48] sm:$0xff]
    %v46 = vld [vmem:[%s2 + $0x50] sm:$0xff]
    %v47 = vld [vmem:[%s2 + $0x58] sm:$0xff]
    %v48 = vld [vmem:[%s2 + $0x60] sm:$0xff]
    %v49 = vld [vmem:[%s2 + $0x68] sm:$0xff]
    %v50 = vld [vmem:[%s2 + $0x70] sm:$0xff]
    %v51 = vld [vmem:[%s2 + $0x78] sm:$0xff]
    %v52 = vld [vmem:[%s2 + $0x80] sm:$0xff]
    %v53 = vld [vmem:[%s2 + $0x88] sm:$0xff]
    %v54 = vld [vmem:[%s2 + $0x90] sm:$0xff]
    %v55 = vld [vmem:[%s2 + $0x98] sm:$0xff]
    %v56 = vld [vmem:[%s2 + $0xa0] sm:$0xff]
    %v57 = vld [vmem:[%s2 + $0xa8] sm:$0xff]
    %v58 = vld [vmem:[%s2 + $0xb0] sm:$0xff]
    %v59 = vld [vmem:[%s2 + $0xb8] sm:$0xff]
    %v60 = vld [vmem:[%s2 + $0xc0] sm:$0xff]
    %v61 = vld [vmem:[%s2 + $0xc8] sm:$0xff]
    %v62 = vld [vmem:[%s2 + $0xd0] sm:$0xff]
    %v63 = vld [vmem:[%s2 + $0xd8] sm:$0xff]
    %v64 = vld [vmem:[%s2 + $0xe0] sm:$0xff]
    %v65 = vld [vmem:[%s2 + $0xe8] sm:$0xff]
    %v66 = vld [vmem:[%s2 + $0xf0] sm:$0xff]
    %v67 = vld [vmem:[%s2 + $0xf8] sm:$0xff]
    %v68 = vld [vmem:[%s2 + $0x100] sm:$0xff]
    %v69 = vld [vmem:[%s2 + $0x108] sm:$0xff]
    %v70 = vld [vmem:[%s2 + $0x110] sm:$0xff]
    %v71 = vld [vmem:[%s2 + $0x118] sm:$0xff]
    %v72 = vld [vmem:[%s2 + $0x120] sm:$0xff]
    %v73 = vld [vmem:[%s2 + $0x128] sm:$0xff]
    %v74 = vld [vmem:[%s2 + $0x130] sm:$0xff]
    %v75 = vld [vmem:[%s2 + $0x138] sm:$0xff]
    %v76 = vld [vmem:[%s2 + $0x140] sm:$0xff]
    %v77 = vld [vmem:[%s2 + $0x148] sm:$0xff]
    %v78 = vld [vmem:[%s2 + $0x150] sm:$0xff]
    %v79 = vld [vmem:[%s2 + $0x158] sm:$0xff]
    %v80 = vld [vmem:[%s2 + $0x160] sm:$0xff]
    %v81 = vld [vmem:[%s2 + $0x168] sm:$0xff]
    %v82 = vld [vmem:[%s2 + $0x170] sm:$0xff]
    %v83 = vld [vmem:[%s2 + $0x178] sm:$0xff]
    %v84 = vld [vmem:[%s2 + $0x180] sm:$0xff]
    %v85 = vld [vmem:[%s2 + $0x188] sm:$0xff]
    %v86 = vld [vmem:[%s2 + $0x190] sm:$0xff]
    %v87 = vld [vmem:[%s2 + $0x198] sm:$0xff]
    %v88 = vld [vmem:[%s2 + $0x1a0] sm:$0xff]
    %v89 = vld [vmem:[%s2 + $0x1a8] sm:$0xff]
    %v90 = vld [vmem:[%s2 + $0x1b0] sm:$0xff]
    %v91 = vld [vmem:[%s2 + $0x1b8] sm:$0xff]
    %v92 = vld [vmem:[%s2 + $0x1c0] sm:$0xff]
    %v93 = vld [vmem:[%s2 + $0x1c8] sm:$0xff]
    %v94 = vld [vmem:[%s2 + $0x1d0] sm:$0xff]
    %v95 = vld [vmem:[%s2 + $0x1d8] sm:$0xff]
    %v96 = vld [vmem:[%s2 + $0x1e0] sm:$0xff]
    %v97 = vld [vmem:[%s2 + $0x1e8] sm:$0xff]
    %v98 = vld [vmem:[%s2 + $0x1f0] sm:$0xff]
    %v99 = vld [vmem:[%s2 + $0x1f8] sm:$0xff]
    %v100 = vld [vmem:[%s3] sm:$0xf]
    %v101 = vld [vmem:[%s0] sm:$0x1]
    %v102 = vld [vmem:[%s0 + $0x8] sm:$0x1]
    %103 = vmatprep.subr.mxu0 %v97
    %104 = vmatpush1.msra.mxu0 %v96
    %105 = vmatprep.subr.mxu0 %v93
    %106 = vmatpush1.msra.mxu0 %v92
    %107 = vmatprep.subr.mxu0 %v89
    %108 = vmatpush1.msra.mxu0 %v88
    %109 = vmatprep.subr.mxu0 %v85
    %110 = vmatpush1.msra.mxu0 %v84
    %111 = vmatprep.subr.mxu0 %v81
    %112 = vmatpush1.msra.mxu0 %v80
    %113 = vmatprep.subr.mxu0 %v77
    %114 = vmatpush1.msra.mxu0 %v76
    %115 = vmatprep.subr.mxu0 %v73
    %116 = vmatpush1.msra.mxu0 %v72
    %117 = vmatprep.subr.mxu0 %v69
    %118 = vmatpush1.msra.mxu0 %v68
    %119 = vmatprep.subr.mxu0 %v65
    %120 = vmatpush1.msra.mxu0 %v64
    %121 = vmatprep.subr.mxu0 %v61
    %122 = vmatpush1.msra.mxu0 %v60
    %123 = vmatprep.subr.mxu0 %v57
    %124 = vmatpush1.msra.mxu0 %v56
    %125 = vmatprep.subr.mxu0 %v53
    %126 = vmatpush1.msra.mxu0 %v52
    %127 = vmatprep.subr.mxu0 %v49
    %128 = vmatpush1.msra.mxu0 %v48
    %129 = vmatprep.subr.mxu0 %v45
    %130 = vmatpush1.msra.mxu0 %v44
    %131 = vmatprep.subr.mxu0 %v41
    %132 = vmatpush1.msra.mxu0 %v40
    %133 = vmatprep.subr.mxu0 %v37
    %134 = vmatpush1.msra.mxu0 %v36
    %135 = vmatprep.subr.mxu0 0.0
    %136 = vmatpush2.msra.mxu0 0.0
    %137 = vmatprep.subr.mxu0 0.0
    %138 = vmatpush2.msra.mxu0 0.0
    %139 = vmatprep.subr.mxu0 0.0
    %140 = vmatpush2.msra.mxu0 0.0
    %141 = vmatprep.subr.mxu0 0.0
    %142 = vmatpush2.msra.mxu0 0.0
    %143 = vmatprep.subr.mxu0 0.0
    %144 = vmatpush2.msra.mxu0 0.0
    %145 = vmatprep.subr.mxu0 0.0
    %146 = vmatpush2.msra.mxu0 0.0
    %147 = vmatprep.subr.mxu0 0.0
    %148 = vmatpush2.msra.mxu0 0.0
    %149 = vmatprep.subr.mxu0 0.0
    %150 = vmatpush2.msra.mxu0 0.0
    %151 = vmatprep.subr.mxu0 0.0
    %152 = vmatpush2.msra.mxu0 0.0
    %153 = vmatprep.subr.mxu0 0.0
    %154 = vmatpush2.msra.mxu0 0.0
    %155 = vmatprep.subr.mxu0 0.0
    %156 = vmatpush2.msra.mxu0 0.0
    %157 = vmatprep.subr.mxu0 0.0
    %158 = vmatpush2.msra.mxu0 0.0
    %159 = vmatprep.subr.mxu0 0.0
    %160 = vmatpush2.msra.mxu0 0.0
    %161 = vmatprep.subr.mxu0 0.0
    %162 = vmatpush2.msra.mxu0 0.0
    %163 = vmatprep.subr.mxu0 0.0
    %164 = vmatpush2.msra.mxu0 0.0
    %165 = vmatprep.subr.mxu0 0.0
    %166 = vmatpush2.msra.mxu0 0.0
    %167 = vmatprep.mubr.f32.mxu0 0.0
    %168 = vmatmul.mubr.f32.gmra.mxu0 0.0
    %v169 = vpop.f32.mrf.mxu0
    %v170 = vadd.f32 0.0, %v169
    %v171 = vpop.f32.mrf.mxu0
    %v172 = vadd.f32 0.0, %v171
    %173 = vdwg.mxu0
    %174 = vmatprep.subr.mxu0 %v99
    %175 = vmatpush1.msra.mxu0 %v98
    %176 = vmatprep.subr.mxu0 %v95
    %177 = vmatpush1.msra.mxu0 %v94
    %178 = vmatprep.subr.mxu0 %v91
    %179 = vmatpush1.msra.mxu0 %v90
    %180 = vmatprep.subr.mxu0 %v87
    %181 = vmatpush1.msra.mxu0 %v86
    %182 = vmatprep.subr.mxu0 %v83
    %183 = vmatpush1.msra.mxu0 %v82
    %184 = vmatprep.subr.mxu0 %v79
    %185 = vmatpush1.msra.mxu0 %v78
    %186 = vmatprep.subr.mxu0 %v75
    %187 = vmatpush1.msra.mxu0 %v74
    %188 = vmatprep.subr.mxu0 %v71
    %189 = vmatpush1.msra.mxu0 %v70
    %190 = vmatprep.subr.mxu0 %v67
    %191 = vmatpush1.msra.mxu0 %v66
    %192 = vmatprep.subr.mxu0 %v63
    %193 = vmatpush1.msra.mxu0 %v62
    %194 = vmatprep.subr.mxu0 %v59
    %195 = vmatpush1.msra.mxu0 %v58
    %196 = vmatprep.subr.mxu0 %v55
    %197 = vmatpush1.msra.mxu0 %v54
    %198 = vmatprep.subr.mxu0 %v51
    %199 = vmatpush1.msra.mxu0 %v50
    %200 = vmatprep.subr.mxu0 %v47
    %201 = vmatpush1.msra.mxu0 %v46
    %202 = vmatprep.subr.mxu0 %v43
    %203 = vmatpush1.msra.mxu0 %v42
    %204 = vmatprep.subr.mxu0 %v39
    %205 = vmatpush1.msra.mxu0 %v38
    %206 = vmatprep.subr.mxu0 0.0
    %207 = vmatpush2.msra.mxu0 0.0
    %208 = vmatprep.subr.mxu0 0.0
    %209 = vmatpush2.msra.mxu0 0.0
    %210 = vmatprep.subr.mxu0 0.0
    %211 = vmatpush2.msra.mxu0 0.0
    %212 = vmatprep.subr.mxu0 0.0
    %213 = vmatpush2.msra.mxu0 0.0
    %214 = vmatprep.subr.mxu0 0.0
    %215 = vmatpush2.msra.mxu0 0.0
    %216 = vmatprep.subr.mxu0 0.0
    %217 = vmatpush2.msra.mxu0 0.0
    %218 = vmatprep.subr.mxu0 0.0
    %219 = vmatpush2.msra.mxu0 0.0
    %220 = vmatprep.subr.mxu0 0.0
    %221 = vmatpush2.msra.mxu0 0.0
    %222 = vmatprep.subr.mxu0 0.0
    %223 = vmatpush2.msra.mxu0 0.0
    %224 = vmatprep.subr.mxu0 0.0
    %225 = vmatpush2.msra.mxu0 0.0
    %226 = vmatprep.subr.mxu0 0.0
    %227 = vmatpush2.msra.mxu0 0.0
    %228 = vmatprep.subr.mxu0 0.0
    %229 = vmatpush2.msra.mxu0 0.0
    %230 = vmatprep.subr.mxu0 0.0
    %231 = vmatpush2.msra.mxu0 0.0
    %232 = vmatprep.subr.mxu0 0.0
    %233 = vmatpush2.msra.mxu0 0.0
    %234 = vmatprep.subr.mxu0 0.0
    %235 = vmatpush2.msra.mxu0 0.0
    %236 = vmatprep.subr.mxu0 0.0
    %237 = vmatpush2.msra.mxu0 0.0
    %238 = vmatprep.mubr.f32.mxu0 0.0
    %239 = vmatmul.mubr.f32.gmra.mxu0 0.0
    %v240 = vpop.f32.mrf.mxu0
    %v241 = vadd.f32 0.0, %v240
    %v242 = vpop.f32.mrf.mxu0
    %v243 = vadd.f32 0.0, %v242
    %244 = vdwg.mxu0
    %v247 = vrot.slane %v102, 7
    %vm248 = vcmask 1041409
    %v249 = vsel %vm248, %v247, %v101
    %vm250 = vcmask 195584
    %v251 = vsel %vm250, %v249, 0
    %253 = vmatprep.subr.mxu0 0.0
    %254 = vmatpush1.msra.mxu0 0.0
    %255 = vmatprep.subr.mxu0 0.0
    %256 = vmatpush1.msra.mxu0 0.0
    %257 = vmatprep.subr.mxu0 0.0
    %258 = vmatpush1.msra.mxu0 0.0
    %259 = vmatprep.subr.mxu0 0.0
    %260 = vmatpush1.msra.mxu0 0.0
    %261 = vmatprep.subr.mxu0 0.0
    %262 = vmatpush1.msra.mxu0 0.0
    %263 = vmatprep.subr.mxu0 0.0
    %264 = vmatpush1.msra.mxu0 0.0
    %265 = vmatprep.subr.mxu0 0.0
    %266 = vmatpush1.msra.mxu0 0.0
    %267 = vmatprep.subr.mxu0 0.0
    %268 = vmatpush1.msra.mxu0 0.0
    %269 = vmatprep.subr.mxu0 0.0
    %270 = vmatpush1.msra.mxu0 0.0
    %271 = vmatprep.subr.mxu0 0.0
    %272 = vmatpush1.msra.mxu0 0.0
    %273 = vmatprep.subr.mxu0 0.0
    %274 = vmatpush1.msra.mxu0 0.0
    %275 = vmatprep.subr.mxu0 0.0
    %276 = vmatpush1.msra.mxu0 0.0
    %277 = vmatprep.subr.mxu0 0.0
    %278 = vmatpush1.msra.mxu0 0.0
    %279 = vmatprep.subr.mxu0 %v33
    %280 = vmatpush1.msra.mxu0 %v32
    %281 = vmatprep.subr.mxu0 %v29
    %282 = vmatpush1.msra.mxu0 %v28
    %283 = vmatprep.subr.mxu0 %v25
    %284 = vmatpush1.msra.mxu0 %v24
    %285 = vmatprep.subr.mxu0 0.0
    %286 = vmatpush2.msra.mxu0 0.0
    %287 = vmatprep.subr.mxu0 0.0
    %288 = vmatpush2.msra.mxu0 0.0
    %289 = vmatprep.subr.mxu0 0.0
    %290 = vmatpush2.msra.mxu0 0.0
    %291 = vmatprep.subr.mxu0 0.0
    %292 = vmatpush2.msra.mxu0 0.0
    %293 = vmatprep.subr.mxu0 0.0
    %294 = vmatpush2.msra.mxu0 0.0
    %295 = vmatprep.subr.mxu0 0.0
    %296 = vmatpush2.msra.mxu0 0.0
    %297 = vmatprep.subr.mxu0 0.0
    %298 = vmatpush2.msra.mxu0 0.0
    %299 = vmatprep.subr.mxu0 0.0
    %300 = vmatpush2.msra.mxu0 0.0
    %301 = vmatprep.subr.mxu0 0.0
    %302 = vmatpush2.msra.mxu0 0.0
    %303 = vmatprep.subr.mxu0 0.0
    %304 = vmatpush2.msra.mxu0 0.0
    %305 = vmatprep.subr.mxu0 0.0
    %306 = vmatpush2.msra.mxu0 0.0
    %307 = vmatprep.subr.mxu0 0.0
    %308 = vmatpush2.msra.mxu0 0.0
    %309 = vmatprep.subr.mxu0 0.0
    %310 = vmatpush2.msra.mxu0 0.0
    %311 = vmatprep.subr.mxu0 0.0
    %312 = vmatpush2.msra.mxu0 0.0
    %313 = vmatprep.subr.mxu0 0.0
    %314 = vmatpush2.msra.mxu0 0.0
    %315 = vmatprep.subr.mxu0 0.0
    %316 = vmatpush2.msra.mxu0 0.0
    %317 = vmatprep.mubr.f32.mxu0 0.0
    %318 = vmatmul.mubr.f32.gmra.mxu0 %v251
    %v319 = vpop.f32.mrf.mxu0
    %v320 = vadd.f32 %v170, %v319
    %v321 = vpop.f32.mrf.mxu0
    %v322 = vadd.f32 %v172, %v321
    %323 = vdwg.mxu0
    %324 = vmatprep.subr.mxu0 0.0
    %325 = vmatpush1.msra.mxu0 0.0
    %326 = vmatprep.subr.mxu0 0.0
    %327 = vmatpush1.msra.mxu0 0.0
    %328 = vmatprep.subr.mxu0 0.0
    %329 = vmatpush1.msra.mxu0 0.0
    %330 = vmatprep.subr.mxu0 0.0
    %331 = vmatpush1.msra.mxu0 0.0
    %332 = vmatprep.subr.mxu0 0.0
    %333 = vmatpush1.msra.mxu0 0.0
    %334 = vmatprep.subr.mxu0 0.0
    %335 = vmatpush1.msra.mxu0 0.0
    %336 = vmatprep.subr.mxu0 0.0
    %337 = vmatpush1.msra.mxu0 0.0
    %338 = vmatprep.subr.mxu0 0.0
    %339 = vmatpush1.msra.mxu0 0.0
    %340 = vmatprep.subr.mxu0 0.0
    %341 = vmatpush1.msra.mxu0 0.0
    %342 = vmatprep.subr.mxu0 0.0
    %343 = vmatpush1.msra.mxu0 0.0
    %344 = vmatprep.subr.mxu0 0.0
    %345 = vmatpush1.msra.mxu0 0.0
    %346 = vmatprep.subr.mxu0 0.0
    %347 = vmatpush1.msra.mxu0 0.0
    %348 = vmatprep.subr.mxu0 0.0
    %349 = vmatpush1.msra.mxu0 0.0
    %350 = vmatprep.subr.mxu0 %v35
    %351 = vmatpush1.msra.mxu0 %v34
    %352 = vmatprep.subr.mxu0 %v31
    %353 = vmatpush1.msra.mxu0 %v30
    %354 = vmatprep.subr.mxu0 %v27
    %355 = vmatpush1.msra.mxu0 %v26
    %356 = vmatprep.subr.mxu0 0.0
    %357 = vmatpush2.msra.mxu0 0.0
    %358 = vmatprep.subr.mxu0 0.0
    %359 = vmatpush2.msra.mxu0 0.0
    %360 = vmatprep.subr.mxu0 0.0
    %361 = vmatpush2.msra.mxu0 0.0
    %362 = vmatprep.subr.mxu0 0.0
    %363 = vmatpush2.msra.mxu0 0.0
    %364 = vmatprep.subr.mxu0 0.0
    %365 = vmatpush2.msra.mxu0 0.0
    %366 = vmatprep.subr.mxu0 0.0
    %367 = vmatpush2.msra.mxu0 0.0
    %368 = vmatprep.subr.mxu0 0.0
    %369 = vmatpush2.msra.mxu0 0.0
    %370 = vmatprep.subr.mxu0 0.0
    %371 = vmatpush2.msra.mxu0 0.0
    %372 = vmatprep.subr.mxu0 0.0
    %373 = vmatpush2.msra.mxu0 0.0
    %374 = vmatprep.subr.mxu0 0.0
    %375 = vmatpush2.msra.mxu0 0.0
    %376 = vmatprep.subr.mxu0 0.0
    %377 = vmatpush2.msra.mxu0 0.0
    %378 = vmatprep.subr.mxu0 0.0
    %379 = vmatpush2.msra.mxu0 0.0
    %380 = vmatprep.subr.mxu0 0.0
    %381 = vmatpush2.msra.mxu0 0.0
    %382 = vmatprep.subr.mxu0 0.0
    %383 = vmatpush2.msra.mxu0 0.0
    %384 = vmatprep.subr.mxu0 0.0
    %385 = vmatpush2.msra.mxu0 0.0
    %386 = vmatprep.subr.mxu0 0.0
    %387 = vmatpush2.msra.mxu0 0.0
    %388 = vmatprep.mubr.f32.mxu0 0.0
    %389 = vmatmul.mubr.f32.gmra.mxu0 %v251
    %v390 = vpop.f32.mrf.mxu0
    %v391 = vadd.f32 %v241, %v390
    %v392 = vpop.f32.mrf.mxu0
    %v393 = vadd.f32 %v243, %v392
    %394 = vdwg.mxu0
    %v396 = vlaneseq
    %v397 = vshrl.u32 %v396, 7
    %v398 = vsub.s32 0, %v397
    %v399 = vrot.slane %v100, %v398
    %v400 = vlaneseq
    %v401 = vshrl.u32 %v400, 7
    %v402 = vsub.s32 1, %v401
    %v403 = vrot.slane %v100, %v402
    %v404 = vlaneseq
    %v405 = vshrl.u32 %v404, 7
    %v406 = vsub.s32 2, %v405
    %v407 = vrot.slane %v100, %v406
    %v408 = vlaneseq
    %v409 = vshrl.u32 %v408, 7
    %v410 = vsub.s32 3, %v409
    %v411 = vrot.slane %v100, %v410
    %v416 = vadd.f32 %v320, %v399
    %v417 = vadd.f32 %v322, %v403
    %v418 = vadd.f32 %v391, %v407
    %v419 = vadd.f32 %v393, %v411
    %v420 = vxor.u32 %v416, 2147483648
    %v421 = vmul.f32 %v420, 1.442695
    %v422 = vpow.pop %v421
    %v423 = vadd.f32 %v422, 1.0
    %v424 = vrcp.pop %v423
    %v425 = vmul.f32 1.0, %v424
    %v426 = vxor.u32 %v417, 2147483648
    %v427 = vmul.f32 %v426, 1.442695
    %v428 = vpow.pop %v427
    %v429 = vadd.f32 %v428, 1.0
    %v430 = vrcp.pop %v429
    %v431 = vmul.f32 1.0, %v430
    %v432 = vtanh.pop %v418
    %v433 = vxor.u32 %v419, 2147483648
    %v434 = vmul.f32 %v433, 1.442695
    %v435 = vpow.pop %v434
    %v436 = vadd.f32 %v435, 1.0
    %v437 = vrcp.pop %v436
    %v438 = vmul.f32 1.0, %v437
    %v439 = vmul.f32 %v431, 0.0
    %v440 = vmul.f32 %v425, %v432
    %v441 = vadd.f32 %v439, %v440
    %v442 = vtanh.pop %v441
    %v443 = vmul.f32 %v438, %v442
    %v444 = vld [vmem:[%s0 + $0x1] sm:$0x1]
    %v445 = vld [vmem:[%s0 + $0x9] sm:$0x1]
    %446 = vmatprep.subr.mxu0 %v97
    %447 = vmatpush1.msra.mxu0 %v96
    %448 = vmatprep.subr.mxu0 %v93
    %449 = vmatpush1.msra.mxu0 %v92
    %450 = vmatprep.subr.mxu0 %v89
    %451 = vmatpush1.msra.mxu0 %v88
    %452 = vmatprep.subr.mxu0 %v85
    %453 = vmatpush1.msra.mxu0 %v84
    %454 = vmatprep.subr.mxu0 %v81
    %455 = vmatpush1.msra.mxu0 %v80
    %456 = vmatprep.subr.mxu0 %v77
    %457 = vmatpush1.msra.mxu0 %v76
    %458 = vmatprep.subr.mxu0 %v73
    %459 = vmatpush1.msra.mxu0 %v72
    %460 = vmatprep.subr.mxu0 %v69
    %461 = vmatpush1.msra.mxu0 %v68
    %462 = vmatprep.subr.mxu0 %v65
    %463 = vmatpush1.msra.mxu0 %v64
    %464 = vmatprep.subr.mxu0 %v61
    %465 = vmatpush1.msra.mxu0 %v60
    %466 = vmatprep.subr.mxu0 %v57
    %467 = vmatpush1.msra.mxu0 %v56
    %468 = vmatprep.subr.mxu0 %v53
    %469 = vmatpush1.msra.mxu0 %v52
    %470 = vmatprep.subr.mxu0 %v49
    %471 = vmatpush1.msra.mxu0 %v48
    %472 = vmatprep.subr.mxu0 %v45
    %473 = vmatpush1.msra.mxu0 %v44
    %474 = vmatprep.subr.mxu0 %v41
    %475 = vmatpush1.msra.mxu0 %v40
    %476 = vmatprep.subr.mxu0 %v37
    %477 = vmatpush1.msra.mxu0 %v36
    %478 = vmatprep.subr.mxu0 0.0
    %479 = vmatpush2.msra.mxu0 0.0
    %480 = vmatprep.subr.mxu0 0.0
    %481 = vmatpush2.msra.mxu0 0.0
    %482 = vmatprep.subr.mxu0 0.0
    %483 = vmatpush2.msra.mxu0 0.0
    %484 = vmatprep.subr.mxu0 0.0
    %485 = vmatpush2.msra.mxu0 0.0
    %486 = vmatprep.subr.mxu0 0.0
    %487 = vmatpush2.msra.mxu0 0.0
    %488 = vmatprep.subr.mxu0 0.0
    %489 = vmatpush2.msra.mxu0 0.0
    %490 = vmatprep.subr.mxu0 0.0
    %491 = vmatpush2.msra.mxu0 0.0
    %492 = vmatprep.subr.mxu0 0.0
    %493 = vmatpush2.msra.mxu0 0.0
    %494 = vmatprep.subr.mxu0 0.0
    %495 = vmatpush2.msra.mxu0 0.0
    %496 = vmatprep.subr.mxu0 0.0
    %497 = vmatpush2.msra.mxu0 0.0
    %498 = vmatprep.subr.mxu0 0.0
    %499 = vmatpush2.msra.mxu0 0.0
    %500 = vmatprep.subr.mxu0 0.0
    %501 = vmatpush2.msra.mxu0 0.0
    %502 = vmatprep.subr.mxu0 0.0
    %503 = vmatpush2.msra.mxu0 0.0
    %504 = vmatprep.subr.mxu0 0.0
    %505 = vmatpush2.msra.mxu0 0.0
    %506 = vmatprep.subr.mxu0 0.0
    %507 = vmatpush2.msra.mxu0 0.0
    %508 = vmatprep.subr.mxu0 0.0
    %509 = vmatpush2.msra.mxu0 0.0
    %510 = vmatprep.mubr.f32.mxu0 0.0
    %511 = vmatmul.mubr.f32.gmra.mxu0 %v443
    %v512 = vpop.f32.mrf.mxu0
    %v513 = vadd.f32 0.0, %v512
    %v514 = vpop.f32.mrf.mxu0
    %v515 = vadd.f32 0.0, %v514
    %516 = vdwg.mxu0
    %517 = vmatprep.subr.mxu0 %v99
    %518 = vmatpush1.msra.mxu0 %v98
    %519 = vmatprep.subr.mxu0 %v95
    %520 = vmatpush1.msra.mxu0 %v94
    %521 = vmatprep.subr.mxu0 %v91
    %522 = vmatpush1.msra.mxu0 %v90
    %523 = vmatprep.subr.mxu0 %v87
    %524 = vmatpush1.msra.mxu0 %v86
    %525 = vmatprep.subr.mxu0 %v83
    %526 = vmatpush1.msra.mxu0 %v82
    %527 = vmatprep.subr.mxu0 %v79
    %528 = vmatpush1.msra.mxu0 %v78
    %529 = vmatprep.subr.mxu0 %v75
    %530 = vmatpush1.msra.mxu0 %v74
    %531 = vmatprep.subr.mxu0 %v71
    %532 = vmatpush1.msra.mxu0 %v70
    %533 = vmatprep.subr.mxu0 %v67
    %534 = vmatpush1.msra.mxu0 %v66
    %535 = vmatprep.subr.mxu0 %v63
    %536 = vmatpush1.msra.mxu0 %v62
    %537 = vmatprep.subr.mxu0 %v59
    %538 = vmatpush1.msra.mxu0 %v58
    %539 = vmatprep.subr.mxu0 %v55
    %540 = vmatpush1.msra.mxu0 %v54
    %541 = vmatprep.subr.mxu0 %v51
    %542 = vmatpush1.msra.mxu0 %v50
    %543 = vmatprep.subr.mxu0 %v47
    %544 = vmatpush1.msra.mxu0 %v46
    %545 = vmatprep.subr.mxu0 %v43
    %546 = vmatpush1.msra.mxu0 %v42
    %547 = vmatprep.subr.mxu0 %v39
    %548 = vmatpush1.msra.mxu0 %v38
    %549 = vmatprep.subr.mxu0 0.0
    %550 = vmatpush2.msra.mxu0 0.0
    %551 = vmatprep.subr.mxu0 0.0
    %552 = vmatpush2.msra.mxu0 0.0
    %553 = vmatprep.subr.mxu0 0.0
    %554 = vmatpush2.msra.mxu0 0.0
    %555 = vmatprep.subr.mxu0 0.0
    %556 = vmatpush2.msra.mxu0 0.0
    %557 = vmatprep.subr.mxu0 0.0
    %558 = vmatpush2.msra.mxu0 0.0
    %559 = vmatprep.subr.mxu0 0.0
    %560 = vmatpush2.msra.mxu0 0.0
    %561 = vmatprep.subr.mxu0 0.0
    %562 = vmatpush2.msra.mxu0 0.0
    %563 = vmatprep.subr.mxu0 0.0
    %564 = vmatpush2.msra.mxu0 0.0
    %565 = vmatprep.subr.mxu0 0.0
    %566 = vmatpush2.msra.mxu0 0.0
    %567 = vmatprep.subr.mxu0 0.0
    %568 = vmatpush2.msra.mxu0 0.0
    %569 = vmatprep.subr.mxu0 0.0
    %570 = vmatpush2.msra.mxu0 0.0
    %571 = vmatprep.subr.mxu0 0.0
    %572 = vmatpush2.msra.mxu0 0.0
    %573 = vmatprep.subr.mxu0 0.0
    %574 = vmatpush2.msra.mxu0 0.0
    %575 = vmatprep.subr.mxu0 0.0
    %576 = vmatpush2.msra.mxu0 0.0
    %577 = vmatprep.subr.mxu0 0.0
    %578 = vmatpush2.msra.mxu0 0.0
    %579 = vmatprep.subr.mxu0 0.0
    %580 = vmatpush2.msra.mxu0 0.0
    %581 = vmatprep.mubr.f32.mxu0 0.0
    %582 = vmatmul.mubr.f32.gmra.mxu0 %v443
    %v583 = vpop.f32.mrf.mxu0
    %v584 = vadd.f32 0.0, %v583
    %v585 = vpop.f32.mrf.mxu0
    %v586 = vadd.f32 0.0, %v585
    %587 = vdwg.mxu0
    %v590 = vrot.slane %v445, 7
    %v591 = vsel %vm248, %v590, %v444
    %v592 = vsel %vm250, %v591, 0
    %594 = vmatprep.subr.mxu0 0.0
    %595 = vmatpush1.msra.mxu0 0.0
    %596 = vmatprep.subr.mxu0 0.0
    %597 = vmatpush1.msra.mxu0 0.0
    %598 = vmatprep.subr.mxu0 0.0
    %599 = vmatpush1.msra.mxu0 0.0
    %600 = vmatprep.subr.mxu0 0.0
    %601 = vmatpush1.msra.mxu0 0.0
    %602 = vmatprep.subr.mxu0 0.0
    %603 = vmatpush1.msra.mxu0 0.0
    %604 = vmatprep.subr.mxu0 0.0
    %605 = vmatpush1.msra.mxu0 0.0
    %606 = vmatprep.subr.mxu0 0.0
    %607 = vmatpush1.msra.mxu0 0.0
    %608 = vmatprep.subr.mxu0 0.0
    %609 = vmatpush1.msra.mxu0 0.0
    %610 = vmatprep.subr.mxu0 0.0
    %611 = vmatpush1.msra.mxu0 0.0
    %612 = vmatprep.subr.mxu0 0.0
    %613 = vmatpush1.msra.mxu0 0.0
    %614 = vmatprep.subr.mxu0 0.0
    %615 = vmatpush1.msra.mxu0 0.0
    %616 = vmatprep.subr.mxu0 0.0
    %617 = vmatpush1.msra.mxu0 0.0
    %618 = vmatprep.subr.mxu0 0.0
    %619 = vmatpush1.msra.mxu0 0.0
    %620 = vmatprep.subr.mxu0 %v33
    %621 = vmatpush1.msra.mxu0 %v32
    %622 = vmatprep.subr.mxu0 %v29
    %623 = vmatpush1.msra.mxu0 %v28
    %624 = vmatprep.subr.mxu0 %v25
    %625 = vmatpush1.msra.mxu0 %v24
    %626 = vmatprep.subr.mxu0 0.0
    %627 = vmatpush2.msra.mxu0 0.0
    %628 = vmatprep.subr.mxu0 0.0
    %629 = vmatpush2.msra.mxu0 0.0
    %630 = vmatprep.subr.mxu0 0.0
    %631 = vmatpush2.msra.mxu0 0.0
    %632 = vmatprep.subr.mxu0 0.0
    %633 = vmatpush2.msra.mxu0 0.0
    %634 = vmatprep.subr.mxu0 0.0
    %635 = vmatpush2.msra.mxu0 0.0
    %636 = vmatprep.subr.mxu0 0.0
    %637 = vmatpush2.msra.mxu0 0.0
    %638 = vmatprep.subr.mxu0 0.0
    %639 = vmatpush2.msra.mxu0 0.0
    %640 = vmatprep.subr.mxu0 0.0
    %641 = vmatpush2.msra.mxu0 0.0
    %642 = vmatprep.subr.mxu0 0.0
    %643 = vmatpush2.msra.mxu0 0.0
    %644 = vmatprep.subr.mxu0 0.0
    %645 = vmatpush2.msra.mxu0 0.0
    %646 = vmatprep.subr.mxu0 0.0
    %647 = vmatpush2.msra.mxu0 0.0
    %648 = vmatprep.subr.mxu0 0.0
    %649 = vmatpush2.msra.mxu0 0.0
    %650 = vmatprep.subr.mxu0 0.0
    %651 = vmatpush2.msra.mxu0 0.0
    %652 = vmatprep.subr.mxu0 0.0
    %653 = vmatpush2.msra.mxu0 0.0
    %654 = vmatprep.subr.mxu0 0.0
    %655 = vmatpush2.msra.mxu0 0.0
    %656 = vmatprep.subr.mxu0 0.0
    %657 = vmatpush2.msra.mxu0 0.0
    %658 = vmatprep.mubr.f32.mxu0 0.0
    %659 = vmatmul.mubr.f32.gmra.mxu0 %v592
    %v660 = vpop.f32.mrf.mxu0
    %v661 = vadd.f32 %v513, %v660
    %v662 = vpop.f32.mrf.mxu0
    %v663 = vadd.f32 %v515, %v662
    %664 = vdwg.mxu0
    %665 = vmatprep.subr.mxu0 0.0
    %666 = vmatpush1.msra.mxu0 0.0
    %667 = vmatprep.subr.mxu0 0.0
    %668 = vmatpush1.msra.mxu0 0.0
    %669 = vmatprep.subr.mxu0 0.0
    %670 = vmatpush1.msra.mxu0 0.0
    %671 = vmatprep.subr.mxu0 0.0
    %672 = vmatpush1.msra.mxu0 0.0
    %673 = vmatprep.subr.mxu0 0.0
    %674 = vmatpush1.msra.mxu0 0.0
    %675 = vmatprep.subr.mxu0 0.0
    %676 = vmatpush1.msra.mxu0 0.0
    %677 = vmatprep.subr.mxu0 0.0
    %678 = vmatpush1.msra.mxu0 0.0
    %679 = vmatprep.subr.mxu0 0.0
    %680 = vmatpush1.msra.mxu0 0.0
    %681 = vmatprep.subr.mxu0 0.0
    %682 = vmatpush1.msra.mxu0 0.0
    %683 = vmatprep.subr.mxu0 0.0
    %684 = vmatpush1.msra.mxu0 0.0
    %685 = vmatprep.subr.mxu0 0.0
    %686 = vmatpush1.msra.mxu0 0.0
    %687 = vmatprep.subr.mxu0 0.0
    %688 = vmatpush1.msra.mxu0 0.0
    %689 = vmatprep.subr.mxu0 0.0
    %690 = vmatpush1.msra.mxu0 0.0
    %691 = vmatprep.subr.mxu0 %v35
    %692 = vmatpush1.msra.mxu0 %v34
    %693 = vmatprep.subr.mxu0 %v31
    %694 = vmatpush1.msra.mxu0 %v30
    %695 = vmatprep.subr.mxu0 %v27
    %696 = vmatpush1.msra.mxu0 %v26
    %697 = vmatprep.subr.mxu0 0.0
    %698 = vmatpush2.msra.mxu0 0.0
    %699 = vmatprep.subr.mxu0 0.0
    %700 = vmatpush2.msra.mxu0 0.0
    %701 = vmatprep.subr.mxu0 0.0
    %702 = vmatpush2.msra.mxu0 0.0
    %703 = vmatprep.subr.mxu0 0.0
    %704 = vmatpush2.msra.mxu0 0.0
    %705 = vmatprep.subr.mxu0 0.0
    %706 = vmatpush2.msra.mxu0 0.0
    %707 = vmatprep.subr.mxu0 0.0
    %708 = vmatpush2.msra.mxu0 0.0
    %709 = vmatprep.subr.mxu0 0.0
    %710 = vmatpush2.msra.mxu0 0.0
    %711 = vmatprep.subr.mxu0 0.0
    %712 = vmatpush2.msra.mxu0 0.0
    %713 = vmatprep.subr.mxu0 0.0
    %714 = vmatpush2.msra.mxu0 0.0
    %715 = vmatprep.subr.mxu0 0.0
    %716 = vmatpush2.msra.mxu0 0.0
    %717 = vmatprep.subr.mxu0 0.0
    %718 = vmatpush2.msra.mxu0 0.0
    %719 = vmatprep.subr.mxu0 0.0
    %720 = vmatpush2.msra.mxu0 0.0
    %721 = vmatprep.subr.mxu0 0.0
    %722 = vmatpush2.msra.mxu0 0.0
    %723 = vmatprep.subr.mxu0 0.0
    %724 = vmatpush2.msra.mxu0 0.0
    %725 = vmatprep.subr.mxu0 0.0
    %726 = vmatpush2.msra.mxu0 0.0
    %727 = vmatprep.subr.mxu0 0.0
    %728 = vmatpush2.msra.mxu0 0.0
    %729 = vmatprep.mubr.f32.mxu0 0.0
    %730 = vmatmul.mubr.f32.gmra.mxu0 %v592
    %v731 = vpop.f32.mrf.mxu0
    %v732 = vadd.f32 %v584, %v731
    %v733 = vpop.f32.mrf.mxu0
    %v734 = vadd.f32 %v586, %v733
    %735 = vdwg.mxu0
    %v736 = vadd.f32 %v661, %v399
    %v737 = vadd.f32 %v663, %v403
    %v738 = vadd.f32 %v732, %v407
    %v739 = vadd.f32 %v734, %v411
    %v740 = vxor.u32 %v736, 2147483648
    %v741 = vmul.f32 %v740, 1.442695
    %v742 = vpow.pop %v741
    %v743 = vadd.f32 %v742, 1.0
    %v744 = vrcp.pop %v743
    %v745 = vmul.f32 1.0, %v744
    %v746 = vxor.u32 %v737, 2147483648
    %v747 = vmul.f32 %v746, 1.442695
    %v748 = vpow.pop %v747
    %v749 = vadd.f32 %v748, 1.0
    %v750 = vrcp.pop %v749
    %v751 = vmul.f32 1.0, %v750
    %v752 = vtanh.pop %v738
    %v753 = vxor.u32 %v739, 2147483648
    %v754 = vmul.f32 %v753, 1.442695
    %v755 = vpow.pop %v754
    %v756 = vadd.f32 %v755, 1.0
    %v757 = vrcp.pop %v756
    %v758 = vmul.f32 1.0, %v757
    %v759 = vmul.f32 %v751, %v441
    %v760 = vmul.f32 %v745, %v752
    %v761 = vadd.f32 %v759, %v760
    %v762 = vtanh.pop %v761
    %v763 = vmul.f32 %v758, %v762
    %v764 = vld [vmem:[%s0 + $0x2] sm:$0x1]
    %v765 = vld [vmem:[%s0 + $0xa] sm:$0x1]
    %766 = vmatprep.subr.mxu0 %v97
    %767 = vmatpush1.msra.mxu0 %v96
    %768 = vmatprep.subr.mxu0 %v93
    %769 = vmatpush1.msra.mxu0 %v92
    %770 = vmatprep.subr.mxu0 %v89
    %771 = vmatpush1.msra.mxu0 %v88
    %772 = vmatprep.subr.mxu0 %v85
    %773 = vmatpush1.msra.mxu0 %v84
    %774 = vmatprep.subr.mxu0 %v81
    %775 = vmatpush1.msra.mxu0 %v80
    %776 = vmatprep.subr.mxu0 %v77
    %777 = vmatpush1.msra.mxu0 %v76
    %778 = vmatprep.subr.mxu0 %v73
    %779 = vmatpush1.msra.mxu0 %v72
    %780 = vmatprep.subr.mxu0 %v69
    %781 = vmatpush1.msra.mxu0 %v68
    %782 = vmatprep.subr.mxu0 %v65
    %783 = vmatpush1.msra.mxu0 %v64
    %784 = vmatprep.subr.mxu0 %v61
    %785 = vmatpush1.msra.mxu0 %v60
    %786 = vmatprep.subr.mxu0 %v57
    %787 = vmatpush1.msra.mxu0 %v56
    %788 = vmatprep.subr.mxu0 %v53
    %789 = vmatpush1.msra.mxu0 %v52
    %790 = vmatprep.subr.mxu0 %v49
    %791 = vmatpush1.msra.mxu0 %v48
    %792 = vmatprep.subr.mxu0 %v45
    %793 = vmatpush1.msra.mxu0 %v44
    %794 = vmatprep.subr.mxu0 %v41
    %795 = vmatpush1.msra.mxu0 %v40
    %796 = vmatprep.subr.mxu0 %v37
    %797 = vmatpush1.msra.mxu0 %v36
    %798 = vmatprep.subr.mxu0 0.0
    %799 = vmatpush2.msra.mxu0 0.0
    %800 = vmatprep.subr.mxu0 0.0
    %801 = vmatpush2.msra.mxu0 0.0
    %802 = vmatprep.subr.mxu0 0.0
    %803 = vmatpush2.msra.mxu0 0.0
    %804 = vmatprep.subr.mxu0 0.0
    %805 = vmatpush2.msra.mxu0 0.0
    %806 = vmatprep.subr.mxu0 0.0
    %807 = vmatpush2.msra.mxu0 0.0
    %808 = vmatprep.subr.mxu0 0.0
    %809 = vmatpush2.msra.mxu0 0.0
    %810 = vmatprep.subr.mxu0 0.0
    %811 = vmatpush2.msra.mxu0 0.0
    %812 = vmatprep.subr.mxu0 0.0
    %813 = vmatpush2.msra.mxu0 0.0
    %814 = vmatprep.subr.mxu0 0.0
    %815 = vmatpush2.msra.mxu0 0.0
    %816 = vmatprep.subr.mxu0 0.0
    %817 = vmatpush2.msra.mxu0 0.0
    %818 = vmatprep.subr.mxu0 0.0
    %819 = vmatpush2.msra.mxu0 0.0
    %820 = vmatprep.subr.mxu0 0.0
    %821 = vmatpush2.msra.mxu0 0.0
    %822 = vmatprep.subr.mxu0 0.0
    %823 = vmatpush2.msra.mxu0 0.0
    %824 = vmatprep.subr.mxu0 0.0
    %825 = vmatpush2.msra.mxu0 0.0
    %826 = vmatprep.subr.mxu0 0.0
    %827 = vmatpush2.msra.mxu0 0.0
    %828 = vmatprep.subr.mxu0 0.0
    %829 = vmatpush2.msra.mxu0 0.0
    %830 = vmatprep.mubr.f32.mxu0 0.0
    %831 = vmatmul.mubr.f32.gmra.mxu0 %v763
    %v832 = vpop.f32.mrf.mxu0
    %v833 = vadd.f32 0.0, %v832
    %v834 = vpop.f32.mrf.mxu0
    %v835 = vadd.f32 0.0, %v834
    %836 = vdwg.mxu0
    %837 = vmatprep.subr.mxu0 %v99
    %838 = vmatpush1.msra.mxu0 %v98
    %839 = vmatprep.subr.mxu0 %v95
    %840 = vmatpush1.msra.mxu0 %v94
    %841 = vmatprep.subr.mxu0 %v91
    %842 = vmatpush1.msra.mxu0 %v90
    %843 = vmatprep.subr.mxu0 %v87
    %844 = vmatpush1.msra.mxu0 %v86
    %845 = vmatprep.subr.mxu0 %v83
    %846 = vmatpush1.msra.mxu0 %v82
    %847 = vmatprep.subr.mxu0 %v79
    %848 = vmatpush1.msra.mxu0 %v78
    %849 = vmatprep.subr.mxu0 %v75
    %850 = vmatpush1.msra.mxu0 %v74
    %851 = vmatprep.subr.mxu0 %v71
    %852 = vmatpush1.msra.mxu0 %v70
    %853 = vmatprep.subr.mxu0 %v67
    %854 = vmatpush1.msra.mxu0 %v66
    %855 = vmatprep.subr.mxu0 %v63
    %856 = vmatpush1.msra.mxu0 %v62
    %857 = vmatprep.subr.mxu0 %v59
    %858 = vmatpush1.msra.mxu0 %v58
    %859 = vmatprep.subr.mxu0 %v55
    %860 = vmatpush1.msra.mxu0 %v54
    %861 = vmatprep.subr.mxu0 %v51
    %862 = vmatpush1.msra.mxu0 %v50
    %863 = vmatprep.subr.mxu0 %v47
    %864 = vmatpush1.msra.mxu0 %v46
    %865 = vmatprep.subr.mxu0 %v43
    %866 = vmatpush1.msra.mxu0 %v42
    %867 = vmatprep.subr.mxu0 %v39
    %868 = vmatpush1.msra.mxu0 %v38
    %869 = vmatprep.subr.mxu0 0.0
    %870 = vmatpush2.msra.mxu0 0.0
    %871 = vmatprep.subr.mxu0 0.0
    %872 = vmatpush2.msra.mxu0 0.0
    %873 = vmatprep.subr.mxu0 0.0
    %874 = vmatpush2.msra.mxu0 0.0
    %875 = vmatprep.subr.mxu0 0.0
    %876 = vmatpush2.msra.mxu0 0.0
    %877 = vmatprep.subr.mxu0 0.0
    %878 = vmatpush2.msra.mxu0 0.0
    %879 = vmatprep.subr.mxu0 0.0
    %880 = vmatpush2.msra.mxu0 0.0
    %881 = vmatprep.subr.mxu0 0.0
    %882 = vmatpush2.msra.mxu0 0.0
    %883 = vmatprep.subr.mxu0 0.0
    %884 = vmatpush2.msra.mxu0 0.0
    %885 = vmatprep.subr.mxu0 0.0
    %886 = vmatpush2.msra.mxu0 0.0
    %887 = vmatprep.subr.mxu0 0.0
    %888 = vmatpush2.msra.mxu0 0.0
    %889 = vmatprep.subr.mxu0 0.0
    %890 = vmatpush2.msra.mxu0 0.0
    %891 = vmatprep.subr.mxu0 0.0
    %892 = vmatpush2.msra.mxu0 0.0
    %893 = vmatprep.subr.mxu0 0.0
    %894 = vmatpush2.msra.mxu0 0.0
    %895 = vmatprep.subr.mxu0 0.0
    %896 = vmatpush2.msra.mxu0 0.0
    %897 = vmatprep.subr.mxu0 0.0
    %898 = vmatpush2.msra.mxu0 0.0
    %899 = vmatprep.subr.mxu0 0.0
    %900 = vmatpush2.msra.mxu0 0.0
    %901 = vmatprep.mubr.f32.mxu0 0.0
    %902 = vmatmul.mubr.f32.gmra.mxu0 %v763
    %v903 = vpop.f32.mrf.mxu0
    %v904 = vadd.f32 0.0, %v903
    %v905 = vpop.f32.mrf.mxu0
    %v906 = vadd.f32 0.0, %v905
    %907 = vdwg.mxu0
    %v910 = vrot.slane %v765, 7
    %v911 = vsel %vm248, %v910, %v764
    %v912 = vsel %vm250, %v911, 0
    %914 = vmatprep.subr.mxu0 0.0
    %915 = vmatpush1.msra.mxu0 0.0
    %916 = vmatprep.subr.mxu0 0.0
    %917 = vmatpush1.msra.mxu0 0.0
    %918 = vmatprep.subr.mxu0 0.0
    %919 = vmatpush1.msra.mxu0 0.0
    %920 = vmatprep.subr.mxu0 0.0
    %921 = vmatpush1.msra.mxu0 0.0
    %922 = vmatprep.subr.mxu0 0.0
    %923 = vmatpush1.msra.mxu0 0.0
    %924 = vmatprep.subr.mxu0 0.0
    %925 = vmatpush1.msra.mxu0 0.0
    %926 = vmatprep.subr.mxu0 0.0
    %927 = vmatpush1.msra.mxu0 0.0
    %928 = vmatprep.subr.mxu0 0.0
    %929 = vmatpush1.msra.mxu0 0.0
    %930 = vmatprep.subr.mxu0 0.0
    %931 = vmatpush1.msra.mxu0 0.0
    %932 = vmatprep.subr.mxu0 0.0
    %933 = vmatpush1.msra.mxu0 0.0
    %934 = vmatprep.subr.mxu0 0.0
    %935 = vmatpush1.msra.mxu0 0.0
    %936 = vmatprep.subr.mxu0 0.0
    %937 = vmatpush1.msra.mxu0 0.0
    %938 = vmatprep.subr.mxu0 0.0
    %939 = vmatpush1.msra.mxu0 0.0
    %940 = vmatprep.subr.mxu0 %v33
    %941 = vmatpush1.msra.mxu0 %v32
    %942 = vmatprep.subr.mxu0 %v29
    %943 = vmatpush1.msra.mxu0 %v28
    %944 = vmatprep.subr.mxu0 %v25
    %945 = vmatpush1.msra.mxu0 %v24
    %946 = vmatprep.subr.mxu0 0.0
    %947 = vmatpush2.msra.mxu0 0.0
    %948 = vmatprep.subr.mxu0 0.0
    %949 = vmatpush2.msra.mxu0 0.0
    %950 = vmatprep.subr.mxu0 0.0
    %951 = vmatpush2.msra.mxu0 0.0
    %952 = vmatprep.subr.mxu0 0.0
    %953 = vmatpush2.msra.mxu0 0.0
    %954 = vmatprep.subr.mxu0 0.0
    %955 = vmatpush2.msra.mxu0 0.0
    %956 = vmatprep.subr.mxu0 0.0
    %957 = vmatpush2.msra.mxu0 0.0
    %958 = vmatprep.subr.mxu0 0.0
    %959 = vmatpush2.msra.mxu0 0.0
    %960 = vmatprep.subr.mxu0 0.0
    %961 = vmatpush2.msra.mxu0 0.0
    %962 = vmatprep.subr.mxu0 0.0
    %963 = vmatpush2.msra.mxu0 0.0
    %964 = vmatprep.subr.mxu0 0.0
    %965 = vmatpush2.msra.mxu0 0.0
    %966 = vmatprep.subr.mxu0 0.0
    %967 = vmatpush2.msra.mxu0 0.0
    %968 = vmatprep.subr.mxu0 0.0
    %969 = vmatpush2.msra.mxu0 0.0
    %970 = vmatprep.subr.mxu0 0.0
    %971 = vmatpush2.msra.mxu0 0.0
    %972 = vmatprep.subr.mxu0 0.0
    %973 = vmatpush2.msra.mxu0 0.0
    %974 = vmatprep.subr.mxu0 0.0
    %975 = vmatpush2.msra.mxu0 0.0
    %976 = vmatprep.subr.mxu0 0.0
    %977 = vmatpush2.msra.mxu0 0.0
    %978 = vmatprep.mubr.f32.mxu0 0.0
    %979 = vmatmul.mubr.f32.gmra.mxu0 %v912
    %v980 = vpop.f32.mrf.mxu0
    %v981 = vadd.f32 %v833, %v980
    %v982 = vpop.f32.mrf.mxu0
    %v983 = vadd.f32 %v835, %v982
    %984 = vdwg.mxu0
    %985 = vmatprep.subr.mxu0 0.0
    %986 = vmatpush1.msra.mxu0 0.0
    %987 = vmatprep.subr.mxu0 0.0
    %988 = vmatpush1.msra.mxu0 0.0
    %989 = vmatprep.subr.mxu0 0.0
    %990 = vmatpush1.msra.mxu0 0.0
    %991 = vmatprep.subr.mxu0 0.0
    %992 = vmatpush1.msra.mxu0 0.0
    %993 = vmatprep.subr.mxu0 0.0
    %994 = vmatpush1.msra.mxu0 0.0
    %995 = vmatprep.subr.mxu0 0.0
    %996 = vmatpush1.msra.mxu0 0.0
    %997 = vmatprep.subr.mxu0 0.0
    %998 = vmatpush1.msra.mxu0 0.0
    %999 = vmatprep.subr.mxu0 0.0
    %1000 = vmatpush1.msra.mxu0 0.0
    %1001 = vmatprep.subr.mxu0 0.0
    %1002 = vmatpush1.msra.mxu0 0.0
    %1003 = vmatprep.subr.mxu0 0.0
    %1004 = vmatpush1.msra.mxu0 0.0
    %1005 = vmatprep.subr.mxu0 0.0
    %1006 = vmatpush1.msra.mxu0 0.0
    %1007 = vmatprep.subr.mxu0 0.0
    %1008 = vmatpush1.msra.mxu0 0.0
    %1009 = vmatprep.subr.mxu0 0.0
    %1010 = vmatpush1.msra.mxu0 0.0
    %1011 = vmatprep.subr.mxu0 %v35
    %1012 = vmatpush1.msra.mxu0 %v34
    %1013 = vmatprep.subr.mxu0 %v31
    %1014 = vmatpush1.msra.mxu0 %v30
    %1015 = vmatprep.subr.mxu0 %v27
    %1016 = vmatpush1.msra.mxu0 %v26
    %1017 = vmatprep.subr.mxu0 0.0
    %1018 = vmatpush2.msra.mxu0 0.0
    %1019 = vmatprep.subr.mxu0 0.0
    %1020 = vmatpush2.msra.mxu0 0.0
    %1021 = vmatprep.subr.mxu0 0.0
    %1022 = vmatpush2.msra.mxu0 0.0
    %1023 = vmatprep.subr.mxu0 0.0
    %1024 = vmatpush2.msra.mxu0 0.0
    %1025 = vmatprep.subr.mxu0 0.0
    %1026 = vmatpush2.msra.mxu0 0.0
    %1027 = vmatprep.subr.mxu0 0.0
    %1028 = vmatpush2.msra.mxu0 0.0
    %1029 = vmatprep.subr.mxu0 0.0
    %1030 = vmatpush2.msra.mxu0 0.0
    %1031 = vmatprep.subr.mxu0 0.0
    %1032 = vmatpush2.msra.mxu0 0.0
    %1033 = vmatprep.subr.mxu0 0.0
    %1034 = vmatpush2.msra.mxu0 0.0
    %1035 = vmatprep.subr.mxu0 0.0
    %1036 = vmatpush2.msra.mxu0 0.0
    %1037 = vmatprep.subr.mxu0 0.0
    %1038 = vmatpush2.msra.mxu0 0.0
    %1039 = vmatprep.subr.mxu0 0.0
    %1040 = vmatpush2.msra.mxu0 0.0
    %1041 = vmatprep.subr.mxu0 0.0
    %1042 = vmatpush2.msra.mxu0 0.0
    %1043 = vmatprep.subr.mxu0 0.0
    %1044 = vmatpush2.msra.mxu0 0.0
    %1045 = vmatprep.subr.mxu0 0.0
    %1046 = vmatpush2.msra.mxu0 0.0
    %1047 = vmatprep.subr.mxu0 0.0
    %1048 = vmatpush2.msra.mxu0 0.0
    %1049 = vmatprep.mubr.f32.mxu0 0.0
    %1050 = vmatmul.mubr.f32.gmra.mxu0 %v912
    %v1051 = vpop.f32.mrf.mxu0
    %v1052 = vadd.f32 %v904, %v1051
    %v1053 = vpop.f32.mrf.mxu0
    %v1054 = vadd.f32 %v906, %v1053
    %1055 = vdwg.mxu0
    %v1056 = vadd.f32 %v981, %v399
    %v1057 = vadd.f32 %v983, %v403
    %v1058 = vadd.f32 %v1052, %v407
    %v1059 = vadd.f32 %v1054, %v411
    %v1060 = vxor.u32 %v1056, 2147483648
    %v1061 = vmul.f32 %v1060, 1.442695
    %v1062 = vpow.pop %v1061
    %v1063 = vadd.f32 %v1062, 1.0
    %v1064 = vrcp.pop %v1063
    %v1065 = vmul.f32 1.0, %v1064
    %v1066 = vxor.u32 %v1057, 2147483648
    %v1067 = vmul.f32 %v1066, 1.442695
    %v1068 = vpow.pop %v1067
    %v1069 = vadd.f32 %v1068, 1.0
    %v1070 = vrcp.pop %v1069
    %v1071 = vmul.f32 1.0, %v1070
    %v1072 = vtanh.pop %v1058
    %v1073 = vxor.u32 %v1059, 2147483648
    %v1074 = vmul.f32 %v1073, 1.442695
    %v1075 = vpow.pop %v1074
    %v1076 = vadd.f32 %v1075, 1.0
    %v1077 = vrcp.pop %v1076
    %v1078 = vmul.f32 1.0, %v1077
    %v1079 = vmul.f32 %v1071, %v761
    %v1080 = vmul.f32 %v1065, %v1072
    %v1081 = vadd.f32 %v1079, %v1080
    %v1082 = vtanh.pop %v1081
    %v1083 = vmul.f32 %v1078, %v1082
    %v1084 = vld [vmem:[%s0 + $0x3] sm:$0x1]
    %v1085 = vld [vmem:[%s0 + $0xb] sm:$0x1]
    %1086 = vmatprep.subr.mxu0 %v97
    %1087 = vmatpush1.msra.mxu0 %v96
    %1088 = vmatprep.subr.mxu0 %v93
    %1089 = vmatpush1.msra.mxu0 %v92
    %1090 = vmatprep.subr.mxu0 %v89
    %1091 = vmatpush1.msra.mxu0 %v88
    %1092 = vmatprep.subr.mxu0 %v85
    %1093 = vmatpush1.msra.mxu0 %v84
    %1094 = vmatprep.subr.mxu0 %v81
    %1095 = vmatpush1.msra.mxu0 %v80
    %1096 = vmatprep.subr.mxu0 %v77
    %1097 = vmatpush1.msra.mxu0 %v76
    %1098 = vmatprep.subr.mxu0 %v73
    %1099 = vmatpush1.msra.mxu0 %v72
    %1100 = vmatprep.subr.mxu0 %v69
    %1101 = vmatpush1.msra.mxu0 %v68
    %1102 = vmatprep.subr.mxu0 %v65
    %1103 = vmatpush1.msra.mxu0 %v64
    %1104 = vmatprep.subr.mxu0 %v61
    %1105 = vmatpush1.msra.mxu0 %v60
    %1106 = vmatprep.subr.mxu0 %v57
    %1107 = vmatpush1.msra.mxu0 %v56
    %1108 = vmatprep.subr.mxu0 %v53
    %1109 = vmatpush1.msra.mxu0 %v52
    %1110 = vmatprep.subr.mxu0 %v49
    %1111 = vmatpush1.msra.mxu0 %v48
    %1112 = vmatprep.subr.mxu0 %v45
    %1113 = vmatpush1.msra.mxu0 %v44
    %1114 = vmatprep.subr.mxu0 %v41
    %1115 = vmatpush1.msra.mxu0 %v40
    %1116 = vmatprep.subr.mxu0 %v37
    %1117 = vmatpush1.msra.mxu0 %v36
    %1118 = vmatprep.subr.mxu0 0.0
    %1119 = vmatpush2.msra.mxu0 0.0
    %1120 = vmatprep.subr.mxu0 0.0
    %1121 = vmatpush2.msra.mxu0 0.0
    %1122 = vmatprep.subr.mxu0 0.0
    %1123 = vmatpush2.msra.mxu0 0.0
    %1124 = vmatprep.subr.mxu0 0.0
    %1125 = vmatpush2.msra.mxu0 0.0
    %1126 = vmatprep.subr.mxu0 0.0
    %1127 = vmatpush2.msra.mxu0 0.0
    %1128 = vmatprep.subr.mxu0 0.0
    %1129 = vmatpush2.msra.mxu0 0.0
    %1130 = vmatprep.subr.mxu0 0.0
    %1131 = vmatpush2.msra.mxu0 0.0
    %1132 = vmatprep.subr.mxu0 0.0
    %1133 = vmatpush2.msra.mxu0 0.0
    %1134 = vmatprep.subr.mxu0 0.0
    %1135 = vmatpush2.msra.mxu0 0.0
    %1136 = vmatprep.subr.mxu0 0.0
    %1137 = vmatpush2.msra.mxu0 0.0
    %1138 = vmatprep.subr.mxu0 0.0
    %1139 = vmatpush2.msra.mxu0 0.0
    %1140 = vmatprep.subr.mxu0 0.0
    %1141 = vmatpush2.msra.mxu0 0.0
    %1142 = vmatprep.subr.mxu0 0.0
    %1143 = vmatpush2.msra.mxu0 0.0
    %1144 = vmatprep.subr.mxu0 0.0
    %1145 = vmatpush2.msra.mxu0 0.0
    %1146 = vmatprep.subr.mxu0 0.0
    %1147 = vmatpush2.msra.mxu0 0.0
    %1148 = vmatprep.subr.mxu0 0.0
    %1149 = vmatpush2.msra.mxu0 0.0
    %1150 = vmatprep.mubr.f32.mxu0 0.0
    %1151 = vmatmul.mubr.f32.gmra.mxu0 %v1083
    %v1152 = vpop.f32.mrf.mxu0
    %v1153 = vadd.f32 0.0, %v1152
    %v1154 = vpop.f32.mrf.mxu0
    %v1155 = vadd.f32 0.0, %v1154
    %1156 = vdwg.mxu0
    %1157 = vmatprep.subr.mxu0 %v99
    %1158 = vmatpush1.msra.mxu0 %v98
    %1159 = vmatprep.subr.mxu0 %v95
    %1160 = vmatpush1.msra.mxu0 %v94
    %1161 = vmatprep.subr.mxu0 %v91
    %1162 = vmatpush1.msra.mxu0 %v90
    %1163 = vmatprep.subr.mxu0 %v87
    %1164 = vmatpush1.msra.mxu0 %v86
    %1165 = vmatprep.subr.mxu0 %v83
    %1166 = vmatpush1.msra.mxu0 %v82
    %1167 = vmatprep.subr.mxu0 %v79
    %1168 = vmatpush1.msra.mxu0 %v78
    %1169 = vmatprep.subr.mxu0 %v75
    %1170 = vmatpush1.msra.mxu0 %v74
    %1171 = vmatprep.subr.mxu0 %v71
    %1172 = vmatpush1.msra.mxu0 %v70
    %1173 = vmatprep.subr.mxu0 %v67
    %1174 = vmatpush1.msra.mxu0 %v66
    %1175 = vmatprep.subr.mxu0 %v63
    %1176 = vmatpush1.msra.mxu0 %v62
    %1177 = vmatprep.subr.mxu0 %v59
    %1178 = vmatpush1.msra.mxu0 %v58
    %1179 = vmatprep.subr.mxu0 %v55
    %1180 = vmatpush1.msra.mxu0 %v54
    %1181 = vmatprep.subr.mxu0 %v51
    %1182 = vmatpush1.msra.mxu0 %v50
    %1183 = vmatprep.subr.mxu0 %v47
    %1184 = vmatpush1.msra.mxu0 %v46
    %1185 = vmatprep.subr.mxu0 %v43
    %1186 = vmatpush1.msra.mxu0 %v42
    %1187 = vmatprep.subr.mxu0 %v39
    %1188 = vmatpush1.msra.mxu0 %v38
    %1189 = vmatprep.subr.mxu0 0.0
    %1190 = vmatpush2.msra.mxu0 0.0
    %1191 = vmatprep.subr.mxu0 0.0
    %1192 = vmatpush2.msra.mxu0 0.0
    %1193 = vmatprep.subr.mxu0 0.0
    %1194 = vmatpush2.msra.mxu0 0.0
    %1195 = vmatprep.subr.mxu0 0.0
    %1196 = vmatpush2.msra.mxu0 0.0
    %1197 = vmatprep.subr.mxu0 0.0
    %1198 = vmatpush2.msra.mxu0 0.0
    %1199 = vmatprep.subr.mxu0 0.0
    %1200 = vmatpush2.msra.mxu0 0.0
    %1201 = vmatprep.subr.mxu0 0.0
    %1202 = vmatpush2.msra.mxu0 0.0
    %1203 = vmatprep.subr.mxu0 0.0
    %1204 = vmatpush2.msra.mxu0 0.0
    %1205 = vmatprep.subr.mxu0 0.0
    %1206 = vmatpush2.msra.mxu0 0.0
    %1207 = vmatprep.subr.mxu0 0.0
    %1208 = vmatpush2.msra.mxu0 0.0
    %1209 = vmatprep.subr.mxu0 0.0
    %1210 = vmatpush2.msra.mxu0 0.0
    %1211 = vmatprep.subr.mxu0 0.0
    %1212 = vmatpush2.msra.mxu0 0.0
    %1213 = vmatprep.subr.mxu0 0.0
    %1214 = vmatpush2.msra.mxu0 0.0
    %1215 = vmatprep.subr.mxu0 0.0
    %1216 = vmatpush2.msra.mxu0 0.0
    %1217 = vmatprep.subr.mxu0 0.0
    %1218 = vmatpush2.msra.mxu0 0.0
    %1219 = vmatprep.subr.mxu0 0.0
    %1220 = vmatpush2.msra.mxu0 0.0
    %1221 = vmatprep.mubr.f32.mxu0 0.0
    %1222 = vmatmul.mubr.f32.gmra.mxu0 %v1083
    %v1223 = vpop.f32.mrf.mxu0
    %v1224 = vadd.f32 0.0, %v1223
    %v1225 = vpop.f32.mrf.mxu0
    %v1226 = vadd.f32 0.0, %v1225
    %1227 = vdwg.mxu0
    %v1230 = vrot.slane %v1085, 7
    %v1231 = vsel %vm248, %v1230, %v1084
    %v1232 = vsel %vm250, %v1231, 0
    %1234 = vmatprep.subr.mxu0 0.0
    %1235 = vmatpush1.msra.mxu0 0.0
    %1236 = vmatprep.subr.mxu0 0.0
    %1237 = vmatpush1.msra.mxu0 0.0
    %1238 = vmatprep.subr.mxu0 0.0
    %1239 = vmatpush1.msra.mxu0 0.0
    %1240 = vmatprep.subr.mxu0 0.0
    %1241 = vmatpush1.msra.mxu0 0.0
    %1242 = vmatprep.subr.mxu0 0.0
    %1243 = vmatpush1.msra.mxu0 0.0
    %1244 = vmatprep.subr.mxu0 0.0
    %1245 = vmatpush1.msra.mxu0 0.0
    %1246 = vmatprep.subr.mxu0 0.0
    %1247 = vmatpush1.msra.mxu0 0.0
    %1248 = vmatprep.subr.mxu0 0.0
    %1249 = vmatpush1.msra.mxu0 0.0
    %1250 = vmatprep.subr.mxu0 0.0
    %1251 = vmatpush1.msra.mxu0 0.0
    %1252 = vmatprep.subr.mxu0 0.0
    %1253 = vmatpush1.msra.mxu0 0.0
    %1254 = vmatprep.subr.mxu0 0.0
    %1255 = vmatpush1.msra.mxu0 0.0
    %1256 = vmatprep.subr.mxu0 0.0
    %1257 = vmatpush1.msra.mxu0 0.0
    %1258 = vmatprep.subr.mxu0 0.0
    %1259 = vmatpush1.msra.mxu0 0.0
    %1260 = vmatprep.subr.mxu0 %v33
    %1261 = vmatpush1.msra.mxu0 %v32
    %1262 = vmatprep.subr.mxu0 %v29
    %1263 = vmatpush1.msra.mxu0 %v28
    %1264 = vmatprep.subr.mxu0 %v25
    %1265 = vmatpush1.msra.mxu0 %v24
    %1266 = vmatprep.subr.mxu0 0.0
    %1267 = vmatpush2.msra.mxu0 0.0
    %1268 = vmatprep.subr.mxu0 0.0
    %1269 = vmatpush2.msra.mxu0 0.0
    %1270 = vmatprep.subr.mxu0 0.0
    %1271 = vmatpush2.msra.mxu0 0.0
    %1272 = vmatprep.subr.mxu0 0.0
    %1273 = vmatpush2.msra.mxu0 0.0
    %1274 = vmatprep.subr.mxu0 0.0
    %1275 = vmatpush2.msra.mxu0 0.0
    %1276 = vmatprep.subr.mxu0 0.0
    %1277 = vmatpush2.msra.mxu0 0.0
    %1278 = vmatprep.subr.mxu0 0.0
    %1279 = vmatpush2.msra.mxu0 0.0
    %1280 = vmatprep.subr.mxu0 0.0
    %1281 = vmatpush2.msra.mxu0 0.0
    %1282 = vmatprep.subr.mxu0 0.0
    %1283 = vmatpush2.msra.mxu0 0.0
    %1284 = vmatprep.subr.mxu0 0.0
    %1285 = vmatpush2.msra.mxu0 0.0
    %1286 = vmatprep.subr.mxu0 0.0
    %1287 = vmatpush2.msra.mxu0 0.0
    %1288 = vmatprep.subr.mxu0 0.0
    %1289 = vmatpush2.msra.mxu0 0.0
    %1290 = vmatprep.subr.mxu0 0.0
    %1291 = vmatpush2.msra.mxu0 0.0
    %1292 = vmatprep.subr.mxu0 0.0
    %1293 = vmatpush2.msra.mxu0 0.0
    %1294 = vmatprep.subr.mxu0 0.0
    %1295 = vmatpush2.msra.mxu0 0.0
    %1296 = vmatprep.subr.mxu0 0.0
    %1297 = vmatpush2.msra.mxu0 0.0
    %1298 = vmatprep.mubr.f32.mxu0 0.0
    %1299 = vmatmul.mubr.f32.gmra.mxu0 %v1232
    %v1300 = vpop.f32.mrf.mxu0
    %v1301 = vadd.f32 %v1153, %v1300
    %v1302 = vpop.f32.mrf.mxu0
    %v1303 = vadd.f32 %v1155, %v1302
    %1304 = vdwg.mxu0
    %1305 = vmatprep.subr.mxu0 0.0
    %1306 = vmatpush1.msra.mxu0 0.0
    %1307 = vmatprep.subr.mxu0 0.0
    %1308 = vmatpush1.msra.mxu0 0.0
    %1309 = vmatprep.subr.mxu0 0.0
    %1310 = vmatpush1.msra.mxu0 0.0
    %1311 = vmatprep.subr.mxu0 0.0
    %1312 = vmatpush1.msra.mxu0 0.0
    %1313 = vmatprep.subr.mxu0 0.0
    %1314 = vmatpush1.msra.mxu0 0.0
    %1315 = vmatprep.subr.mxu0 0.0
    %1316 = vmatpush1.msra.mxu0 0.0
    %1317 = vmatprep.subr.mxu0 0.0
    %1318 = vmatpush1.msra.mxu0 0.0
    %1319 = vmatprep.subr.mxu0 0.0
    %1320 = vmatpush1.msra.mxu0 0.0
    %1321 = vmatprep.subr.mxu0 0.0
    %1322 = vmatpush1.msra.mxu0 0.0
    %1323 = vmatprep.subr.mxu0 0.0
    %1324 = vmatpush1.msra.mxu0 0.0
    %1325 = vmatprep.subr.mxu0 0.0
    %1326 = vmatpush1.msra.mxu0 0.0
    %1327 = vmatprep.subr.mxu0 0.0
    %1328 = vmatpush1.msra.mxu0 0.0
    %1329 = vmatprep.subr.mxu0 0.0
    %1330 = vmatpush1.msra.mxu0 0.0
    %1331 = vmatprep.subr.mxu0 %v35
    %1332 = vmatpush1.msra.mxu0 %v34
    %1333 = vmatprep.subr.mxu0 %v31
    %1334 = vmatpush1.msra.mxu0 %v30
    %1335 = vmatprep.subr.mxu0 %v27
    %1336 = vmatpush1.msra.mxu0 %v26
    %1337 = vmatprep.subr.mxu0 0.0
    %1338 = vmatpush2.msra.mxu0 0.0
    %1339 = vmatprep.subr.mxu0 0.0
    %1340 = vmatpush2.msra.mxu0 0.0
    %1341 = vmatprep.subr.mxu0 0.0
    %1342 = vmatpush2.msra.mxu0 0.0
    %1343 = vmatprep.subr.mxu0 0.0
    %1344 = vmatpush2.msra.mxu0 0.0
    %1345 = vmatprep.subr.mxu0 0.0
    %1346 = vmatpush2.msra.mxu0 0.0
    %1347 = vmatprep.subr.mxu0 0.0
    %1348 = vmatpush2.msra.mxu0 0.0
    %1349 = vmatprep.subr.mxu0 0.0
    %1350 = vmatpush2.msra.mxu0 0.0
    %1351 = vmatprep.subr.mxu0 0.0
    %1352 = vmatpush2.msra.mxu0 0.0
    %1353 = vmatprep.subr.mxu0 0.0
    %1354 = vmatpush2.msra.mxu0 0.0
    %1355 = vmatprep.subr.mxu0 0.0
    %1356 = vmatpush2.msra.mxu0 0.0
    %1357 = vmatprep.subr.mxu0 0.0
    %1358 = vmatpush2.msra.mxu0 0.0
    %1359 = vmatprep.subr.mxu0 0.0
    %1360 = vmatpush2.msra.mxu0 0.0
    %1361 = vmatprep.subr.mxu0 0.0
    %1362 = vmatpush2.msra.mxu0 0.0
    %1363 = vmatprep.subr.mxu0 0.0
    %1364 = vmatpush2.msra.mxu0 0.0
    %1365 = vmatprep.subr.mxu0 0.0
    %1366 = vmatpush2.msra.mxu0 0.0
    %1367 = vmatprep.subr.mxu0 0.0
    %1368 = vmatpush2.msra.mxu0 0.0
    %1369 = vmatprep.mubr.f32.mxu0 0.0
    %1370 = vmatmul.mubr.f32.gmra.mxu0 %v1232
    %v1371 = vpop.f32.mrf.mxu0
    %v1372 = vadd.f32 %v1224, %v1371
    %v1373 = vpop.f32.mrf.mxu0
    %v1374 = vadd.f32 %v1226, %v1373
    %1375 = vdwg.mxu0
    %v1376 = vadd.f32 %v1301, %v399
    %v1377 = vadd.f32 %v1303, %v403
    %v1378 = vadd.f32 %v1372, %v407
    %v1379 = vadd.f32 %v1374, %v411
    %v1380 = vxor.u32 %v1376, 2147483648
    %v1381 = vmul.f32 %v1380, 1.442695
    %v1382 = vpow.pop %v1381
    %v1383 = vadd.f32 %v1382, 1.0
    %v1384 = vrcp.pop %v1383
    %v1385 = vmul.f32 1.0, %v1384
    %v1386 = vxor.u32 %v1377, 2147483648
    %v1387 = vmul.f32 %v1386, 1.442695
    %v1388 = vpow.pop %v1387
    %v1389 = vadd.f32 %v1388, 1.0
    %v1390 = vrcp.pop %v1389
    %v1391 = vmul.f32 1.0, %v1390
    %v1392 = vtanh.pop %v1378
    %v1393 = vxor.u32 %v1379, 2147483648
    %v1394 = vmul.f32 %v1393, 1.442695
    %v1395 = vpow.pop %v1394
    %v1396 = vadd.f32 %v1395, 1.0
    %v1397 = vrcp.pop %v1396
    %v1398 = vmul.f32 1.0, %v1397
    %v1399 = vmul.f32 %v1391, %v1081
    %v1400 = vmul.f32 %v1385, %v1392
    %v1401 = vadd.f32 %v1399, %v1400
    %v1402 = vtanh.pop %v1401
    %v1403 = vmul.f32 %v1398, %v1402
    %v1404 = vld [vmem:[%s0 + $0x4] sm:$0x1]
    %v1405 = vld [vmem:[%s0 + $0xc] sm:$0x1]
    %1406 = vmatprep.subr.mxu0 %v97
    %1407 = vmatpush1.msra.mxu0 %v96
    %1408 = vmatprep.subr.mxu0 %v93
    %1409 = vmatpush1.msra.mxu0 %v92
    %1410 = vmatprep.subr.mxu0 %v89
    %1411 = vmatpush1.msra.mxu0 %v88
    %1412 = vmatprep.subr.mxu0 %v85
    %1413 = vmatpush1.msra.mxu0 %v84
    %1414 = vmatprep.subr.mxu0 %v81
    %1415 = vmatpush1.msra.mxu0 %v80
    %1416 = vmatprep.subr.mxu0 %v77
    %1417 = vmatpush1.msra.mxu0 %v76
    %1418 = vmatprep.subr.mxu0 %v73
    %1419 = vmatpush1.msra.mxu0 %v72
    %1420 = vmatprep.subr.mxu0 %v69
    %1421 = vmatpush1.msra.mxu0 %v68
    %1422 = vmatprep.subr.mxu0 %v65
    %1423 = vmatpush1.msra.mxu0 %v64
    %1424 = vmatprep.subr.mxu0 %v61
    %1425 = vmatpush1.msra.mxu0 %v60
    %1426 = vmatprep.subr.mxu0 %v57
    %1427 = vmatpush1.msra.mxu0 %v56
    %1428 = vmatprep.subr.mxu0 %v53
    %1429 = vmatpush1.msra.mxu0 %v52
    %1430 = vmatprep.subr.mxu0 %v49
    %1431 = vmatpush1.msra.mxu0 %v48
    %1432 = vmatprep.subr.mxu0 %v45
    %1433 = vmatpush1.msra.mxu0 %v44
    %1434 = vmatprep.subr.mxu0 %v41
    %1435 = vmatpush1.msra.mxu0 %v40
    %1436 = vmatprep.subr.mxu0 %v37
    %1437 = vmatpush1.msra.mxu0 %v36
    %1438 = vmatprep.subr.mxu0 0.0
    %1439 = vmatpush2.msra.mxu0 0.0
    %1440 = vmatprep.subr.mxu0 0.0
    %1441 = vmatpush2.msra.mxu0 0.0
    %1442 = vmatprep.subr.mxu0 0.0
    %1443 = vmatpush2.msra.mxu0 0.0
    %1444 = vmatprep.subr.mxu0 0.0
    %1445 = vmatpush2.msra.mxu0 0.0
    %1446 = vmatprep.subr.mxu0 0.0
    %1447 = vmatpush2.msra.mxu0 0.0
    %1448 = vmatprep.subr.mxu0 0.0
    %1449 = vmatpush2.msra.mxu0 0.0
    %1450 = vmatprep.subr.mxu0 0.0
    %1451 = vmatpush2.msra.mxu0 0.0
    %1452 = vmatprep.subr.mxu0 0.0
    %1453 = vmatpush2.msra.mxu0 0.0
    %1454 = vmatprep.subr.mxu0 0.0
    %1455 = vmatpush2.msra.mxu0 0.0
    %1456 = vmatprep.subr.mxu0 0.0
    %1457 = vmatpush2.msra.mxu0 0.0
    %1458 = vmatprep.subr.mxu0 0.0
    %1459 = vmatpush2.msra.mxu0 0.0
    %1460 = vmatprep.subr.mxu0 0.0
    %1461 = vmatpush2.msra.mxu0 0.0
    %1462 = vmatprep.subr.mxu0 0.0
    %1463 = vmatpush2.msra.mxu0 0.0
    %1464 = vmatprep.subr.mxu0 0.0
    %1465 = vmatpush2.msra.mxu0 0.0
    %1466 = vmatprep.subr.mxu0 0.0
    %1467 = vmatpush2.msra.mxu0 0.0
    %1468 = vmatprep.subr.mxu0 0.0
    %1469 = vmatpush2.msra.mxu0 0.0
    %1470 = vmatprep.mubr.f32.mxu0 0.0
    %1471 = vmatmul.mubr.f32.gmra.mxu0 %v1403
    %v1472 = vpop.f32.mrf.mxu0
    %v1473 = vadd.f32 0.0, %v1472
    %v1474 = vpop.f32.mrf.mxu0
    %v1475 = vadd.f32 0.0, %v1474
    %1476 = vdwg.mxu0
    %1477 = vmatprep.subr.mxu0 %v99
    %1478 = vmatpush1.msra.mxu0 %v98
    %1479 = vmatprep.subr.mxu0 %v95
    %1480 = vmatpush1.msra.mxu0 %v94
    %1481 = vmatprep.subr.mxu0 %v91
    %1482 = vmatpush1.msra.mxu0 %v90
    %1483 = vmatprep.subr.mxu0 %v87
    %1484 = vmatpush1.msra.mxu0 %v86
    %1485 = vmatprep.subr.mxu0 %v83
    %1486 = vmatpush1.msra.mxu0 %v82
    %1487 = vmatprep.subr.mxu0 %v79
    %1488 = vmatpush1.msra.mxu0 %v78
    %1489 = vmatprep.subr.mxu0 %v75
    %1490 = vmatpush1.msra.mxu0 %v74
    %1491 = vmatprep.subr.mxu0 %v71
    %1492 = vmatpush1.msra.mxu0 %v70
    %1493 = vmatprep.subr.mxu0 %v67
    %1494 = vmatpush1.msra.mxu0 %v66
    %1495 = vmatprep.subr.mxu0 %v63
    %1496 = vmatpush1.msra.mxu0 %v62
    %1497 = vmatprep.subr.mxu0 %v59
    %1498 = vmatpush1.msra.mxu0 %v58
    %1499 = vmatprep.subr.mxu0 %v55
    %1500 = vmatpush1.msra.mxu0 %v54
    %1501 = vmatprep.subr.mxu0 %v51
    %1502 = vmatpush1.msra.mxu0 %v50
    %1503 = vmatprep.subr.mxu0 %v47
    %1504 = vmatpush1.msra.mxu0 %v46
    %1505 = vmatprep.subr.mxu0 %v43
    %1506 = vmatpush1.msra.mxu0 %v42
    %1507 = vmatprep.subr.mxu0 %v39
    %1508 = vmatpush1.msra.mxu0 %v38
    %1509 = vmatprep.subr.mxu0 0.0
    %1510 = vmatpush2.msra.mxu0 0.0
    %1511 = vmatprep.subr.mxu0 0.0
    %1512 = vmatpush2.msra.mxu0 0.0
    %1513 = vmatprep.subr.mxu0 0.0
    %1514 = vmatpush2.msra.mxu0 0.0
    %1515 = vmatprep.subr.mxu0 0.0
    %1516 = vmatpush2.msra.mxu0 0.0
    %1517 = vmatprep.subr.mxu0 0.0
    %1518 = vmatpush2.msra.mxu0 0.0
    %1519 = vmatprep.subr.mxu0 0.0
    %1520 = vmatpush2.msra.mxu0 0.0
    %1521 = vmatprep.subr.mxu0 0.0
    %1522 = vmatpush2.msra.mxu0 0.0
    %1523 = vmatprep.subr.mxu0 0.0
    %1524 = vmatpush2.msra.mxu0 0.0
    %1525 = vmatprep.subr.mxu0 0.0
    %1526 = vmatpush2.msra.mxu0 0.0
    %1527 = vmatprep.subr.mxu0 0.0
    %1528 = vmatpush2.msra.mxu0 0.0
    %1529 = vmatprep.subr.mxu0 0.0
    %1530 = vmatpush2.msra.mxu0 0.0
    %1531 = vmatprep.subr.mxu0 0.0
    %1532 = vmatpush2.msra.mxu0 0.0
    %1533 = vmatprep.subr.mxu0 0.0
    %1534 = vmatpush2.msra.mxu0 0.0
    %1535 = vmatprep.subr.mxu0 0.0
    %1536 = vmatpush2.msra.mxu0 0.0
    %1537 = vmatprep.subr.mxu0 0.0
    %1538 = vmatpush2.msra.mxu0 0.0
    %1539 = vmatprep.subr.mxu0 0.0
    %1540 = vmatpush2.msra.mxu0 0.0
    %1541 = vmatprep.mubr.f32.mxu0 0.0
    %1542 = vmatmul.mubr.f32.gmra.mxu0 %v1403
    %v1543 = vpop.f32.mrf.mxu0
    %v1544 = vadd.f32 0.0, %v1543
    %v1545 = vpop.f32.mrf.mxu0
    %v1546 = vadd.f32 0.0, %v1545
    %1547 = vdwg.mxu0
    %v1550 = vrot.slane %v1405, 7
    %v1551 = vsel %vm248, %v1550, %v1404
    %v1552 = vsel %vm250, %v1551, 0
    %1554 = vmatprep.subr.mxu0 0.0
    %1555 = vmatpush1.msra.mxu0 0.0
    %1556 = vmatprep.subr.mxu0 0.0
    %1557 = vmatpush1.msra.mxu0 0.0
    %1558 = vmatprep.subr.mxu0 0.0
    %1559 = vmatpush1.msra.mxu0 0.0
    %1560 = vmatprep.subr.mxu0 0.0
    %1561 = vmatpush1.msra.mxu0 0.0
    %1562 = vmatprep.subr.mxu0 0.0
    %1563 = vmatpush1.msra.mxu0 0.0
    %1564 = vmatprep.subr.mxu0 0.0
    %1565 = vmatpush1.msra.mxu0 0.0
    %1566 = vmatprep.subr.mxu0 0.0
    %1567 = vmatpush1.msra.mxu0 0.0
    %1568 = vmatprep.subr.mxu0 0.0
    %1569 = vmatpush1.msra.mxu0 0.0
    %1570 = vmatprep.subr.mxu0 0.0
    %1571 = vmatpush1.msra.mxu0 0.0
    %1572 = vmatprep.subr.mxu0 0.0
    %1573 = vmatpush1.msra.mxu0 0.0
    %1574 = vmatprep.subr.mxu0 0.0
    %1575 = vmatpush1.msra.mxu0 0.0
    %1576 = vmatprep.subr.mxu0 0.0
    %1577 = vmatpush1.msra.mxu0 0.0
    %1578 = vmatprep.subr.mxu0 0.0
    %1579 = vmatpush1.msra.mxu0 0.0
    %1580 = vmatprep.subr.mxu0 %v33
    %1581 = vmatpush1.msra.mxu0 %v32
    %1582 = vmatprep.subr.mxu0 %v29
    %1583 = vmatpush1.msra.mxu0 %v28
    %1584 = vmatprep.subr.mxu0 %v25
    %1585 = vmatpush1.msra.mxu0 %v24
    %1586 = vmatprep.subr.mxu0 0.0
    %1587 = vmatpush2.msra.mxu0 0.0
    %1588 = vmatprep.subr.mxu0 0.0
    %1589 = vmatpush2.msra.mxu0 0.0
    %1590 = vmatprep.subr.mxu0 0.0
    %1591 = vmatpush2.msra.mxu0 0.0
    %1592 = vmatprep.subr.mxu0 0.0
    %1593 = vmatpush2.msra.mxu0 0.0
    %1594 = vmatprep.subr.mxu0 0.0
    %1595 = vmatpush2.msra.mxu0 0.0
    %1596 = vmatprep.subr.mxu0 0.0
    %1597 = vmatpush2.msra.mxu0 0.0
    %1598 = vmatprep.subr.mxu0 0.0
    %1599 = vmatpush2.msra.mxu0 0.0
    %1600 = vmatprep.subr.mxu0 0.0
    %1601 = vmatpush2.msra.mxu0 0.0
    %1602 = vmatprep.subr.mxu0 0.0
    %1603 = vmatpush2.msra.mxu0 0.0
    %1604 = vmatprep.subr.mxu0 0.0
    %1605 = vmatpush2.msra.mxu0 0.0
    %1606 = vmatprep.subr.mxu0 0.0
    %1607 = vmatpush2.msra.mxu0 0.0
    %1608 = vmatprep.subr.mxu0 0.0
    %1609 = vmatpush2.msra.mxu0 0.0
    %1610 = vmatprep.subr.mxu0 0.0
    %1611 = vmatpush2.msra.mxu0 0.0
    %1612 = vmatprep.subr.mxu0 0.0
    %1613 = vmatpush2.msra.mxu0 0.0
    %1614 = vmatprep.subr.mxu0 0.0
    %1615 = vmatpush2.msra.mxu0 0.0
    %1616 = vmatprep.subr.mxu0 0.0
    %1617 = vmatpush2.msra.mxu0 0.0
    %1618 = vmatprep.mubr.f32.mxu0 0.0
    %1619 = vmatmul.mubr.f32.gmra.mxu0 %v1552
    %v1620 = vpop.f32.mrf.mxu0
    %v1621 = vadd.f32 %v1473, %v1620
    %v1622 = vpop.f32.mrf.mxu0
    %v1623 = vadd.f32 %v1475, %v1622
    %1624 = vdwg.mxu0
    %1625 = vmatprep.subr.mxu0 0.0
    %1626 = vmatpush1.msra.mxu0 0.0
    %1627 = vmatprep.subr.mxu0 0.0
    %1628 = vmatpush1.msra.mxu0 0.0
    %1629 = vmatprep.subr.mxu0 0.0
    %1630 = vmatpush1.msra.mxu0 0.0
    %1631 = vmatprep.subr.mxu0 0.0
    %1632 = vmatpush1.msra.mxu0 0.0
    %1633 = vmatprep.subr.mxu0 0.0
    %1634 = vmatpush1.msra.mxu0 0.0
    %1635 = vmatprep.subr.mxu0 0.0
    %1636 = vmatpush1.msra.mxu0 0.0
    %1637 = vmatprep.subr.mxu0 0.0
    %1638 = vmatpush1.msra.mxu0 0.0
    %1639 = vmatprep.subr.mxu0 0.0
    %1640 = vmatpush1.msra.mxu0 0.0
    %1641 = vmatprep.subr.mxu0 0.0
    %1642 = vmatpush1.msra.mxu0 0.0
    %1643 = vmatprep.subr.mxu0 0.0
    %1644 = vmatpush1.msra.mxu0 0.0
    %1645 = vmatprep.subr.mxu0 0.0
    %1646 = vmatpush1.msra.mxu0 0.0
    %1647 = vmatprep.subr.mxu0 0.0
    %1648 = vmatpush1.msra.mxu0 0.0
    %1649 = vmatprep.subr.mxu0 0.0
    %1650 = vmatpush1.msra.mxu0 0.0
    %1651 = vmatprep.subr.mxu0 %v35
    %1652 = vmatpush1.msra.mxu0 %v34
    %1653 = vmatprep.subr.mxu0 %v31
    %1654 = vmatpush1.msra.mxu0 %v30
    %1655 = vmatprep.subr.mxu0 %v27
    %1656 = vmatpush1.msra.mxu0 %v26
    %1657 = vmatprep.subr.mxu0 0.0
    %1658 = vmatpush2.msra.mxu0 0.0
    %1659 = vmatprep.subr.mxu0 0.0
    %1660 = vmatpush2.msra.mxu0 0.0
    %1661 = vmatprep.subr.mxu0 0.0
    %1662 = vmatpush2.msra.mxu0 0.0
    %1663 = vmatprep.subr.mxu0 0.0
    %1664 = vmatpush2.msra.mxu0 0.0
    %1665 = vmatprep.subr.mxu0 0.0
    %1666 = vmatpush2.msra.mxu0 0.0
    %1667 = vmatprep.subr.mxu0 0.0
    %1668 = vmatpush2.msra.mxu0 0.0
    %1669 = vmatprep.subr.mxu0 0.0
    %1670 = vmatpush2.msra.mxu0 0.0
    %1671 = vmatprep.subr.mxu0 0.0
    %1672 = vmatpush2.msra.mxu0 0.0
    %1673 = vmatprep.subr.mxu0 0.0
    %1674 = vmatpush2.msra.mxu0 0.0
    %1675 = vmatprep.subr.mxu0 0.0
    %1676 = vmatpush2.msra.mxu0 0.0
    %1677 = vmatprep.subr.mxu0 0.0
    %1678 = vmatpush2.msra.mxu0 0.0
    %1679 = vmatprep.subr.mxu0 0.0
    %1680 = vmatpush2.msra.mxu0 0.0
    %1681 = vmatprep.subr.mxu0 0.0
    %1682 = vmatpush2.msra.mxu0 0.0
    %1683 = vmatprep.subr.mxu0 0.0
    %1684 = vmatpush2.msra.mxu0 0.0
    %1685 = vmatprep.subr.mxu0 0.0
    %1686 = vmatpush2.msra.mxu0 0.0
    %1687 = vmatprep.subr.mxu0 0.0
    %1688 = vmatpush2.msra.mxu0 0.0
    %1689 = vmatprep.mubr.f32.mxu0 0.0
    %1690 = vmatmul.mubr.f32.gmra.mxu0 %v1552
    %v1691 = vpop.f32.mrf.mxu0
    %v1692 = vadd.f32 %v1544, %v1691
    %v1693 = vpop.f32.mrf.mxu0
    %v1694 = vadd.f32 %v1546, %v1693
    %1695 = vdwg.mxu0
    %v1696 = vadd.f32 %v1621, %v399
    %v1697 = vadd.f32 %v1623, %v403
    %v1698 = vadd.f32 %v1692, %v407
    %v1699 = vadd.f32 %v1694, %v411
    %v1700 = vxor.u32 %v1696, 2147483648
    %v1701 = vmul.f32 %v1700, 1.442695
    %v1702 = vpow.pop %v1701
    %v1703 = vadd.f32 %v1702, 1.0
    %v1704 = vrcp.pop %v1703
    %v1705 = vmul.f32 1.0, %v1704
    %v1706 = vxor.u32 %v1697, 2147483648
    %v1707 = vmul.f32 %v1706, 1.442695
    %v1708 = vpow.pop %v1707
    %v1709 = vadd.f32 %v1708, 1.0
    %v1710 = vrcp.pop %v1709
    %v1711 = vmul.f32 1.0, %v1710
    %v1712 = vtanh.pop %v1698
    %v1713 = vxor.u32 %v1699, 2147483648
    %v1714 = vmul.f32 %v1713, 1.442695
    %v1715 = vpow.pop %v1714
    %v1716 = vadd.f32 %v1715, 1.0
    %v1717 = vrcp.pop %v1716
    %v1718 = vmul.f32 1.0, %v1717
    %v1719 = vmul.f32 %v1711, %v1401
    %v1720 = vmul.f32 %v1705, %v1712
    %v1721 = vadd.f32 %v1719, %v1720
    %v1722 = vtanh.pop %v1721
    %v1723 = vmul.f32 %v1718, %v1722
    %v1724 = vld [vmem:[%s0 + $0x5] sm:$0x1]
    %v1725 = vld [vmem:[%s0 + $0xd] sm:$0x1]
    %1726 = vmatprep.subr.mxu0 %v97
    %1727 = vmatpush1.msra.mxu0 %v96
    %1728 = vmatprep.subr.mxu0 %v93
    %1729 = vmatpush1.msra.mxu0 %v92
    %1730 = vmatprep.subr.mxu0 %v89
    %1731 = vmatpush1.msra.mxu0 %v88
    %1732 = vmatprep.subr.mxu0 %v85
    %1733 = vmatpush1.msra.mxu0 %v84
    %1734 = vmatprep.subr.mxu0 %v81
    %1735 = vmatpush1.msra.mxu0 %v80
    %1736 = vmatprep.subr.mxu0 %v77
    %1737 = vmatpush1.msra.mxu0 %v76
    %1738 = vmatprep.subr.mxu0 %v73
    %1739 = vmatpush1.msra.mxu0 %v72
    %1740 = vmatprep.subr.mxu0 %v69
    %1741 = vmatpush1.msra.mxu0 %v68
    %1742 = vmatprep.subr.mxu0 %v65
    %1743 = vmatpush1.msra.mxu0 %v64
    %1744 = vmatprep.subr.mxu0 %v61
    %1745 = vmatpush1.msra.mxu0 %v60
    %1746 = vmatprep.subr.mxu0 %v57
    %1747 = vmatpush1.msra.mxu0 %v56
    %1748 = vmatprep.subr.mxu0 %v53
    %1749 = vmatpush1.msra.mxu0 %v52
    %1750 = vmatprep.subr.mxu0 %v49
    %1751 = vmatpush1.msra.mxu0 %v48
    %1752 = vmatprep.subr.mxu0 %v45
    %1753 = vmatpush1.msra.mxu0 %v44
    %1754 = vmatprep.subr.mxu0 %v41
    %1755 = vmatpush1.msra.mxu0 %v40
    %1756 = vmatprep.subr.mxu0 %v37
    %1757 = vmatpush1.msra.mxu0 %v36
    %1758 = vmatprep.subr.mxu0 0.0
    %1759 = vmatpush2.msra.mxu0 0.0
    %1760 = vmatprep.subr.mxu0 0.0
    %1761 = vmatpush2.msra.mxu0 0.0
    %1762 = vmatprep.subr.mxu0 0.0
    %1763 = vmatpush2.msra.mxu0 0.0
    %1764 = vmatprep.subr.mxu0 0.0
    %1765 = vmatpush2.msra.mxu0 0.0
    %1766 = vmatprep.subr.mxu0 0.0
    %1767 = vmatpush2.msra.mxu0 0.0
    %1768 = vmatprep.subr.mxu0 0.0
    %1769 = vmatpush2.msra.mxu0 0.0
    %1770 = vmatprep.subr.mxu0 0.0
    %1771 = vmatpush2.msra.mxu0 0.0
    %1772 = vmatprep.subr.mxu0 0.0
    %1773 = vmatpush2.msra.mxu0 0.0
    %1774 = vmatprep.subr.mxu0 0.0
    %1775 = vmatpush2.msra.mxu0 0.0
    %1776 = vmatprep.subr.mxu0 0.0
    %1777 = vmatpush2.msra.mxu0 0.0
    %1778 = vmatprep.subr.mxu0 0.0
    %1779 = vmatpush2.msra.mxu0 0.0
    %1780 = vmatprep.subr.mxu0 0.0
    %1781 = vmatpush2.msra.mxu0 0.0
    %1782 = vmatprep.subr.mxu0 0.0
    %1783 = vmatpush2.msra.mxu0 0.0
    %1784 = vmatprep.subr.mxu0 0.0
    %1785 = vmatpush2.msra.mxu0 0.0
    %1786 = vmatprep.subr.mxu0 0.0
    %1787 = vmatpush2.msra.mxu0 0.0
    %1788 = vmatprep.subr.mxu0 0.0
    %1789 = vmatpush2.msra.mxu0 0.0
    %1790 = vmatprep.mubr.f32.mxu0 0.0
    %1791 = vmatmul.mubr.f32.gmra.mxu0 %v1723
    %v1792 = vpop.f32.mrf.mxu0
    %v1793 = vadd.f32 0.0, %v1792
    %v1794 = vpop.f32.mrf.mxu0
    %v1795 = vadd.f32 0.0, %v1794
    %1796 = vdwg.mxu0
    %1797 = vmatprep.subr.mxu0 %v99
    %1798 = vmatpush1.msra.mxu0 %v98
    %1799 = vmatprep.subr.mxu0 %v95
    %1800 = vmatpush1.msra.mxu0 %v94
    %1801 = vmatprep.subr.mxu0 %v91
    %1802 = vmatpush1.msra.mxu0 %v90
    %1803 = vmatprep.subr.mxu0 %v87
    %1804 = vmatpush1.msra.mxu0 %v86
    %1805 = vmatprep.subr.mxu0 %v83
    %1806 = vmatpush1.msra.mxu0 %v82
    %1807 = vmatprep.subr.mxu0 %v79
    %1808 = vmatpush1.msra.mxu0 %v78
    %1809 = vmatprep.subr.mxu0 %v75
    %1810 = vmatpush1.msra.mxu0 %v74
    %1811 = vmatprep.subr.mxu0 %v71
    %1812 = vmatpush1.msra.mxu0 %v70
    %1813 = vmatprep.subr.mxu0 %v67
    %1814 = vmatpush1.msra.mxu0 %v66
    %1815 = vmatprep.subr.mxu0 %v63
    %1816 = vmatpush1.msra.mxu0 %v62
    %1817 = vmatprep.subr.mxu0 %v59
    %1818 = vmatpush1.msra.mxu0 %v58
    %1819 = vmatprep.subr.mxu0 %v55
    %1820 = vmatpush1.msra.mxu0 %v54
    %1821 = vmatprep.subr.mxu0 %v51
    %1822 = vmatpush1.msra.mxu0 %v50
    %1823 = vmatprep.subr.mxu0 %v47
    %1824 = vmatpush1.msra.mxu0 %v46
    %1825 = vmatprep.subr.mxu0 %v43
    %1826 = vmatpush1.msra.mxu0 %v42
    %1827 = vmatprep.subr.mxu0 %v39
    %1828 = vmatpush1.msra.mxu0 %v38
    %1829 = vmatprep.subr.mxu0 0.0
    %1830 = vmatpush2.msra.mxu0 0.0
    %1831 = vmatprep.subr.mxu0 0.0
    %1832 = vmatpush2.msra.mxu0 0.0
    %1833 = vmatprep.subr.mxu0 0.0
    %1834 = vmatpush2.msra.mxu0 0.0
    %1835 = vmatprep.subr.mxu0 0.0
    %1836 = vmatpush2.msra.mxu0 0.0
    %1837 = vmatprep.subr.mxu0 0.0
    %1838 = vmatpush2.msra.mxu0 0.0
    %1839 = vmatprep.subr.mxu0 0.0
    %1840 = vmatpush2.msra.mxu0 0.0
    %1841 = vmatprep.subr.mxu0 0.0
    %1842 = vmatpush2.msra.mxu0 0.0
    %1843 = vmatprep.subr.mxu0 0.0
    %1844 = vmatpush2.msra.mxu0 0.0
    %1845 = vmatprep.subr.mxu0 0.0
    %1846 = vmatpush2.msra.mxu0 0.0
    %1847 = vmatprep.subr.mxu0 0.0
    %1848 = vmatpush2.msra.mxu0 0.0
    %1849 = vmatprep.subr.mxu0 0.0
    %1850 = vmatpush2.msra.mxu0 0.0
    %1851 = vmatprep.subr.mxu0 0.0
    %1852 = vmatpush2.msra.mxu0 0.0
    %1853 = vmatprep.subr.mxu0 0.0
    %1854 = vmatpush2.msra.mxu0 0.0
    %1855 = vmatprep.subr.mxu0 0.0
    %1856 = vmatpush2.msra.mxu0 0.0
    %1857 = vmatprep.subr.mxu0 0.0
    %1858 = vmatpush2.msra.mxu0 0.0
    %1859 = vmatprep.subr.mxu0 0.0
    %1860 = vmatpush2.msra.mxu0 0.0
    %1861 = vmatprep.mubr.f32.mxu0 0.0
    %1862 = vmatmul.mubr.f32.gmra.mxu0 %v1723
    %v1863 = vpop.f32.mrf.mxu0
    %v1864 = vadd.f32 0.0, %v1863
    %v1865 = vpop.f32.mrf.mxu0
    %v1866 = vadd.f32 0.0, %v1865
    %1867 = vdwg.mxu0
    %v1870 = vrot.slane %v1725, 7
    %v1871 = vsel %vm248, %v1870, %v1724
    %v1872 = vsel %vm250, %v1871, 0
    %1874 = vmatprep.subr.mxu0 0.0
    %1875 = vmatpush1.msra.mxu0 0.0
    %1876 = vmatprep.subr.mxu0 0.0
    %1877 = vmatpush1.msra.mxu0 0.0
    %1878 = vmatprep.subr.mxu0 0.0
    %1879 = vmatpush1.msra.mxu0 0.0
    %1880 = vmatprep.subr.mxu0 0.0
    %1881 = vmatpush1.msra.mxu0 0.0
    %1882 = vmatprep.subr.mxu0 0.0
    %1883 = vmatpush1.msra.mxu0 0.0
    %1884 = vmatprep.subr.mxu0 0.0
    %1885 = vmatpush1.msra.mxu0 0.0
    %1886 = vmatprep.subr.mxu0 0.0
    %1887 = vmatpush1.msra.mxu0 0.0
    %1888 = vmatprep.subr.mxu0 0.0
    %1889 = vmatpush1.msra.mxu0 0.0
    %1890 = vmatprep.subr.mxu0 0.0
    %1891 = vmatpush1.msra.mxu0 0.0
    %1892 = vmatprep.subr.mxu0 0.0
    %1893 = vmatpush1.msra.mxu0 0.0
    %1894 = vmatprep.subr.mxu0 0.0
    %1895 = vmatpush1.msra.mxu0 0.0
    %1896 = vmatprep.subr.mxu0 0.0
    %1897 = vmatpush1.msra.mxu0 0.0
    %1898 = vmatprep.subr.mxu0 0.0
    %1899 = vmatpush1.msra.mxu0 0.0
    %1900 = vmatprep.subr.mxu0 %v33
    %1901 = vmatpush1.msra.mxu0 %v32
    %1902 = vmatprep.subr.mxu0 %v29
    %1903 = vmatpush1.msra.mxu0 %v28
    %1904 = vmatprep.subr.mxu0 %v25
    %1905 = vmatpush1.msra.mxu0 %v24
    %1906 = vmatprep.subr.mxu0 0.0
    %1907 = vmatpush2.msra.mxu0 0.0
    %1908 = vmatprep.subr.mxu0 0.0
    %1909 = vmatpush2.msra.mxu0 0.0
    %1910 = vmatprep.subr.mxu0 0.0
    %1911 = vmatpush2.msra.mxu0 0.0
    %1912 = vmatprep.subr.mxu0 0.0
    %1913 = vmatpush2.msra.mxu0 0.0
    %1914 = vmatprep.subr.mxu0 0.0
    %1915 = vmatpush2.msra.mxu0 0.0
    %1916 = vmatprep.subr.mxu0 0.0
    %1917 = vmatpush2.msra.mxu0 0.0
    %1918 = vmatprep.subr.mxu0 0.0
    %1919 = vmatpush2.msra.mxu0 0.0
    %1920 = vmatprep.subr.mxu0 0.0
    %1921 = vmatpush2.msra.mxu0 0.0
    %1922 = vmatprep.subr.mxu0 0.0
    %1923 = vmatpush2.msra.mxu0 0.0
    %1924 = vmatprep.subr.mxu0 0.0
    %1925 = vmatpush2.msra.mxu0 0.0
    %1926 = vmatprep.subr.mxu0 0.0
    %1927 = vmatpush2.msra.mxu0 0.0
    %1928 = vmatprep.subr.mxu0 0.0
    %1929 = vmatpush2.msra.mxu0 0.0
    %1930 = vmatprep.subr.mxu0 0.0
    %1931 = vmatpush2.msra.mxu0 0.0
    %1932 = vmatprep.subr.mxu0 0.0
    %1933 = vmatpush2.msra.mxu0 0.0
    %1934 = vmatprep.subr.mxu0 0.0
    %1935 = vmatpush2.msra.mxu0 0.0
    %1936 = vmatprep.subr.mxu0 0.0
    %1937 = vmatpush2.msra.mxu0 0.0
    %1938 = vmatprep.mubr.f32.mxu0 0.0
    %1939 = vmatmul.mubr.f32.gmra.mxu0 %v1872
    %v1940 = vpop.f32.mrf.mxu0
    %v1941 = vadd.f32 %v1793, %v1940
    %v1942 = vpop.f32.mrf.mxu0
    %v1943 = vadd.f32 %v1795, %v1942
    %1944 = vdwg.mxu0
    %1945 = vmatprep.subr.mxu0 0.0
    %1946 = vmatpush1.msra.mxu0 0.0
    %1947 = vmatprep.subr.mxu0 0.0
    %1948 = vmatpush1.msra.mxu0 0.0
    %1949 = vmatprep.subr.mxu0 0.0
    %1950 = vmatpush1.msra.mxu0 0.0
    %1951 = vmatprep.subr.mxu0 0.0
    %1952 = vmatpush1.msra.mxu0 0.0
    %1953 = vmatprep.subr.mxu0 0.0
    %1954 = vmatpush1.msra.mxu0 0.0
    %1955 = vmatprep.subr.mxu0 0.0
    %1956 = vmatpush1.msra.mxu0 0.0
    %1957 = vmatprep.subr.mxu0 0.0
    %1958 = vmatpush1.msra.mxu0 0.0
    %1959 = vmatprep.subr.mxu0 0.0
    %1960 = vmatpush1.msra.mxu0 0.0
    %1961 = vmatprep.subr.mxu0 0.0
    %1962 = vmatpush1.msra.mxu0 0.0
    %1963 = vmatprep.subr.mxu0 0.0
    %1964 = vmatpush1.msra.mxu0 0.0
    %1965 = vmatprep.subr.mxu0 0.0
    %1966 = vmatpush1.msra.mxu0 0.0
    %1967 = vmatprep.subr.mxu0 0.0
    %1968 = vmatpush1.msra.mxu0 0.0
    %1969 = vmatprep.subr.mxu0 0.0
    %1970 = vmatpush1.msra.mxu0 0.0
    %1971 = vmatprep.subr.mxu0 %v35
    %1972 = vmatpush1.msra.mxu0 %v34
    %1973 = vmatprep.subr.mxu0 %v31
    %1974 = vmatpush1.msra.mxu0 %v30
    %1975 = vmatprep.subr.mxu0 %v27
    %1976 = vmatpush1.msra.mxu0 %v26
    %1977 = vmatprep.subr.mxu0 0.0
    %1978 = vmatpush2.msra.mxu0 0.0
    %1979 = vmatprep.subr.mxu0 0.0
    %1980 = vmatpush2.msra.mxu0 0.0
    %1981 = vmatprep.subr.mxu0 0.0
    %1982 = vmatpush2.msra.mxu0 0.0
    %1983 = vmatprep.subr.mxu0 0.0
    %1984 = vmatpush2.msra.mxu0 0.0
    %1985 = vmatprep.subr.mxu0 0.0
    %1986 = vmatpush2.msra.mxu0 0.0
    %1987 = vmatprep.subr.mxu0 0.0
    %1988 = vmatpush2.msra.mxu0 0.0
    %1989 = vmatprep.subr.mxu0 0.0
    %1990 = vmatpush2.msra.mxu0 0.0
    %1991 = vmatprep.subr.mxu0 0.0
    %1992 = vmatpush2.msra.mxu0 0.0
    %1993 = vmatprep.subr.mxu0 0.0
    %1994 = vmatpush2.msra.mxu0 0.0
    %1995 = vmatprep.subr.mxu0 0.0
    %1996 = vmatpush2.msra.mxu0 0.0
    %1997 = vmatprep.subr.mxu0 0.0
    %1998 = vmatpush2.msra.mxu0 0.0
    %1999 = vmatprep.subr.mxu0 0.0
    %2000 = vmatpush2.msra.mxu0 0.0
    %2001 = vmatprep.subr.mxu0 0.0
    %2002 = vmatpush2.msra.mxu0 0.0
    %2003 = vmatprep.subr.mxu0 0.0
    %2004 = vmatpush2.msra.mxu0 0.0
    %2005 = vmatprep.subr.mxu0 0.0
    %2006 = vmatpush2.msra.mxu0 0.0
    %2007 = vmatprep.subr.mxu0 0.0
    %2008 = vmatpush2.msra.mxu0 0.0
    %2009 = vmatprep.mubr.f32.mxu0 0.0
    %2010 = vmatmul.mubr.f32.gmra.mxu0 %v1872
    %v2011 = vpop.f32.mrf.mxu0
    %v2012 = vadd.f32 %v1864, %v2011
    %v2013 = vpop.f32.mrf.mxu0
    %v2014 = vadd.f32 %v1866, %v2013
    %2015 = vdwg.mxu0
    %v2016 = vadd.f32 %v1941, %v399
    %v2017 = vadd.f32 %v1943, %v403
    %v2018 = vadd.f32 %v2012, %v407
    %v2019 = vadd.f32 %v2014, %v411
    %v2020 = vxor.u32 %v2016, 2147483648
    %v2021 = vmul.f32 %v2020, 1.442695
    %v2022 = vpow.pop %v2021
    %v2023 = vadd.f32 %v2022, 1.0
    %v2024 = vrcp.pop %v2023
    %v2025 = vmul.f32 1.0, %v2024
    %v2026 = vxor.u32 %v2017, 2147483648
    %v2027 = vmul.f32 %v2026, 1.442695
    %v2028 = vpow.pop %v2027
    %v2029 = vadd.f32 %v2028, 1.0
    %v2030 = vrcp.pop %v2029
    %v2031 = vmul.f32 1.0, %v2030
    %v2032 = vtanh.pop %v2018
    %v2033 = vxor.u32 %v2019, 2147483648
    %v2034 = vmul.f32 %v2033, 1.442695
    %v2035 = vpow.pop %v2034
    %v2036 = vadd.f32 %v2035, 1.0
    %v2037 = vrcp.pop %v2036
    %v2038 = vmul.f32 1.0, %v2037
    %v2039 = vmul.f32 %v2031, %v1721
    %v2040 = vmul.f32 %v2025, %v2032
    %v2041 = vadd.f32 %v2039, %v2040
    %v2042 = vtanh.pop %v2041
    %v2043 = vmul.f32 %v2038, %v2042
    %v2044 = vld [vmem:[%s0 + $0x6] sm:$0x1]
    %v2045 = vld [vmem:[%s0 + $0xe] sm:$0x1]
    %2046 = vmatprep.subr.mxu0 %v97
    %2047 = vmatpush1.msra.mxu0 %v96
    %2048 = vmatprep.subr.mxu0 %v93
    %2049 = vmatpush1.msra.mxu0 %v92
    %2050 = vmatprep.subr.mxu0 %v89
    %2051 = vmatpush1.msra.mxu0 %v88
    %2052 = vmatprep.subr.mxu0 %v85
    %2053 = vmatpush1.msra.mxu0 %v84
    %2054 = vmatprep.subr.mxu0 %v81
    %2055 = vmatpush1.msra.mxu0 %v80
    %2056 = vmatprep.subr.mxu0 %v77
    %2057 = vmatpush1.msra.mxu0 %v76
    %2058 = vmatprep.subr.mxu0 %v73
    %2059 = vmatpush1.msra.mxu0 %v72
    %2060 = vmatprep.subr.mxu0 %v69
    %2061 = vmatpush1.msra.mxu0 %v68
    %2062 = vmatprep.subr.mxu0 %v65
    %2063 = vmatpush1.msra.mxu0 %v64
    %2064 = vmatprep.subr.mxu0 %v61
    %2065 = vmatpush1.msra.mxu0 %v60
    %2066 = vmatprep.subr.mxu0 %v57
    %2067 = vmatpush1.msra.mxu0 %v56
    %2068 = vmatprep.subr.mxu0 %v53
    %2069 = vmatpush1.msra.mxu0 %v52
    %2070 = vmatprep.subr.mxu0 %v49
    %2071 = vmatpush1.msra.mxu0 %v48
    %2072 = vmatprep.subr.mxu0 %v45
    %2073 = vmatpush1.msra.mxu0 %v44
    %2074 = vmatprep.subr.mxu0 %v41
    %2075 = vmatpush1.msra.mxu0 %v40
    %2076 = vmatprep.subr.mxu0 %v37
    %2077 = vmatpush1.msra.mxu0 %v36
    %2078 = vmatprep.subr.mxu0 0.0
    %2079 = vmatpush2.msra.mxu0 0.0
    %2080 = vmatprep.subr.mxu0 0.0
    %2081 = vmatpush2.msra.mxu0 0.0
    %2082 = vmatprep.subr.mxu0 0.0
    %2083 = vmatpush2.msra.mxu0 0.0
    %2084 = vmatprep.subr.mxu0 0.0
    %2085 = vmatpush2.msra.mxu0 0.0
    %2086 = vmatprep.subr.mxu0 0.0
    %2087 = vmatpush2.msra.mxu0 0.0
    %2088 = vmatprep.subr.mxu0 0.0
    %2089 = vmatpush2.msra.mxu0 0.0
    %2090 = vmatprep.subr.mxu0 0.0
    %2091 = vmatpush2.msra.mxu0 0.0
    %2092 = vmatprep.subr.mxu0 0.0
    %2093 = vmatpush2.msra.mxu0 0.0
    %2094 = vmatprep.subr.mxu0 0.0
    %2095 = vmatpush2.msra.mxu0 0.0
    %2096 = vmatprep.subr.mxu0 0.0
    %2097 = vmatpush2.msra.mxu0 0.0
    %2098 = vmatprep.subr.mxu0 0.0
    %2099 = vmatpush2.msra.mxu0 0.0
    %2100 = vmatprep.subr.mxu0 0.0
    %2101 = vmatpush2.msra.mxu0 0.0
    %2102 = vmatprep.subr.mxu0 0.0
    %2103 = vmatpush2.msra.mxu0 0.0
    %2104 = vmatprep.subr.mxu0 0.0
    %2105 = vmatpush2.msra.mxu0 0.0
    %2106 = vmatprep.subr.mxu0 0.0
    %2107 = vmatpush2.msra.mxu0 0.0
    %2108 = vmatprep.subr.mxu0 0.0
    %2109 = vmatpush2.msra.mxu0 0.0
    %2110 = vmatprep.mubr.f32.mxu0 0.0
    %2111 = vmatmul.mubr.f32.gmra.mxu0 %v2043
    %v2112 = vpop.f32.mrf.mxu0
    %v2113 = vadd.f32 0.0, %v2112
    %v2114 = vpop.f32.mrf.mxu0
    %v2115 = vadd.f32 0.0, %v2114
    %2116 = vdwg.mxu0
    %2117 = vmatprep.subr.mxu0 %v99
    %2118 = vmatpush1.msra.mxu0 %v98
    %2119 = vmatprep.subr.mxu0 %v95
    %2120 = vmatpush1.msra.mxu0 %v94
    %2121 = vmatprep.subr.mxu0 %v91
    %2122 = vmatpush1.msra.mxu0 %v90
    %2123 = vmatprep.subr.mxu0 %v87
    %2124 = vmatpush1.msra.mxu0 %v86
    %2125 = vmatprep.subr.mxu0 %v83
    %2126 = vmatpush1.msra.mxu0 %v82
    %2127 = vmatprep.subr.mxu0 %v79
    %2128 = vmatpush1.msra.mxu0 %v78
    %2129 = vmatprep.subr.mxu0 %v75
    %2130 = vmatpush1.msra.mxu0 %v74
    %2131 = vmatprep.subr.mxu0 %v71
    %2132 = vmatpush1.msra.mxu0 %v70
    %2133 = vmatprep.subr.mxu0 %v67
    %2134 = vmatpush1.msra.mxu0 %v66
    %2135 = vmatprep.subr.mxu0 %v63
    %2136 = vmatpush1.msra.mxu0 %v62
    %2137 = vmatprep.subr.mxu0 %v59
    %2138 = vmatpush1.msra.mxu0 %v58
    %2139 = vmatprep.subr.mxu0 %v55
    %2140 = vmatpush1.msra.mxu0 %v54
    %2141 = vmatprep.subr.mxu0 %v51
    %2142 = vmatpush1.msra.mxu0 %v50
    %2143 = vmatprep.subr.mxu0 %v47
    %2144 = vmatpush1.msra.mxu0 %v46
    %2145 = vmatprep.subr.mxu0 %v43
    %2146 = vmatpush1.msra.mxu0 %v42
    %2147 = vmatprep.subr.mxu0 %v39
    %2148 = vmatpush1.msra.mxu0 %v38
    %2149 = vmatprep.subr.mxu0 0.0
    %2150 = vmatpush2.msra.mxu0 0.0
    %2151 = vmatprep.subr.mxu0 0.0
    %2152 = vmatpush2.msra.mxu0 0.0
    %2153 = vmatprep.subr.mxu0 0.0
    %2154 = vmatpush2.msra.mxu0 0.0
    %2155 = vmatprep.subr.mxu0 0.0
    %2156 = vmatpush2.msra.mxu0 0.0
    %2157 = vmatprep.subr.mxu0 0.0
    %2158 = vmatpush2.msra.mxu0 0.0
    %2159 = vmatprep.subr.mxu0 0.0
    %2160 = vmatpush2.msra.mxu0 0.0
    %2161 = vmatprep.subr.mxu0 0.0
    %2162 = vmatpush2.msra.mxu0 0.0
    %2163 = vmatprep.subr.mxu0 0.0
    %2164 = vmatpush2.msra.mxu0 0.0
    %2165 = vmatprep.subr.mxu0 0.0
    %2166 = vmatpush2.msra.mxu0 0.0
    %2167 = vmatprep.subr.mxu0 0.0
    %2168 = vmatpush2.msra.mxu0 0.0
    %2169 = vmatprep.subr.mxu0 0.0
    %2170 = vmatpush2.msra.mxu0 0.0
    %2171 = vmatprep.subr.mxu0 0.0
    %2172 = vmatpush2.msra.mxu0 0.0
    %2173 = vmatprep.subr.mxu0 0.0
    %2174 = vmatpush2.msra.mxu0 0.0
    %2175 = vmatprep.subr.mxu0 0.0
    %2176 = vmatpush2.msra.mxu0 0.0
    %2177 = vmatprep.subr.mxu0 0.0
    %2178 = vmatpush2.msra.mxu0 0.0
    %2179 = vmatprep.subr.mxu0 0.0
    %2180 = vmatpush2.msra.mxu0 0.0
    %2181 = vmatprep.mubr.f32.mxu0 0.0
    %2182 = vmatmul.mubr.f32.gmra.mxu0 %v2043
    %v2183 = vpop.f32.mrf.mxu0
    %v2184 = vadd.f32 0.0, %v2183
    %v2185 = vpop.f32.mrf.mxu0
    %v2186 = vadd.f32 0.0, %v2185
    %2187 = vdwg.mxu0
    %v2190 = vrot.slane %v2045, 7
    %v2191 = vsel %vm248, %v2190, %v2044
    %v2192 = vsel %vm250, %v2191, 0
    %2194 = vmatprep.subr.mxu0 0.0
    %2195 = vmatpush1.msra.mxu0 0.0
    %2196 = vmatprep.subr.mxu0 0.0
    %2197 = vmatpush1.msra.mxu0 0.0
    %2198 = vmatprep.subr.mxu0 0.0
    %2199 = vmatpush1.msra.mxu0 0.0
    %2200 = vmatprep.subr.mxu0 0.0
    %2201 = vmatpush1.msra.mxu0 0.0
    %2202 = vmatprep.subr.mxu0 0.0
    %2203 = vmatpush1.msra.mxu0 0.0
    %2204 = vmatprep.subr.mxu0 0.0
    %2205 = vmatpush1.msra.mxu0 0.0
    %2206 = vmatprep.subr.mxu0 0.0
    %2207 = vmatpush1.msra.mxu0 0.0
    %2208 = vmatprep.subr.mxu0 0.0
    %2209 = vmatpush1.msra.mxu0 0.0
    %2210 = vmatprep.subr.mxu0 0.0
    %2211 = vmatpush1.msra.mxu0 0.0
    %2212 = vmatprep.subr.mxu0 0.0
    %2213 = vmatpush1.msra.mxu0 0.0
    %2214 = vmatprep.subr.mxu0 0.0
    %2215 = vmatpush1.msra.mxu0 0.0
    %2216 = vmatprep.subr.mxu0 0.0
    %2217 = vmatpush1.msra.mxu0 0.0
    %2218 = vmatprep.subr.mxu0 0.0
    %2219 = vmatpush1.msra.mxu0 0.0
    %2220 = vmatprep.subr.mxu0 %v33
    %2221 = vmatpush1.msra.mxu0 %v32
    %2222 = vmatprep.subr.mxu0 %v29
    %2223 = vmatpush1.msra.mxu0 %v28
    %2224 = vmatprep.subr.mxu0 %v25
    %2225 = vmatpush1.msra.mxu0 %v24
    %2226 = vmatprep.subr.mxu0 0.0
    %2227 = vmatpush2.msra.mxu0 0.0
    %2228 = vmatprep.subr.mxu0 0.0
    %2229 = vmatpush2.msra.mxu0 0.0
    %2230 = vmatprep.subr.mxu0 0.0
    %2231 = vmatpush2.msra.mxu0 0.0
    %2232 = vmatprep.subr.mxu0 0.0
    %2233 = vmatpush2.msra.mxu0 0.0
    %2234 = vmatprep.subr.mxu0 0.0
    %2235 = vmatpush2.msra.mxu0 0.0
    %2236 = vmatprep.subr.mxu0 0.0
    %2237 = vmatpush2.msra.mxu0 0.0
    %2238 = vmatprep.subr.mxu0 0.0
    %2239 = vmatpush2.msra.mxu0 0.0
    %2240 = vmatprep.subr.mxu0 0.0
    %2241 = vmatpush2.msra.mxu0 0.0
    %2242 = vmatprep.subr.mxu0 0.0
    %2243 = vmatpush2.msra.mxu0 0.0
    %2244 = vmatprep.subr.mxu0 0.0
    %2245 = vmatpush2.msra.mxu0 0.0
    %2246 = vmatprep.subr.mxu0 0.0
    %2247 = vmatpush2.msra.mxu0 0.0
    %2248 = vmatprep.subr.mxu0 0.0
    %2249 = vmatpush2.msra.mxu0 0.0
    %2250 = vmatprep.subr.mxu0 0.0
    %2251 = vmatpush2.msra.mxu0 0.0
    %2252 = vmatprep.subr.mxu0 0.0
    %2253 = vmatpush2.msra.mxu0 0.0
    %2254 = vmatprep.subr.mxu0 0.0
    %2255 = vmatpush2.msra.mxu0 0.0
    %2256 = vmatprep.subr.mxu0 0.0
    %2257 = vmatpush2.msra.mxu0 0.0
    %2258 = vmatprep.mubr.f32.mxu0 0.0
    %2259 = vmatmul.mubr.f32.gmra.mxu0 %v2192
    %v2260 = vpop.f32.mrf.mxu0
    %v2261 = vadd.f32 %v2113, %v2260
    %v2262 = vpop.f32.mrf.mxu0
    %v2263 = vadd.f32 %v2115, %v2262
    %2264 = vdwg.mxu0
    %2265 = vmatprep.subr.mxu0 0.0
    %2266 = vmatpush1.msra.mxu0 0.0
    %2267 = vmatprep.subr.mxu0 0.0
    %2268 = vmatpush1.msra.mxu0 0.0
    %2269 = vmatprep.subr.mxu0 0.0
    %2270 = vmatpush1.msra.mxu0 0.0
    %2271 = vmatprep.subr.mxu0 0.0
    %2272 = vmatpush1.msra.mxu0 0.0
    %2273 = vmatprep.subr.mxu0 0.0
    %2274 = vmatpush1.msra.mxu0 0.0
    %2275 = vmatprep.subr.mxu0 0.0
    %2276 = vmatpush1.msra.mxu0 0.0
    %2277 = vmatprep.subr.mxu0 0.0
    %2278 = vmatpush1.msra.mxu0 0.0
    %2279 = vmatprep.subr.mxu0 0.0
    %2280 = vmatpush1.msra.mxu0 0.0
    %2281 = vmatprep.subr.mxu0 0.0
    %2282 = vmatpush1.msra.mxu0 0.0
    %2283 = vmatprep.subr.mxu0 0.0
    %2284 = vmatpush1.msra.mxu0 0.0
    %2285 = vmatprep.subr.mxu0 0.0
    %2286 = vmatpush1.msra.mxu0 0.0
    %2287 = vmatprep.subr.mxu0 0.0
    %2288 = vmatpush1.msra.mxu0 0.0
    %2289 = vmatprep.subr.mxu0 0.0
    %2290 = vmatpush1.msra.mxu0 0.0
    %2291 = vmatprep.subr.mxu0 %v35
    %2292 = vmatpush1.msra.mxu0 %v34
    %2293 = vmatprep.subr.mxu0 %v31
    %2294 = vmatpush1.msra.mxu0 %v30
    %2295 = vmatprep.subr.mxu0 %v27
    %2296 = vmatpush1.msra.mxu0 %v26
    %2297 = vmatprep.subr.mxu0 0.0
    %2298 = vmatpush2.msra.mxu0 0.0
    %2299 = vmatprep.subr.mxu0 0.0
    %2300 = vmatpush2.msra.mxu0 0.0
    %2301 = vmatprep.subr.mxu0 0.0
    %2302 = vmatpush2.msra.mxu0 0.0
    %2303 = vmatprep.subr.mxu0 0.0
    %2304 = vmatpush2.msra.mxu0 0.0
    %2305 = vmatprep.subr.mxu0 0.0
    %2306 = vmatpush2.msra.mxu0 0.0
    %2307 = vmatprep.subr.mxu0 0.0
    %2308 = vmatpush2.msra.mxu0 0.0
    %2309 = vmatprep.subr.mxu0 0.0
    %2310 = vmatpush2.msra.mxu0 0.0
    %2311 = vmatprep.subr.mxu0 0.0
    %2312 = vmatpush2.msra.mxu0 0.0
    %2313 = vmatprep.subr.mxu0 0.0
    %2314 = vmatpush2.msra.mxu0 0.0
    %2315 = vmatprep.subr.mxu0 0.0
    %2316 = vmatpush2.msra.mxu0 0.0
    %2317 = vmatprep.subr.mxu0 0.0
    %2318 = vmatpush2.msra.mxu0 0.0
    %2319 = vmatprep.subr.mxu0 0.0
    %2320 = vmatpush2.msra.mxu0 0.0
    %2321 = vmatprep.subr.mxu0 0.0
    %2322 = vmatpush2.msra.mxu0 0.0
    %2323 = vmatprep.subr.mxu0 0.0
    %2324 = vmatpush2.msra.mxu0 0.0
    %2325 = vmatprep.subr.mxu0 0.0
    %2326 = vmatpush2.msra.mxu0 0.0
    %2327 = vmatprep.subr.mxu0 0.0
    %2328 = vmatpush2.msra.mxu0 0.0
    %2329 = vmatprep.mubr.f32.mxu0 0.0
    %2330 = vmatmul.mubr.f32.gmra.mxu0 %v2192
    %v2331 = vpop.f32.mrf.mxu0
    %v2332 = vadd.f32 %v2184, %v2331
    %v2333 = vpop.f32.mrf.mxu0
    %v2334 = vadd.f32 %v2186, %v2333
    %2335 = vdwg.mxu0
    %v2336 = vadd.f32 %v2261, %v399
    %v2337 = vadd.f32 %v2263, %v403
    %v2338 = vadd.f32 %v2332, %v407
    %v2339 = vadd.f32 %v2334, %v411
    %v2340 = vxor.u32 %v2336, 2147483648
    %v2341 = vmul.f32 %v2340, 1.442695
    %v2342 = vpow.pop %v2341
    %v2343 = vadd.f32 %v2342, 1.0
    %v2344 = vrcp.pop %v2343
    %v2345 = vmul.f32 1.0, %v2344
    %v2346 = vxor.u32 %v2337, 2147483648
    %v2347 = vmul.f32 %v2346, 1.442695
    %v2348 = vpow.pop %v2347
    %v2349 = vadd.f32 %v2348, 1.0
    %v2350 = vrcp.pop %v2349
    %v2351 = vmul.f32 1.0, %v2350
    %v2352 = vtanh.pop %v2338
    %v2353 = vxor.u32 %v2339, 2147483648
    %v2354 = vmul.f32 %v2353, 1.442695
    %v2355 = vpow.pop %v2354
    %v2356 = vadd.f32 %v2355, 1.0
    %v2357 = vrcp.pop %v2356
    %v2358 = vmul.f32 1.0, %v2357
    %v2359 = vmul.f32 %v2351, %v2041
    %v2360 = vmul.f32 %v2345, %v2352
    %v2361 = vadd.f32 %v2359, %v2360
    %v2362 = vtanh.pop %v2361
    %v2363 = vmul.f32 %v2358, %v2362
    %v2364 = vld [vmem:[%s0 + $0x7] sm:$0x1]
    %v2365 = vld [vmem:[%s0 + $0xf] sm:$0x1]
    %2366 = vmatprep.subr.mxu0 %v97
    %2367 = vmatpush1.msra.mxu0 %v96
    %2368 = vmatprep.subr.mxu0 %v93
    %2369 = vmatpush1.msra.mxu0 %v92
    %2370 = vmatprep.subr.mxu0 %v89
    %2371 = vmatpush1.msra.mxu0 %v88
    %2372 = vmatprep.subr.mxu0 %v85
    %2373 = vmatpush1.msra.mxu0 %v84
    %2374 = vmatprep.subr.mxu0 %v81
    %2375 = vmatpush1.msra.mxu0 %v80
    %2376 = vmatprep.subr.mxu0 %v77
    %2377 = vmatpush1.msra.mxu0 %v76
    %2378 = vmatprep.subr.mxu0 %v73
    %2379 = vmatpush1.msra.mxu0 %v72
    %2380 = vmatprep.subr.mxu0 %v69
    %2381 = vmatpush1.msra.mxu0 %v68
    %2382 = vmatprep.subr.mxu0 %v65
    %2383 = vmatpush1.msra.mxu0 %v64
    %2384 = vmatprep.subr.mxu0 %v61
    %2385 = vmatpush1.msra.mxu0 %v60
    %2386 = vmatprep.subr.mxu0 %v57
    %2387 = vmatpush1.msra.mxu0 %v56
    %2388 = vmatprep.subr.mxu0 %v53
    %2389 = vmatpush1.msra.mxu0 %v52
    %2390 = vmatprep.subr.mxu0 %v49
    %2391 = vmatpush1.msra.mxu0 %v48
    %2392 = vmatprep.subr.mxu0 %v45
    %2393 = vmatpush1.msra.mxu0 %v44
    %2394 = vmatprep.subr.mxu0 %v41
    %2395 = vmatpush1.msra.mxu0 %v40
    %2396 = vmatprep.subr.mxu0 %v37
    %2397 = vmatpush1.msra.mxu0 %v36
    %2398 = vmatprep.subr.mxu0 0.0
    %2399 = vmatpush2.msra.mxu0 0.0
    %2400 = vmatprep.subr.mxu0 0.0
    %2401 = vmatpush2.msra.mxu0 0.0
    %2402 = vmatprep.subr.mxu0 0.0
    %2403 = vmatpush2.msra.mxu0 0.0
    %2404 = vmatprep.subr.mxu0 0.0
    %2405 = vmatpush2.msra.mxu0 0.0
    %2406 = vmatprep.subr.mxu0 0.0
    %2407 = vmatpush2.msra.mxu0 0.0
    %2408 = vmatprep.subr.mxu0 0.0
    %2409 = vmatpush2.msra.mxu0 0.0
    %2410 = vmatprep.subr.mxu0 0.0
    %2411 = vmatpush2.msra.mxu0 0.0
    %2412 = vmatprep.subr.mxu0 0.0
    %2413 = vmatpush2.msra.mxu0 0.0
    %2414 = vmatprep.subr.mxu0 0.0
    %2415 = vmatpush2.msra.mxu0 0.0
    %2416 = vmatprep.subr.mxu0 0.0
    %2417 = vmatpush2.msra.mxu0 0.0
    %2418 = vmatprep.subr.mxu0 0.0
    %2419 = vmatpush2.msra.mxu0 0.0
    %2420 = vmatprep.subr.mxu0 0.0
    %2421 = vmatpush2.msra.mxu0 0.0
    %2422 = vmatprep.subr.mxu0 0.0
    %2423 = vmatpush2.msra.mxu0 0.0
    %2424 = vmatprep.subr.mxu0 0.0
    %2425 = vmatpush2.msra.mxu0 0.0
    %2426 = vmatprep.subr.mxu0 0.0
    %2427 = vmatpush2.msra.mxu0 0.0
    %2428 = vmatprep.subr.mxu0 0.0
    %2429 = vmatpush2.msra.mxu0 0.0
    %2430 = vmatprep.mubr.f32.mxu0 0.0
    %2431 = vmatmul.mubr.f32.gmra.mxu0 %v2363
    %v2432 = vpop.f32.mrf.mxu0
    %v2433 = vadd.f32 0.0, %v2432
    %v2434 = vpop.f32.mrf.mxu0
    %v2435 = vadd.f32 0.0, %v2434
    %2436 = vdwg.mxu0
    %2437 = vmatprep.subr.mxu0 %v99
    %2438 = vmatpush1.msra.mxu0 %v98
    %2439 = vmatprep.subr.mxu0 %v95
    %2440 = vmatpush1.msra.mxu0 %v94
    %2441 = vmatprep.subr.mxu0 %v91
    %2442 = vmatpush1.msra.mxu0 %v90
    %2443 = vmatprep.subr.mxu0 %v87
    %2444 = vmatpush1.msra.mxu0 %v86
    %2445 = vmatprep.subr.mxu0 %v83
    %2446 = vmatpush1.msra.mxu0 %v82
    %2447 = vmatprep.subr.mxu0 %v79
    %2448 = vmatpush1.msra.mxu0 %v78
    %2449 = vmatprep.subr.mxu0 %v75
    %2450 = vmatpush1.msra.mxu0 %v74
    %2451 = vmatprep.subr.mxu0 %v71
    %2452 = vmatpush1.msra.mxu0 %v70
    %2453 = vmatprep.subr.mxu0 %v67
    %2454 = vmatpush1.msra.mxu0 %v66
    %2455 = vmatprep.subr.mxu0 %v63
    %2456 = vmatpush1.msra.mxu0 %v62
    %2457 = vmatprep.subr.mxu0 %v59
    %2458 = vmatpush1.msra.mxu0 %v58
    %2459 = vmatprep.subr.mxu0 %v55
    %2460 = vmatpush1.msra.mxu0 %v54
    %2461 = vmatprep.subr.mxu0 %v51
    %2462 = vmatpush1.msra.mxu0 %v50
    %2463 = vmatprep.subr.mxu0 %v47
    %2464 = vmatpush1.msra.mxu0 %v46
    %2465 = vmatprep.subr.mxu0 %v43
    %2466 = vmatpush1.msra.mxu0 %v42
    %2467 = vmatprep.subr.mxu0 %v39
    %2468 = vmatpush1.msra.mxu0 %v38
    %2469 = vmatprep.subr.mxu0 0.0
    %2470 = vmatpush2.msra.mxu0 0.0
    %2471 = vmatprep.subr.mxu0 0.0
    %2472 = vmatpush2.msra.mxu0 0.0
    %2473 = vmatprep.subr.mxu0 0.0
    %2474 = vmatpush2.msra.mxu0 0.0
    %2475 = vmatprep.subr.mxu0 0.0
    %2476 = vmatpush2.msra.mxu0 0.0
    %2477 = vmatprep.subr.mxu0 0.0
    %2478 = vmatpush2.msra.mxu0 0.0
    %2479 = vmatprep.subr.mxu0 0.0
    %2480 = vmatpush2.msra.mxu0 0.0
    %2481 = vmatprep.subr.mxu0 0.0
    %2482 = vmatpush2.msra.mxu0 0.0
    %2483 = vmatprep.subr.mxu0 0.0
    %2484 = vmatpush2.msra.mxu0 0.0
    %2485 = vmatprep.subr.mxu0 0.0
    %2486 = vmatpush2.msra.mxu0 0.0
    %2487 = vmatprep.subr.mxu0 0.0
    %2488 = vmatpush2.msra.mxu0 0.0
    %2489 = vmatprep.subr.mxu0 0.0
    %2490 = vmatpush2.msra.mxu0 0.0
    %2491 = vmatprep.subr.mxu0 0.0
    %2492 = vmatpush2.msra.mxu0 0.0
    %2493 = vmatprep.subr.mxu0 0.0
    %2494 = vmatpush2.msra.mxu0 0.0
    %2495 = vmatprep.subr.mxu0 0.0
    %2496 = vmatpush2.msra.mxu0 0.0
    %2497 = vmatprep.subr.mxu0 0.0
    %2498 = vmatpush2.msra.mxu0 0.0
    %2499 = vmatprep.subr.mxu0 0.0
    %2500 = vmatpush2.msra.mxu0 0.0
    %2501 = vmatprep.mubr.f32.mxu0 0.0
    %2502 = vmatmul.mubr.f32.gmra.mxu0 %v2363
    %v2503 = vpop.f32.mrf.mxu0
    %v2504 = vadd.f32 0.0, %v2503
    %v2505 = vpop.f32.mrf.mxu0
    %v2506 = vadd.f32 0.0, %v2505
    %2507 = vdwg.mxu0
    %v2510 = vrot.slane %v2365, 7
    %v2511 = vsel %vm248, %v2510, %v2364
    %v2512 = vsel %vm250, %v2511, 0
    %2514 = vmatprep.subr.mxu0 0.0
    %2515 = vmatpush1.msra.mxu0 0.0
    %2516 = vmatprep.subr.mxu0 0.0
    %2517 = vmatpush1.msra.mxu0 0.0
    %2518 = vmatprep.subr.mxu0 0.0
    %2519 = vmatpush1.msra.mxu0 0.0
    %2520 = vmatprep.subr.mxu0 0.0
    %2521 = vmatpush1.msra.mxu0 0.0
    %2522 = vmatprep.subr.mxu0 0.0
    %2523 = vmatpush1.msra.mxu0 0.0
    %2524 = vmatprep.subr.mxu0 0.0
    %2525 = vmatpush1.msra.mxu0 0.0
    %2526 = vmatprep.subr.mxu0 0.0
    %2527 = vmatpush1.msra.mxu0 0.0
    %2528 = vmatprep.subr.mxu0 0.0
    %2529 = vmatpush1.msra.mxu0 0.0
    %2530 = vmatprep.subr.mxu0 0.0
    %2531 = vmatpush1.msra.mxu0 0.0
    %2532 = vmatprep.subr.mxu0 0.0
    %2533 = vmatpush1.msra.mxu0 0.0
    %2534 = vmatprep.subr.mxu0 0.0
    %2535 = vmatpush1.msra.mxu0 0.0
    %2536 = vmatprep.subr.mxu0 0.0
    %2537 = vmatpush1.msra.mxu0 0.0
    %2538 = vmatprep.subr.mxu0 0.0
    %2539 = vmatpush1.msra.mxu0 0.0
    %2540 = vmatprep.subr.mxu0 %v33
    %2541 = vmatpush1.msra.mxu0 %v32
    %2542 = vmatprep.subr.mxu0 %v29
    %2543 = vmatpush1.msra.mxu0 %v28
    %2544 = vmatprep.subr.mxu0 %v25
    %2545 = vmatpush1.msra.mxu0 %v24
    %2546 = vmatprep.subr.mxu0 0.0
    %2547 = vmatpush2.msra.mxu0 0.0
    %2548 = vmatprep.subr.mxu0 0.0
    %2549 = vmatpush2.msra.mxu0 0.0
    %2550 = vmatprep.subr.mxu0 0.0
    %2551 = vmatpush2.msra.mxu0 0.0
    %2552 = vmatprep.subr.mxu0 0.0
    %2553 = vmatpush2.msra.mxu0 0.0
    %2554 = vmatprep.subr.mxu0 0.0
    %2555 = vmatpush2.msra.mxu0 0.0
    %2556 = vmatprep.subr.mxu0 0.0
    %2557 = vmatpush2.msra.mxu0 0.0
    %2558 = vmatprep.subr.mxu0 0.0
    %2559 = vmatpush2.msra.mxu0 0.0
    %2560 = vmatprep.subr.mxu0 0.0
    %2561 = vmatpush2.msra.mxu0 0.0
    %2562 = vmatprep.subr.mxu0 0.0
    %2563 = vmatpush2.msra.mxu0 0.0
    %2564 = vmatprep.subr.mxu0 0.0
    %2565 = vmatpush2.msra.mxu0 0.0
    %2566 = vmatprep.subr.mxu0 0.0
    %2567 = vmatpush2.msra.mxu0 0.0
    %2568 = vmatprep.subr.mxu0 0.0
    %2569 = vmatpush2.msra.mxu0 0.0
    %2570 = vmatprep.subr.mxu0 0.0
    %2571 = vmatpush2.msra.mxu0 0.0
    %2572 = vmatprep.subr.mxu0 0.0
    %2573 = vmatpush2.msra.mxu0 0.0
    %2574 = vmatprep.subr.mxu0 0.0
    %2575 = vmatpush2.msra.mxu0 0.0
    %2576 = vmatprep.subr.mxu0 0.0
    %2577 = vmatpush2.msra.mxu0 0.0
    %2578 = vmatprep.mubr.f32.mxu0 0.0
    %2579 = vmatmul.mubr.f32.gmra.mxu0 %v2512
    %v2580 = vpop.f32.mrf.mxu0
    %v2581 = vadd.f32 %v2433, %v2580
    %v2582 = vpop.f32.mrf.mxu0
    %v2583 = vadd.f32 %v2435, %v2582
    %2584 = vdwg.mxu0
    %2585 = vmatprep.subr.mxu0 0.0
    %2586 = vmatpush1.msra.mxu0 0.0
    %2587 = vmatprep.subr.mxu0 0.0
    %2588 = vmatpush1.msra.mxu0 0.0
    %2589 = vmatprep.subr.mxu0 0.0
    %2590 = vmatpush1.msra.mxu0 0.0
    %2591 = vmatprep.subr.mxu0 0.0
    %2592 = vmatpush1.msra.mxu0 0.0
    %2593 = vmatprep.subr.mxu0 0.0
    %2594 = vmatpush1.msra.mxu0 0.0
    %2595 = vmatprep.subr.mxu0 0.0
    %2596 = vmatpush1.msra.mxu0 0.0
    %2597 = vmatprep.subr.mxu0 0.0
    %2598 = vmatpush1.msra.mxu0 0.0
    %2599 = vmatprep.subr.mxu0 0.0
    %2600 = vmatpush1.msra.mxu0 0.0
    %2601 = vmatprep.subr.mxu0 0.0
    %2602 = vmatpush1.msra.mxu0 0.0
    %2603 = vmatprep.subr.mxu0 0.0
    %2604 = vmatpush1.msra.mxu0 0.0
    %2605 = vmatprep.subr.mxu0 0.0
    %2606 = vmatpush1.msra.mxu0 0.0
    %2607 = vmatprep.subr.mxu0 0.0
    %2608 = vmatpush1.msra.mxu0 0.0
    %2609 = vmatprep.subr.mxu0 0.0
    %2610 = vmatpush1.msra.mxu0 0.0
    %2611 = vmatprep.subr.mxu0 %v35
    %2612 = vmatpush1.msra.mxu0 %v34
    %2613 = vmatprep.subr.mxu0 %v31
    %2614 = vmatpush1.msra.mxu0 %v30
    %2615 = vmatprep.subr.mxu0 %v27
    %2616 = vmatpush1.msra.mxu0 %v26
    %2617 = vmatprep.subr.mxu0 0.0
    %2618 = vmatpush2.msra.mxu0 0.0
    %2619 = vmatprep.subr.mxu0 0.0
    %2620 = vmatpush2.msra.mxu0 0.0
    %2621 = vmatprep.subr.mxu0 0.0
    %2622 = vmatpush2.msra.mxu0 0.0
    %2623 = vmatprep.subr.mxu0 0.0
    %2624 = vmatpush2.msra.mxu0 0.0
    %2625 = vmatprep.subr.mxu0 0.0
    %2626 = vmatpush2.msra.mxu0 0.0
    %2627 = vmatprep.subr.mxu0 0.0
    %2628 = vmatpush2.msra.mxu0 0.0
    %2629 = vmatprep.subr.mxu0 0.0
    %2630 = vmatpush2.msra.mxu0 0.0
    %2631 = vmatprep.subr.mxu0 0.0
    %2632 = vmatpush2.msra.mxu0 0.0
    %2633 = vmatprep.subr.mxu0 0.0
    %2634 = vmatpush2.msra.mxu0 0.0
    %2635 = vmatprep.subr.mxu0 0.0
    %2636 = vmatpush2.msra.mxu0 0.0
    %2637 = vmatprep.subr.mxu0 0.0
    %2638 = vmatpush2.msra.mxu0 0.0
    %2639 = vmatprep.subr.mxu0 0.0
    %2640 = vmatpush2.msra.mxu0 0.0
    %2641 = vmatprep.subr.mxu0 0.0
    %2642 = vmatpush2.msra.mxu0 0.0
    %2643 = vmatprep.subr.mxu0 0.0
    %2644 = vmatpush2.msra.mxu0 0.0
    %2645 = vmatprep.subr.mxu0 0.0
    %2646 = vmatpush2.msra.mxu0 0.0
    %2647 = vmatprep.subr.mxu0 0.0
    %2648 = vmatpush2.msra.mxu0 0.0
    %2649 = vmatprep.mubr.f32.mxu0 0.0
    %2650 = vmatmul.mubr.f32.gmra.mxu0 %v2512
    %v2651 = vpop.f32.mrf.mxu0
    %v2652 = vadd.f32 %v2504, %v2651
    %v2653 = vpop.f32.mrf.mxu0
    %v2654 = vadd.f32 %v2506, %v2653
    %2655 = vdwg.mxu0
    %v2656 = vadd.f32 %v2581, %v399
    %v2657 = vadd.f32 %v2583, %v403
    %v2658 = vadd.f32 %v2652, %v407
    %v2659 = vadd.f32 %v2654, %v411
    %v2660 = vxor.u32 %v2656, 2147483648
    %v2661 = vmul.f32 %v2660, 1.442695
    %v2662 = vpow.pop %v2661
    %v2663 = vadd.f32 %v2662, 1.0
    %v2664 = vrcp.pop %v2663
    %v2665 = vmul.f32 1.0, %v2664
    %v2666 = vxor.u32 %v2657, 2147483648
    %v2667 = vmul.f32 %v2666, 1.442695
    %v2668 = vpow.pop %v2667
    %v2669 = vadd.f32 %v2668, 1.0
    %v2670 = vrcp.pop %v2669
    %v2671 = vmul.f32 1.0, %v2670
    %v2672 = vtanh.pop %v2658
    %v2673 = vxor.u32 %v2659, 2147483648
    %v2674 = vmul.f32 %v2673, 1.442695
    %v2675 = vpow.pop %v2674
    %v2676 = vadd.f32 %v2675, 1.0
    %v2677 = vrcp.pop %v2676
    %v2678 = vmul.f32 1.0, %v2677
    %v2679 = vmul.f32 %v2671, %v2361
    %v2680 = vmul.f32 %v2665, %v2672
    %v2681 = vadd.f32 %v2679, %v2680
    %v2682 = vtanh.pop %v2681
    %v2683 = vmul.f32 %v2678, %v2682
    %v2684 = vld [vmem:[%s4] sm:$0xff]
    %v2685 = vld [vmem:[%s4 + $0x8] sm:$0xff]
    %v2686 = vld [vmem:[%s4 + $0x10] sm:$0xff]
    %v2687 = vld [vmem:[%s4 + $0x18] sm:$0xff]
    %v2688 = vld [vmem:[%s4 + $0x20] sm:$0xff]
    %v2689 = vld [vmem:[%s4 + $0x28] sm:$0xff]
    %v2690 = vld [vmem:[%s4 + $0x30] sm:$0xff]
    %v2691 = vld [vmem:[%s4 + $0x38] sm:$0xff]
    %v2692 = vld [vmem:[%s4 + $0x40] sm:$0xff]
    %v2693 = vld [vmem:[%s4 + $0x48] sm:$0xff]
    %v2694 = vld [vmem:[%s4 + $0x50] sm:$0xff]
    %v2695 = vld [vmem:[%s4 + $0x58] sm:$0xff]
    %v2696 = vld [vmem:[%s4 + $0x60] sm:$0xff]
    %v2697 = vld [vmem:[%s4 + $0x68] sm:$0xff]
    %v2698 = vld [vmem:[%s4 + $0x70] sm:$0xff]
    %v2699 = vld [vmem:[%s4 + $0x78] sm:$0xff]
    %v2700 = vld [vmem:[%s5] sm:$0x1]
    %v2702 = vlaneseq
    %v2703 = vshrl.u32 %v2702, 7
    %v2704 = vsub.s32 0, %v2703
    %v2705 = vrot.slane %v2700, %v2704
    %2707 = vmatprep.subr.mxu0 0.0
    %2708 = vmatpush1.msra.mxu0 %v2699
    %2709 = vmatprep.subr.mxu0 0.0
    %2710 = vmatpush1.msra.mxu0 %v2698
    %2711 = vmatprep.subr.mxu0 0.0
    %2712 = vmatpush1.msra.mxu0 %v2697
    %2713 = vmatprep.subr.mxu0 0.0
    %2714 = vmatpush1.msra.mxu0 %v2696
    %2715 = vmatprep.subr.mxu0 0.0
    %2716 = vmatpush1.msra.mxu0 %v2695
    %2717 = vmatprep.subr.mxu0 0.0
    %2718 = vmatpush1.msra.mxu0 %v2694
    %2719 = vmatprep.subr.mxu0 0.0
    %2720 = vmatpush1.msra.mxu0 %v2693
    %2721 = vmatprep.subr.mxu0 0.0
    %2722 = vmatpush1.msra.mxu0 %v2692
    %2723 = vmatprep.subr.mxu0 0.0
    %2724 = vmatpush1.msra.mxu0 %v2691
    %2725 = vmatprep.subr.mxu0 0.0
    %2726 = vmatpush1.msra.mxu0 %v2690
    %2727 = vmatprep.subr.mxu0 0.0
    %2728 = vmatpush1.msra.mxu0 %v2689
    %2729 = vmatprep.subr.mxu0 0.0
    %2730 = vmatpush1.msra.mxu0 %v2688
    %2731 = vmatprep.subr.mxu0 0.0
    %2732 = vmatpush1.msra.mxu0 %v2687
    %2733 = vmatprep.subr.mxu0 0.0
    %2734 = vmatpush1.msra.mxu0 %v2686
    %2735 = vmatprep.subr.mxu0 0.0
    %2736 = vmatpush1.msra.mxu0 %v2685
    %2737 = vmatprep.subr.mxu0 0.0
    %2738 = vmatpush1.msra.mxu0 %v2684
    %2739 = vmatprep.subr.mxu0 0.0
    %2740 = vmatpush2.msra.mxu0 0.0
    %2741 = vmatprep.subr.mxu0 0.0
    %2742 = vmatpush2.msra.mxu0 0.0
    %2743 = vmatprep.subr.mxu0 0.0
    %2744 = vmatpush2.msra.mxu0 0.0
    %2745 = vmatprep.subr.mxu0 0.0
    %2746 = vmatpush2.msra.mxu0 0.0
    %2747 = vmatprep.subr.mxu0 0.0
    %2748 = vmatpush2.msra.mxu0 0.0
    %2749 = vmatprep.subr.mxu0 0.0
    %2750 = vmatpush2.msra.mxu0 0.0
    %2751 = vmatprep.subr.mxu0 0.0
    %2752 = vmatpush2.msra.mxu0 0.0
    %2753 = vmatprep.subr.mxu0 0.0
    %2754 = vmatpush2.msra.mxu0 0.0
    %2755 = vmatprep.subr.mxu0 0.0
    %2756 = vmatpush2.msra.mxu0 0.0
    %2757 = vmatprep.subr.mxu0 0.0
    %2758 = vmatpush2.msra.mxu0 0.0
    %2759 = vmatprep.subr.mxu0 0.0
    %2760 = vmatpush2.msra.mxu0 0.0
    %2761 = vmatprep.subr.mxu0 0.0
    %2762 = vmatpush2.msra.mxu0 0.0
    %2763 = vmatprep.subr.mxu0 0.0
    %2764 = vmatpush2.msra.mxu0 0.0
    %2765 = vmatprep.subr.mxu0 0.0
    %2766 = vmatpush2.msra.mxu0 0.0
    %2767 = vmatprep.subr.mxu0 0.0
    %2768 = vmatpush2.msra.mxu0 0.0
    %2769 = vmatprep.subr.mxu0 0.0
    %2770 = vmatpush2.msra.mxu0 0.0
    %2771 = vmatprep.mubr.f32.mxu0 0.0
    %2772 = vmatmul.mubr.f32.gmra.mxu0 %v2683
    %v2773 = vpop.f32.mrf.mxu0
    %v2774 = vadd.f32 %v2705, %v2773
    %v2775 = vpop.f32.mrf.mxu0
    %2776 = vdwg.mxu0
    %v2777 = vlaneseq
    %v2778 = vand.u32 %v2777, 127
    %vm2779 = vcmp.eq.s32.totalorder %v2778, 0
    %v2780 = vmul.f32 %v2774, 1.442695
    %v2781 = vpow.pop %v2780
    %v2782 = vxor.u32 %v2774, 2147483648
    %v2783 = vmul.f32 %v2782, 1.442695
    %v2784 = vpow.pop %v2783
    %v2785 = vadd.f32 %v2784, 1.0
    %v2786 = vrcp.pop %v2785
    %v2787 = vmul.f32 1.0, %v2786
    %v2788 = vsel %vm2779, %v2781, %v2787
    %2789 = vst [vmem:[#allocation2] sm:$0x3] %v2788
    // Predicated region
    $region26: #{lstm_wtt_forward.1} parent=1 // pred_check
      _
    $region27: #{lstm_wtt_forward.1} parent=1 // pred_check_branch
      %2791 = sbr.rel (0) target = $region29
    $region28: #{lstm_wtt_forward.1} parent=1 // pred_region
      %s2793 = ssub.s32 32, 32
      %2794 = vsyncadd [#allocation3], %s2793
      %s2796 = sshll.u32 [#allocation2], 4
      %s2797 = int_to_ptr.vmem [resolvable:$true] %s2796
      %2799 = dma.vmem_to_hbm [thread:$0]  %s2797, 32, %s6, [#allocation3]
    $region29: #{lstm_wtt_forward.1} parent=1 // pred_fallthru
      _
    // Predicated region
    $region30: #{lstm_wtt_forward.1} parent=1 // pred_check
      _
    $region31: #{lstm_wtt_forward.1} parent=1 // pred_check_branch
      %2801 = sbr.rel (0) target = $region33
    $region32: #{lstm_wtt_forward.1} parent=1 // pred_region
      %2802 = dma.done [#allocation3], 32
    $region33: #{lstm_wtt_forward.1} parent=1 // pred_fallthru
      _
    %2803 = vsyncpa [#allocation3], 1

</llo_original>
